<compile_context>
chip_gen: v7x
topology: tpu7x:2x2x1
jax: 0.10.0
libtpu: 0.0.40
codegen_flags: <defaults>
</compile_context>

<pallas_src>
import jax
import jax.numpy as jnp
from jax import lax
from jax.experimental import pallas as pl
from jax.experimental.pallas import tpu as pltpu


# ----------------------------- fused criss-cross kernel ----------------------------- #
def _cc_kernel(x_ref, wq_ref, bq_ref, wk_ref, bk_ref, wv_ref, bv_ref, gamma_ref,
               o_ref, v_scr, vT_scr, kT_scr):
    """One (batch, h-tile) grid step.

    x_ref  : (H, W, C)    f32  full image of this batch element (block index is
                               constant over the inner h-tile axis -> stays resident)
    w*/b*  : bf16 1x1-conv weights; wq/wk zero-padded to Cqp lanes
    o_ref  : (Th, W, C)   f32  output rows [t*Th, (t+1)*Th)
    v_scr  : (H, W, C)    bf16 value projection          (written at t == 0)
    vT_scr : (W, H, C)    bf16 value projection, W-major (written at t == 0)
    kT_scr : (W, H, Cqp)  bf16 key projection,  W-major  (written at t == 0)
    """
    H, W, C = x_ref.shape
    Th = o_ref.shape[0]
    Cqp = wq_ref.shape[1]
    t = pl.program_id(1)
    gamma = gamma_ref[0]                                   # SMEM scalar

    # ---- per-batch key/value projections, cached once in bf16 scratch ----
    @pl.when(t == 0)
    def _():
        x2 = x_ref[...].reshape(H * W, C).astype(jnp.bfloat16)
        k = (jnp.dot(x2, wk_ref[...], preferred_element_type=jnp.float32)
             + bk_ref[...].astype(jnp.float32))
        k = k.astype(jnp.bfloat16).reshape(H, W, Cqp)
        kT_scr[...] = jnp.transpose(k, (1, 0, 2))
        v = (jnp.dot(x2, wv_ref[...], preferred_element_type=jnp.float32)
             + bv_ref[...].astype(jnp.float32))
        v = v.astype(jnp.bfloat16).reshape(H, W, C)
        v_scr[...] = v
        vT_scr[...] = jnp.transpose(v, (1, 0, 2))

    # ---- per-tile query (and row-path key) projections on this tile's x rows ----
    h0 = pl.multiple_of(t * Th, Th)
    xt = x_ref[pl.ds(h0, Th)]                              # (Th, W, C) f32
    xt2 = xt.reshape(Th * W, C).astype(jnp.bfloat16)
    q = (jnp.dot(xt2, wq_ref[...], preferred_element_type=jnp.float32)
         + bq_ref[...].astype(jnp.float32))
    q = q.astype(jnp.bfloat16).reshape(Th, W, Cqp)
    # Row-path key is recomputed per tile (tiny N=Cqp matmul) instead of keeping a
    # second H-major key copy in VMEM.
    k_t = (jnp.dot(xt2, wk_ref[...], preferred_element_type=jnp.float32)
           + bk_ref[...].astype(jnp.float32))
    k_t = k_t.astype(jnp.bfloat16).reshape(Th, W, Cqp)
    v_t = v_scr[pl.ds(h0, Th)]                             # (Th, W, C) bf16

    # ---- column (height-direction) scores, batched over W ----
    qT = jnp.transpose(q, (1, 0, 2))                       # (W, Th, Cqp)
    e_h = jnp.einsum('whc,wgc->whg', qT, kT_scr[...],
                     preferred_element_type=jnp.float32)   # (W, Th, H) f32
    ri = lax.broadcasted_iota(jnp.int32, (Th, H), 0) + h0  # global query row
    ci = lax.broadcasted_iota(jnp.int32, (Th, H), 1)       # key row
    # Finite large-negative mask (NaN-safe even for degenerate rows), matches the
    # module's additive -inf diagonal after softmax.
    e_h = jnp.where((ri == ci)[None, :, :], jnp.float32(-1e30), e_h)

    # ---- row (width-direction) scores, batched over H ----
    e_w = jnp.einsum('hwc,huc->hwu', q, k_t,
                     preferred_element_type=jnp.float32)   # (Th, W, W) f32

    # ---- joint softmax over the concatenated (H + W) axis; f32 element-wise math ----
    m_h = jnp.max(e_h, axis=-1)                            # (W, Th)
    m_w = jnp.max(e_w, axis=-1)                            # (Th, W)
    m = jnp.maximum(m_h.T, m_w)                            # (Th, W)
    mT = m.T                                               # (W, Th)
    p_h = jnp.exp(e_h - mT[:, :, None])                    # (W, Th, H) f32
    p_w = jnp.exp(e_w - m[:, :, None])                     # (Th, W, W) f32
    denom = jnp.sum(p_h, axis=-1).T + jnp.sum(p_w, axis=-1)  # (Th, W), >= 1
    inv = pl.reciprocal(denom, approx=True)                # (Th, W)

    # ---- un-normalized outputs (bf16 MXU operands, f32 accumulation) ----
    out_hT = jnp.einsum('whg,wgc->whc', p_h.astype(jnp.bfloat16), vT_scr[...],
                        preferred_element_type=jnp.float32)  # (W, Th, C)
    out_h = jnp.transpose(out_hT, (1, 0, 2))               # (Th, W, C)
    out_w = jnp.einsum('hwu,huc->hwc', p_w.astype(jnp.bfloat16), v_t,
                       preferred_element_type=jnp.float32)   # (Th, W, C)

    # Normalization folded in once per pixel; residual in f32.
    o_ref[...] = (gamma * (inv[:, :, None] * (out_h + out_w)) + xt).astype(o_ref.dtype)


# ----------------------------------- wrappers ----------------------------------- #
def _pick_h_tile(H, target=64):
    """Largest divisor of H that is <= target (keeps the grid exact)."""
    t = max(1, min(H, int(target)))
    while H % t:
        t -= 1
    return t


def _vmem_limit_bytes():
    """Generation-aware VMEM limit: big tiles on v5e/v6e (128 MiB physical), capped
    with headroom on v7x (64 MiB physical)."""
    cap = 128 * 1024 * 1024
    try:
        cap = int(getattr(pltpu.get_tpu_info(), "vmem_capacity_bytes", cap))
    except Exception:
        pass
    return int(min(cap - cap // 8, 100 * 1024 * 1024))


def cc_module_forward_nhwc(x_nhwc, params, h_tile=None):
    """Criss-cross attention forward on NHWC activations (preferred entry point:
    keeps activations NHWC and avoids the NCHW<->NHWC HBM round trips)."""
    B, H, W, C = x_nhwc.shape
    Cq = params["wq"].shape[1]

    # Pad query/key width to a full lane (128). Exact: padded channels are zero in
    # both q and k so the q.k contraction is unchanged; score-matmul operands become
    # lane-dense with a full MXU K dim.
    Cqp = max(128, ((Cq + 127) // 128) * 128)
    pad = Cqp - Cq
    f32 = jnp.float32
    wq = jnp.pad(params["wq"].astype(f32), ((0, 0), (0, pad))).astype(jnp.bfloat16)
    wk = jnp.pad(params["wk"].astype(f32), ((0, 0), (0, pad))).astype(jnp.bfloat16)
    bq = jnp.pad(params["bq"].astype(f32), (0, pad)).reshape(1, Cqp).astype(jnp.bfloat16)
    bk = jnp.pad(params["bk"].astype(f32), (0, pad)).reshape(1, Cqp).astype(jnp.bfloat16)
    wv = params["wv"].astype(jnp.bfloat16)
    bv = params["bv"].astype(jnp.bfloat16).reshape(1, C)
    gamma = jnp.reshape(params["gamma"].astype(f32), (1,))

    Th = _pick_h_tile(H, h_tile if h_tile is not None else 64)
    const = lambda b, t: (0, 0)

    # TODO(synk): weight/bias blocks have constant index_maps and could use
    # pipeline_mode=pl.Buffered(1) to skip double-buffering (small VMEM headroom win).
    out = pl.pallas_call(
        _cc_kernel,
        out_shape=jax.ShapeDtypeStruct((B, H, W, C), jnp.float32),
        grid=(B, H // Th),
        in_specs=[
            pl.BlockSpec((None, H, W, C), lambda b, t: (b, 0, 0, 0)),   # x (resident/batch)
            pl.BlockSpec((C, Cqp), const),                              # wq
            pl.BlockSpec((1, Cqp), const),                              # bq
            pl.BlockSpec((C, Cqp), const),                              # wk
            pl.BlockSpec((1, Cqp), const),                              # bk
            pl.BlockSpec((C, C), const),                                # wv
            pl.BlockSpec((1, C), const),                                # bv
            pl.BlockSpec(memory_space=pltpu.MemorySpace.SMEM),          # gamma scalar
        ],
        out_specs=pl.BlockSpec((None, Th, W, C), lambda b, t: (b, t, 0, 0)),
        scratch_shapes=[
            pltpu.VMEM((H, W, C), jnp.bfloat16),      # v
            pltpu.VMEM((W, H, C), jnp.bfloat16),      # vT
            pltpu.VMEM((W, H, Cqp), jnp.bfloat16),    # kT
        ],
        compiler_params=pltpu.CompilerParams(
            dimension_semantics=("parallel", "arbitrary"),
            vmem_limit_bytes=_vmem_limit_bytes(),
        ),
    )(x_nhwc.astype(jnp.float32), wq, bq, wk, bk, wv, bv, gamma)
    return out


def cc_module_forward(x_nchw, params, h_tile=None):
    """NCHW-compatible wrapper matching the PyTorch module's layout.
    Note: the two transposes below are full HBM round trips; prefer the NHWC entry
    point when the surrounding network can stay NHWC."""
    out = cc_module_forward_nhwc(jnp.transpose(x_nchw, (0, 2, 3, 1)), params, h_tile)
    return jnp.transpose(out, (0, 3, 1, 2))


# ------------------------------ pure-JAX reference ------------------------------ #
def cc_module_reference(x_nchw, params):
    B, C, H, W = x_nchw.shape
    xh = jnp.transpose(x_nchw, (0, 2, 3, 1)).astype(jnp.float32)
    q = jnp.einsum('bhwc,cd->bhwd', xh, params["wq"]) + params["bq"]
    k = jnp.einsum('bhwc,cd->bhwd', xh, params["wk"]) + params["bk"]
    v = jnp.einsum('bhwc,cd->bhwd', xh, params["wv"]) + params["bv"]
    e_h = jnp.einsum('bhwc,bgwc->bhwg', q, k)
    diag = jnp.where(jnp.eye(H, dtype=bool), -jnp.inf, 0.0)
    e_h = e_h + diag[None, :, None, :]
    e_w = jnp.einsum('bhwc,bhvc->bhwv', q, k)
    att = jax.nn.softmax(jnp.concatenate([e_h, e_w], axis=-1), axis=-1)
    att_h, att_w = att[..., :H], att[..., H:]
    out_h = jnp.einsum('bhwg,bgwc->bhwc', att_h, v)
    out_w = jnp.einsum('bhwv,bhvc->bhwc', att_w, v)
    out = params["gamma"] * (out_h + out_w) + xh
    return jnp.transpose(out, (0, 3, 1, 2))


if __name__ == "__main__":
    B, C, H, W = 2, 32, 16, 16       # in_dim = 32 -> query/key channels = 4
    Cq = C // 8

    key = jax.random.PRNGKey(0)
    kx, kq, kk, kv, kbq, kbk, kbv = jax.random.split(key, 7)

    x = jax.random.normal(kx, (B, C, H, W), dtype=jnp.float32)

    # PyTorch conv weights are (Cout, Cin, 1, 1); stored here as (Cin, Cout) matmul
    # matrices. gamma is init'd to 0 in the module; use a nonzero value so the
    # attention path is exercised.
    params = {
        "wq": 0.1 * jax.random.normal(kq, (C, Cq), dtype=jnp.float32),
        "bq": 0.1 * jax.random.normal(kbq, (Cq,), dtype=jnp.float32),
        "wk": 0.1 * jax.random.normal(kk, (C, Cq), dtype=jnp.float32),
        "bk": 0.1 * jax.random.normal(kbk, (Cq,), dtype=jnp.float32),
        "wv": 0.1 * jax.random.normal(kv, (C, C), dtype=jnp.float32),
        "bv": 0.1 * jax.random.normal(kbv, (C,), dtype=jnp.float32),
        "gamma": jnp.float32(0.5),
    }

    # h_tile=8 -> 2 H-tiles per batch element: exercises the tiled/scratch-cached path.
    out = cc_module_forward(x, params, h_tile=8)
    out = jax.block_until_ready(out)

    ref = cc_module_reference(x, params)
    assert out.shape == (B, C, H, W)
    # Tolerance covers intentional bf16 MXU operands (projections, scores, P.V) and
    # the approximate reciprocal — all bounded well below 1% relative.
    if not jnp.allclose(out, ref, atol=3e-2, rtol=3e-2):
        max_err = float(jnp.max(jnp.abs(out - ref)))
        raise AssertionError(f"Pallas kernel output does not match reference (max abs err {max_err})")

    print("KERNEL_OK")
</pallas_src>

<mosaic_0001>
module attributes {stable_mosaic.version = 11 : i64} {
  func.func @_cc_kernel(%arg0: i32, %arg1: i32, %arg2: memref<1x16x16x32xf32, #tpu.memory_space<vmem>>, %arg3: memref<32x128xbf16, #tpu.memory_space<vmem>>, %arg4: memref<1x128xbf16, #tpu.memory_space<vmem>>, %arg5: memref<32x128xbf16, #tpu.memory_space<vmem>>, %arg6: memref<1x128xbf16, #tpu.memory_space<vmem>>, %arg7: memref<32x32xbf16, #tpu.memory_space<vmem>>, %arg8: memref<1x32xbf16, #tpu.memory_space<vmem>>, %arg9: memref<1xf32, #tpu.memory_space<smem>>, %arg10: memref<1x8x16x32xf32, #tpu.memory_space<vmem>>, %arg11: memref<16x16x32xbf16, #tpu.memory_space<vmem>>, %arg12: memref<16x16x32xbf16, #tpu.memory_space<vmem>>, %arg13: memref<16x16x128xbf16, #tpu.memory_space<vmem>>) attributes {dimension_semantics = [#tpu.dimension_semantics<parallel>, #tpu.dimension_semantics<arbitrary>], iteration_bounds = array<i64: 2, 2>, scalar_prefetch = 0 : i64, scratch_operands = 3 : i64, tpu.core_type = #tpu.core_type<tc>, window_params = [{transform_indices = @transform_0, window_bounds = array<i64: 1, 16, 16, 32>}, {pipeline_mode = #tpu.pipeline_mode<synchronous>, transform_indices = @transform_1, window_bounds = array<i64: 32, 128>}, {pipeline_mode = #tpu.pipeline_mode<synchronous>, transform_indices = @transform_2, window_bounds = array<i64: 1, 128>}, {pipeline_mode = #tpu.pipeline_mode<synchronous>, transform_indices = @transform_3, window_bounds = array<i64: 32, 128>}, {pipeline_mode = #tpu.pipeline_mode<synchronous>, transform_indices = @transform_4, window_bounds = array<i64: 1, 128>}, {pipeline_mode = #tpu.pipeline_mode<synchronous>, transform_indices = @transform_5, window_bounds = array<i64: 32, 32>}, {pipeline_mode = #tpu.pipeline_mode<synchronous>, transform_indices = @transform_6, window_bounds = array<i64: 1, 32>}, {transform_indices = @transform_7, window_bounds = array<i64: 1>}, {transform_indices = @transform_8, window_bounds = array<i64: 1, 8, 16, 32>}]} {
    %c0 = arith.constant 0 : index
    %0 = memref.load %arg9[%c0] : memref<1xf32, #tpu.memory_space<smem>>
    %c0_i32 = arith.constant 0 : i32
    %1 = arith.cmpi eq, %arg1, %c0_i32 : i32
    %2 = arith.extui %1 : i1 to i32
    %c0_i32_0 = arith.constant 0 : i32
    %3 = arith.cmpi ne, %2, %c0_i32_0 : i32
    scf.if %3 {
      %c0_34 = arith.constant 0 : index
      %c0_35 = arith.constant 0 : index
      %c0_36 = arith.constant 0 : index
      %c0_37 = arith.constant 0 : index
      %77 = vector.load %arg2[%c0_34, %c0_35, %c0_36, %c0_37] : memref<1x16x16x32xf32, #tpu.memory_space<vmem>>, vector<1x16x16x32xf32>
      %78 = vector.shape_cast %77 : vector<1x16x16x32xf32> to vector<16x16x32xf32>
      %79 = vector.shape_cast %78 : vector<16x16x32xf32> to vector<256x32xf32>
      %80 = arith.truncf %79 : vector<256x32xf32> to vector<256x32xbf16>
      %c0_38 = arith.constant 0 : index
      %c0_39 = arith.constant 0 : index
      %81 = vector.load %arg5[%c0_38, %c0_39] : memref<32x128xbf16, #tpu.memory_space<vmem>>, vector<32x128xbf16>
      %cst_40 = arith.constant dense<0.000000e+00> : vector<256x128xf32>
      %82 = tpu.matmul %80, %81, %cst_40 {dimension_numbers = #tpu.dot_dimension_numbers<[1], [0], [0], [1], [0, 0, 1, 1], [], []>} : vector<256x32xbf16>, vector<32x128xbf16>, vector<256x128xf32> -> vector<256x128xf32>
      %c0_41 = arith.constant 0 : index
      %c0_42 = arith.constant 0 : index
      %83 = vector.load %arg6[%c0_41, %c0_42] : memref<1x128xbf16, #tpu.memory_space<vmem>>, vector<1x128xbf16>
      %84 = arith.extf %83 : vector<1x128xbf16> to vector<1x128xf32>
      %85 = vector.broadcast %84 : vector<1x128xf32> to vector<256x128xf32>
      %86 = arith.addf %82, %85 : vector<256x128xf32>
      %87 = arith.truncf %86 : vector<256x128xf32> to vector<256x128xbf16>
      %88 = vector.shape_cast %87 : vector<256x128xbf16> to vector<16x16x128xbf16>
      %89 = tpu.transpose %88, [1, 0, 2] : vector<16x16x128xbf16> -> vector<16x16x128xbf16>
      %c0_43 = arith.constant 0 : index
      %c0_44 = arith.constant 0 : index
      %c0_45 = arith.constant 0 : index
      %90 = vector.load %arg13[%c0_43, %c0_44, %c0_45] : memref<16x16x128xbf16, #tpu.memory_space<vmem>>, vector<16x16x128xbf16>
      tpu.vector_store %arg13[%c0_43, %c0_44, %c0_45], %89 {strides = array<i32>} : memref<16x16x128xbf16, #tpu.memory_space<vmem>>, vector<16x16x128xbf16>,
      %c0_46 = arith.constant 0 : index
      %c0_47 = arith.constant 0 : index
      %91 = vector.load %arg7[%c0_46, %c0_47] : memref<32x32xbf16, #tpu.memory_space<vmem>>, vector<32x32xbf16>
      %cst_48 = arith.constant dense<0.000000e+00> : vector<256x32xf32>
      %92 = tpu.matmul %80, %91, %cst_48 {dimension_numbers = #tpu.dot_dimension_numbers<[1], [0], [0], [1], [0, 0, 1, 1], [], []>} : vector<256x32xbf16>, vector<32x32xbf16>, vector<256x32xf32> -> vector<256x32xf32>
      %c0_49 = arith.constant 0 : index
      %c0_50 = arith.constant 0 : index
      %93 = vector.load %arg8[%c0_49, %c0_50] : memref<1x32xbf16, #tpu.memory_space<vmem>>, vector<1x32xbf16>
      %94 = arith.extf %93 : vector<1x32xbf16> to vector<1x32xf32>
      %95 = vector.broadcast %94 : vector<1x32xf32> to vector<256x32xf32>
      %96 = arith.addf %92, %95 : vector<256x32xf32>
      %97 = arith.truncf %96 : vector<256x32xf32> to vector<256x32xbf16>
      %98 = vector.shape_cast %97 : vector<256x32xbf16> to vector<16x16x32xbf16>
      %c0_51 = arith.constant 0 : index
      %c0_52 = arith.constant 0 : index
      %c0_53 = arith.constant 0 : index
      %99 = vector.load %arg11[%c0_51, %c0_52, %c0_53] : memref<16x16x32xbf16, #tpu.memory_space<vmem>>, vector<16x16x32xbf16>
      tpu.vector_store %arg11[%c0_51, %c0_52, %c0_53], %98 {strides = array<i32>} : memref<16x16x32xbf16, #tpu.memory_space<vmem>>, vector<16x16x32xbf16>,
      %100 = tpu.transpose %98, [1, 0, 2] : vector<16x16x32xbf16> -> vector<16x16x32xbf16>
      %c0_54 = arith.constant 0 : index
      %c0_55 = arith.constant 0 : index
      %c0_56 = arith.constant 0 : index
      %101 = vector.load %arg12[%c0_54, %c0_55, %c0_56] : memref<16x16x32xbf16, #tpu.memory_space<vmem>>, vector<16x16x32xbf16>
      tpu.vector_store %arg12[%c0_54, %c0_55, %c0_56], %100 {strides = array<i32>} : memref<16x16x32xbf16, #tpu.memory_space<vmem>>, vector<16x16x32xbf16>,
    } else {
    }
    %c8_i32 = arith.constant 8 : i32
    %4 = arith.muli %arg1, %c8_i32 : i32
    %5 = tpu.assume_multiple %4, 8 : i32
    %c0_1 = arith.constant 0 : index
    %6 = arith.index_cast %5 : i32 to index
    %c0_2 = arith.constant 0 : index
    %c0_3 = arith.constant 0 : index
    %7 = vector.load %arg2[%c0_1, %6, %c0_2, %c0_3] : memref<1x16x16x32xf32, #tpu.memory_space<vmem>>, vector<1x8x16x32xf32>
    %8 = vector.shape_cast %7 : vector<1x8x16x32xf32> to vector<8x16x32xf32>
    %9 = vector.shape_cast %8 : vector<8x16x32xf32> to vector<128x32xf32>
    %10 = arith.truncf %9 : vector<128x32xf32> to vector<128x32xbf16>
    %c0_4 = arith.constant 0 : index
    %c0_5 = arith.constant 0 : index
    %11 = vector.load %arg3[%c0_4, %c0_5] : memref<32x128xbf16, #tpu.memory_space<vmem>>, vector<32x128xbf16>
    %cst = arith.constant dense<0.000000e+00> : vector<128x128xf32>
    %12 = tpu.matmul %10, %11, %cst {dimension_numbers = #tpu.dot_dimension_numbers<[1], [0], [0], [1], [0, 0, 1, 1], [], []>} : vector<128x32xbf16>, vector<32x128xbf16>, vector<128x128xf32> -> vector<128x128xf32>
    %c0_6 = arith.constant 0 : index
    %c0_7 = arith.constant 0 : index
    %13 = vector.load %arg4[%c0_6, %c0_7] : memref<1x128xbf16, #tpu.memory_space<vmem>>, vector<1x128xbf16>
    %14 = arith.extf %13 : vector<1x128xbf16> to vector<1x128xf32>
    %15 = vector.broadcast %14 : vector<1x128xf32> to vector<128x128xf32>
    %16 = arith.addf %12, %15 : vector<128x128xf32>
    %17 = arith.truncf %16 : vector<128x128xf32> to vector<128x128xbf16>
    %18 = vector.shape_cast %17 : vector<128x128xbf16> to vector<8x16x128xbf16>
    %c0_8 = arith.constant 0 : index
    %c0_9 = arith.constant 0 : index
    %19 = vector.load %arg5[%c0_8, %c0_9] : memref<32x128xbf16, #tpu.memory_space<vmem>>, vector<32x128xbf16>
    %cst_10 = arith.constant dense<0.000000e+00> : vector<128x128xf32>
    %20 = tpu.matmul %10, %19, %cst_10 {dimension_numbers = #tpu.dot_dimension_numbers<[1], [0], [0], [1], [0, 0, 1, 1], [], []>} : vector<128x32xbf16>, vector<32x128xbf16>, vector<128x128xf32> -> vector<128x128xf32>
    %c0_11 = arith.constant 0 : index
    %c0_12 = arith.constant 0 : index
    %21 = vector.load %arg6[%c0_11, %c0_12] : memref<1x128xbf16, #tpu.memory_space<vmem>>, vector<1x128xbf16>
    %22 = arith.extf %21 : vector<1x128xbf16> to vector<1x128xf32>
    %23 = vector.broadcast %22 : vector<1x128xf32> to vector<128x128xf32>
    %24 = arith.addf %20, %23 : vector<128x128xf32>
    %25 = arith.truncf %24 : vector<128x128xf32> to vector<128x128xbf16>
    %26 = vector.shape_cast %25 : vector<128x128xbf16> to vector<8x16x128xbf16>
    %27 = arith.index_cast %5 : i32 to index
    %c0_13 = arith.constant 0 : index
    %c0_14 = arith.constant 0 : index
    %28 = vector.load %arg11[%27, %c0_13, %c0_14] : memref<16x16x32xbf16, #tpu.memory_space<vmem>>, vector<8x16x32xbf16>
    %29 = tpu.transpose %18, [1, 0, 2] : vector<8x16x128xbf16> -> vector<16x8x128xbf16>
    %c0_15 = arith.constant 0 : index
    %c0_16 = arith.constant 0 : index
    %c0_17 = arith.constant 0 : index
    %30 = vector.load %arg13[%c0_15, %c0_16, %c0_17] : memref<16x16x128xbf16, #tpu.memory_space<vmem>>, vector<16x16x128xbf16>
    "tpu.trace_start"() <{level = 10 : i32, message = "whc,wgc->whg"}> : () -> ()
    %cst_18 = arith.constant dense<0.000000e+00> : vector<16x8x16xf32>
    %31 = tpu.matmul %29, %30, %cst_18 {dimension_numbers = #tpu.dot_dimension_numbers<[2], [2], [1], [1], [0, 0, 0, 1, 1, 1], [0], [0]>} : vector<16x8x128xbf16>, vector<16x16x128xbf16>, vector<16x8x16xf32> -> vector<16x8x16xf32>
    "tpu.trace_stop"() : () -> ()
    %32 = tpu.iota {dimensions = array<i32: 0>} : vector<8x16xi32>
    %33 = vector.broadcast %5 : i32 to vector<8x16xi32>
    %34 = arith.addi %32, %33 : vector<8x16xi32>
    %35 = tpu.iota {dimensions = array<i32: 1>} : vector<8x16xi32>
    %36 = arith.cmpi eq, %34, %35 : vector<8x16xi32>
    %37 = vector.shape_cast %36 : vector<8x16xi1> to vector<1x8x16xi1>
    %cst_19 = arith.constant -1.000000e+30 : f32
    %38 = vector.shape_cast %37 : vector<1x8x16xi1> to vector<1x8x16xi1>
    %39 = vector.broadcast %38 : vector<1x8x16xi1> to vector<16x8x16xi1>
    %40 = vector.broadcast %cst_19 : f32 to vector<16x8x16xf32>
    %41 = arith.select %39, %40, %31 : vector<16x8x16xi1>, vector<16x8x16xf32>
    "tpu.trace_start"() <{level = 10 : i32, message = "hwc,huc->hwu"}> : () -> ()
    %cst_20 = arith.constant dense<0.000000e+00> : vector<8x16x16xf32>
    %42 = tpu.matmul %18, %26, %cst_20 {dimension_numbers = #tpu.dot_dimension_numbers<[2], [2], [1], [1], [0, 0, 0, 1, 1, 1], [0], [0]>} : vector<8x16x128xbf16>, vector<8x16x128xbf16>, vector<8x16x16xf32> -> vector<8x16x16xf32>
    "tpu.trace_stop"() : () -> ()
    %cst_21 = arith.constant dense<0xFF800000> : vector<16x8xf32>
    %43 = vector.multi_reduction <maximumf>, %41, %cst_21 [2] : vector<16x8x16xf32> to vector<16x8xf32>
    %cst_22 = arith.constant dense<0xFF800000> : vector<8x16xf32>
    %44 = vector.multi_reduction <maximumf>, %42, %cst_22 [2] : vector<8x16x16xf32> to vector<8x16xf32>
    %45 = tpu.transpose %43, [1, 0] : vector<16x8xf32> -> vector<8x16xf32>
    %46 = arith.maximumf %45, %44 : vector<8x16xf32>
    %47 = tpu.transpose %46, [1, 0] : vector<8x16xf32> -> vector<16x8xf32>
    %48 = vector.shape_cast %47 : vector<16x8xf32> to vector<16x8x1xf32>
    %49 = vector.broadcast %48 : vector<16x8x1xf32> to vector<16x8x16xf32>
    %50 = arith.subf %41, %49 : vector<16x8x16xf32>
    %51 = math.exp %50 : vector<16x8x16xf32>
    %52 = vector.shape_cast %46 : vector<8x16xf32> to vector<8x16x1xf32>
    %53 = vector.broadcast %52 : vector<8x16x1xf32> to vector<8x16x16xf32>
    %54 = arith.subf %42, %53 : vector<8x16x16xf32>
    %55 = math.exp %54 : vector<8x16x16xf32>
    %cst_23 = arith.constant dense<0.000000e+00> : vector<16x8xf32>
    %56 = vector.multi_reduction <add>, %51, %cst_23 [2] : vector<16x8x16xf32> to vector<16x8xf32>
    %57 = tpu.transpose %56, [1, 0] : vector<16x8xf32> -> vector<8x16xf32>
    %cst_24 = arith.constant dense<0.000000e+00> : vector<8x16xf32>
    %58 = vector.multi_reduction <add>, %55, %cst_24 [2] : vector<8x16x16xf32> to vector<8x16xf32>
    %59 = arith.addf %57, %58 : vector<8x16xf32>
    %60 = tpu.reciprocal %59 {approx = true} : vector<8x16xf32> -> vector<8x16xf32>
    %61 = arith.truncf %51 : vector<16x8x16xf32> to vector<16x8x16xbf16>
    %c0_25 = arith.constant 0 : index
    %c0_26 = arith.constant 0 : index
    %c0_27 = arith.constant 0 : index
    %62 = vector.load %arg12[%c0_25, %c0_26, %c0_27] : memref<16x16x32xbf16, #tpu.memory_space<vmem>>, vector<16x16x32xbf16>
    "tpu.trace_start"() <{level = 10 : i32, message = "whg,wgc->whc"}> : () -> ()
    %cst_28 = arith.constant dense<0.000000e+00> : vector<16x8x32xf32>
    %63 = tpu.matmul %61, %62, %cst_28 {dimension_numbers = #tpu.dot_dimension_numbers<[2], [1], [1], [2], [0, 0, 0, 1, 1, 2], [0], [0]>} : vector<16x8x16xbf16>, vector<16x16x32xbf16>, vector<16x8x32xf32> -> vector<16x8x32xf32>
    "tpu.trace_stop"() : () -> ()
    %64 = tpu.transpose %63, [1, 0, 2] : vector<16x8x32xf32> -> vector<8x16x32xf32>
    %65 = arith.truncf %55 : vector<8x16x16xf32> to vector<8x16x16xbf16>
    "tpu.trace_start"() <{level = 10 : i32, message = "hwu,huc->hwc"}> : () -> ()
    %cst_29 = arith.constant dense<0.000000e+00> : vector<8x16x32xf32>
    %66 = tpu.matmul %65, %28, %cst_29 {dimension_numbers = #tpu.dot_dimension_numbers<[2], [1], [1], [2], [0, 0, 0, 1, 1, 2], [0], [0]>} : vector<8x16x16xbf16>, vector<8x16x32xbf16>, vector<8x16x32xf32> -> vector<8x16x32xf32>
    "tpu.trace_stop"() : () -> ()
    %67 = vector.shape_cast %60 : vector<8x16xf32> to vector<8x16x1xf32>
    %68 = arith.addf %64, %66 : vector<8x16x32xf32>
    %69 = vector.broadcast %67 : vector<8x16x1xf32> to vector<8x16x32xf32>
    %70 = arith.mulf %69, %68 : vector<8x16x32xf32>
    %71 = vector.broadcast %0 : f32 to vector<8x16x32xf32>
    %72 = arith.mulf %71, %70 : vector<8x16x32xf32>
    %73 = arith.addf %72, %8 : vector<8x16x32xf32>
    %c0_30 = arith.constant 0 : index
    %c0_31 = arith.constant 0 : index
    %c0_32 = arith.constant 0 : index
    %c0_33 = arith.constant 0 : index
    %74 = vector.load %arg10[%c0_30, %c0_31, %c0_32, %c0_33] : memref<1x8x16x32xf32, #tpu.memory_space<vmem>>, vector<1x8x16x32xf32>
    %75 = vector.shape_cast %74 : vector<1x8x16x32xf32> to vector<8x16x32xf32>
    %76 = vector.shape_cast %73 : vector<8x16x32xf32> to vector<1x8x16x32xf32>
    tpu.vector_store %arg10[%c0_30, %c0_31, %c0_32, %c0_33], %76 {strides = array<i32>} : memref<1x8x16x32xf32, #tpu.memory_space<vmem>>, vector<1x8x16x32xf32>,
    return
  }
  func.func @transform_0(%arg0: i32, %arg1: i32) -> (i32, i32, i32, i32) {
    %c0_i32 = arith.constant 0 : i32
    %c0_i32_0 = arith.constant 0 : i32
    %c0_i32_1 = arith.constant 0 : i32
    %c0_i32_2 = arith.constant 0 : i32
    return %arg0, %c0_i32, %c0_i32_0, %c0_i32_1 : i32, i32, i32, i32
  }
  func.func @transform_1(%arg0: i32, %arg1: i32) -> (i32, i32) {
    %c0_i32 = arith.constant 0 : i32
    %c0_i32_0 = arith.constant 0 : i32
    %c0_i32_1 = arith.constant 0 : i32
    return %c0_i32, %c0_i32_0 : i32, i32
  }
  func.func @transform_2(%arg0: i32, %arg1: i32) -> (i32, i32) {
    %c0_i32 = arith.constant 0 : i32
    %c0_i32_0 = arith.constant 0 : i32
    %c0_i32_1 = arith.constant 0 : i32
    return %c0_i32, %c0_i32_0 : i32, i32
  }
  func.func @transform_3(%arg0: i32, %arg1: i32) -> (i32, i32) {
    %c0_i32 = arith.constant 0 : i32
    %c0_i32_0 = arith.constant 0 : i32
    %c0_i32_1 = arith.constant 0 : i32
    return %c0_i32, %c0_i32_0 : i32, i32
  }
  func.func @transform_4(%arg0: i32, %arg1: i32) -> (i32, i32) {
    %c0_i32 = arith.constant 0 : i32
    %c0_i32_0 = arith.constant 0 : i32
    %c0_i32_1 = arith.constant 0 : i32
    return %c0_i32, %c0_i32_0 : i32, i32
  }
  func.func @transform_5(%arg0: i32, %arg1: i32) -> (i32, i32) {
    %c0_i32 = arith.constant 0 : i32
    %c0_i32_0 = arith.constant 0 : i32
    %c0_i32_1 = arith.constant 0 : i32
    return %c0_i32, %c0_i32_0 : i32, i32
  }
  func.func @transform_6(%arg0: i32, %arg1: i32) -> (i32, i32) {
    %c0_i32 = arith.constant 0 : i32
    %c0_i32_0 = arith.constant 0 : i32
    %c0_i32_1 = arith.constant 0 : i32
    return %c0_i32, %c0_i32_0 : i32, i32
  }
  func.func @transform_7(%arg0: i32, %arg1: i32) -> i32 {
    %c0_i32 = arith.constant 0 : i32
    %c0_i32_0 = arith.constant 0 : i32
    return %c0_i32 : i32
  }
  func.func @transform_8(%arg0: i32, %arg1: i32) -> (i32, i32, i32, i32) {
    %c0_i32 = arith.constant 0 : i32
    %c0_i32_0 = arith.constant 0 : i32
    %c0_i32_1 = arith.constant 0 : i32
    return %arg0, %arg1, %c0_i32, %c0_i32_0 : i32, i32, i32, i32
  }
}

</mosaic_0001>

<llo_original>
// kernel: tpu_custom_call.1
$region0: #{tpu_custom_call.1}
  #allocation0 [shape = 'u32[]', space=smem, size = 0x4, offset = 0x4, fixed_abs, tag = 'smem constant byte address 0x4 - core index']
  #allocation1 [shape = 'u32[144,128]{1,0:T(1,128)}', space=vmem, size = 0x12000, scoped, tag = 'internal scratch']
  #allocation2 [shape = 'bf16[16,16,32]{2,1,0:T(16,128)(2,1)}', space=vmem, size = 0x10000, scoped, tag = 'scratch operand']
  #allocation3 [shape = 'bf16[16,16,32]{2,1,0:T(16,128)(2,1)}', space=vmem, size = 0x10000, scoped, tag = 'scratch operand']
  #allocation4 [shape = 'bf16[16,16,128]{2,1,0:T(16,128)(2,1)}', space=vmem, size = 0x10000, scoped, tag = 'scratch operand']
  #allocation5 [shape = 'f32[1]{0:T(128)S(6)}', space=smem, size = 0x200, scoped, tag = 'scoped memory for tpu_custom_call.1']
  %s0 = inlined_call_operand.hbm [shape: f32[2,16,16,32], index: 0, kind: input, shape index: {}]
  %s1 = inlined_call_operand.hbm [shape: bf16[32,128], index: 1, kind: input, shape index: {}]
  %s2 = inlined_call_operand.hbm [shape: bf16[1,128], index: 2, kind: input, shape index: {}]
  %s3 = inlined_call_operand.hbm [shape: bf16[32,128], index: 3, kind: input, shape index: {}]
  %s4 = inlined_call_operand.hbm [shape: bf16[1,128], index: 4, kind: input, shape index: {}]
  %s5 = inlined_call_operand.hbm [shape: bf16[32,32], index: 5, kind: input, shape index: {}]
  %s6 = inlined_call_operand.hbm [shape: bf16[1,32], index: 6, kind: input, shape index: {}]
  %s7 = inlined_call_operand.<no memory space> [shape: f32[1], index: 7, kind: input, shape index: {}]
  %s8 = inlined_call_operand.hbm [shape: f32[2,16,16,32], index: 8, kind: output, shape index: {}]
  %s9 = sld [smem:[#allocation0]]
  $region97: #{tpu_custom_call.1} parent=0
    _
  %s11 = ssub.s32 1, %s9
  %s12 = scalar_select 0, %s11, %s9
  %13 = sst [smem:[#allocation5]] %s7
  $region1: #{tpu_custom_call.1} parent=0
    #allocation6 [shape = 'u8[262144]{0}', space=vmem, size = 0x40000, scoped, tag = 'input window, operand 0']
    #allocation7 [shape = 's32[2]{0}', space=sflag, size = 0x8, scoped, tag = 'scoped memory for tpu_custom_call.1']
    #allocation8 [shape = 's32[2]{0}', space=sflag, size = 0x8, scoped, tag = 'scoped memory for tpu_custom_call.1']
    #allocation9 [shape = 'u8[8192]{0}', space=vmem, size = 0x2000, scoped, tag = 'input window, operand 1, single buffered']
    #allocation10 [shape = 's32[1]{0}', space=sflag, size = 0x4, scoped, tag = 'scoped memory for tpu_custom_call.1']
    #allocation11 [shape = 'u8[512]{0}', space=vmem, size = 0x400, scoped, tag = 'input window, operand 2, single buffered']
    #allocation12 [shape = 'u8[8192]{0}', space=vmem, size = 0x2000, scoped, tag = 'input window, operand 3, single buffered']
    #allocation13 [shape = 's32[1]{0}', space=sflag, size = 0x4, scoped, tag = 'scoped memory for tpu_custom_call.1']
    #allocation14 [shape = 'u8[512]{0}', space=vmem, size = 0x400, scoped, tag = 'input window, operand 4, single buffered']
    #allocation15 [shape = 'u8[8192]{0}', space=vmem, size = 0x2000, scoped, tag = 'input window, operand 5, single buffered']
    #allocation16 [shape = 's32[1]{0}', space=sflag, size = 0x4, scoped, tag = 'scoped memory for tpu_custom_call.1']
    #allocation17 [shape = 'u8[512]{0}', space=vmem, size = 0x400, scoped, tag = 'input window, operand 6, single buffered']
    #allocation18 [shape = 'u8[131072]{0}', space=vmem, size = 0x20000, scoped, tag = 'output window, operand 0']
    %14 = vsyncpa [#allocation7], 0
    %s15 = scalar_lea.sflag [#allocation7], 1
    %16 = vsyncpa %s15, 0
    %17 = vsyncpa [#allocation10], 0
    %18 = vsyncpa [#allocation13], 0
    %19 = vsyncpa [#allocation16], 0
    %20 = vsyncpa [#allocation8], 0
    %s21 = scalar_lea.sflag [#allocation8], 1
    %22 = vsyncpa %s21, 0
    loop: start=0, step=1, limit=6
    $region2: #{tpu_custom_call.1} parent=1 // loop_pre_header
      _
    $region3: #{tpu_custom_call.1} parent=1 // loop_header
      %s24 = sphi 0, %s28
      %p25 = scmp.ge.s32.totalorder %s24, 6
      %s31 = sphi 0, %s43
      %s32 = sphi 0, %s39
      %s33 = sphi 0, %s31
      %s34 = sphi 0, %s32
      %s35 = sphi 0, %s33
      %s36 = sphi 0, %s34
      %s46 = sphi 0, %s48
      %s49 = sphi 0, %s46
      %s50 = sphi 0, %s49
      %s66 = sphi 0, %s50
      %s70 = sphi 0, %s70
      %s72 = sphi 0, %s70
      %s73 = sphi 0, %s72
      %s87 = sphi 0, %s73
      %s91 = sphi 0, %s91
      %s93 = sphi 0, %s91
      %s94 = sphi 0, %s93
      %s108 = sphi 0, %s94
      %s112 = sphi 0, %s112
      %s114 = sphi 0, %s112
      %s115 = sphi 0, %s114
      %s129 = sphi 0, %s115
      %s133 = sphi 0, %s133
      %s135 = sphi 0, %s133
      %s136 = sphi 0, %s135
      %s150 = sphi 0, %s136
      %s154 = sphi 0, %s154
      %s156 = sphi 0, %s154
      %s157 = sphi 0, %s156
      %s171 = sphi 0, %s157
      %s175 = sphi 0, %s175
      %s177 = sphi 0, %s175
      %s178 = sphi 0, %s177
      %s192 = sphi 0, %s178
      %s196 = sphi 0, %s196
      %s198 = sphi 0, %s196
      %s199 = sphi 0, %s198
      %s213 = sphi 0, %s199
      %s221 = sphi 0, %s223
      %s224 = sphi 0, %s221
      %s225 = sphi 0, %s224
      %s241 = sphi 0, %s225
    $region4: #{tpu_custom_call.1} parent=1 // loop_header_branch
      %27 = sbr.rel (%p25) target = $region8
    $region5: #{tpu_custom_call.1} parent=1 // loop_body
      %s29 = ssub.s32 %s24, 1
      %s30 = ssub.s32 %s24, 2
      %s37 = sadd.s32 1, %s32
      %p38 = scmp.ge.s32.totalorder %s37, 2
      %s39 = scalar_select %p38, 0, %s37
      %s40 = sadd.s32 1, %s31
      %s41 = scalar_select %p38, %s40, %s31
      %p42 = scmp.ge.s32.totalorder %s41, 2
      %s43 = scalar_select %p42, 0, %s41
      %s44 = ssub.s32 %s31, %s43
      %p45 = scmp.eq.s32.totalorder %s44, 0
      %s47 = sadd.s32 %s46, 1
      %s48 = scalar_select %p45, %s46, %s47
      %p51 = pneg %p45
      %p52 = scmp.eq.s32.totalorder %s24, 3
      %p53 = por %p51, %p52
      %p54 = scmp.ne.s32.totalorder %s46, %s49
      %p55 = scmp.eq.s32.totalorder %s24, 0
      %p56 = por %p54, %p55
      %p57 = scmp.ne.s32.totalorder %s46, %s49
      %p58 = scmp.eq.s32.totalorder %s29, 3
      %p59 = por %p57, %p58
      %p60 = scmp.ne.s32.totalorder %s49, %s50
      %p61 = scmp.eq.s32.totalorder %s29, 0
      %p62 = por %p60, %p61
      %p63 = scmp.ne.s32.totalorder %s49, %s50
      %p64 = scmp.eq.s32.totalorder %s30, 3
      %p65 = por %p63, %p64
      %p67 = scmp.ne.s32.totalorder %s50, %s66
      %p68 = scmp.eq.s32.totalorder %s30, 0
      %p69 = por %p67, %p68
      %s71 = sadd.s32 %s70, 1
      %p74 = scmp.eq.s32.totalorder %s24, 3
      %p75 = scmp.ne.s32.totalorder %s70, %s72
      %p76 = scmp.eq.s32.totalorder %s24, 0
      %p77 = por %p75, %p76
      %p78 = scmp.ne.s32.totalorder %s70, %s72
      %p79 = scmp.eq.s32.totalorder %s29, 3
      %p80 = por %p78, %p79
      %p81 = scmp.ne.s32.totalorder %s72, %s73
      %p82 = scmp.eq.s32.totalorder %s29, 0
      %p83 = por %p81, %p82
      %p84 = scmp.ne.s32.totalorder %s72, %s73
      %p85 = scmp.eq.s32.totalorder %s30, 3
      %p86 = por %p84, %p85
      %p88 = scmp.ne.s32.totalorder %s73, %s87
      %p89 = scmp.eq.s32.totalorder %s30, 0
      %p90 = por %p88, %p89
      %s92 = sadd.s32 %s91, 1
      %p95 = scmp.eq.s32.totalorder %s24, 3
      %p96 = scmp.ne.s32.totalorder %s91, %s93
      %p97 = scmp.eq.s32.totalorder %s24, 0
      %p98 = por %p96, %p97
      %p99 = scmp.ne.s32.totalorder %s91, %s93
      %p100 = scmp.eq.s32.totalorder %s29, 3
      %p101 = por %p99, %p100
      %p102 = scmp.ne.s32.totalorder %s93, %s94
      %p103 = scmp.eq.s32.totalorder %s29, 0
      %p104 = por %p102, %p103
      %p105 = scmp.ne.s32.totalorder %s93, %s94
      %p106 = scmp.eq.s32.totalorder %s30, 3
      %p107 = por %p105, %p106
      %p109 = scmp.ne.s32.totalorder %s94, %s108
      %p110 = scmp.eq.s32.totalorder %s30, 0
      %p111 = por %p109, %p110
      %s113 = sadd.s32 %s112, 1
      %p116 = scmp.eq.s32.totalorder %s24, 3
      %p117 = scmp.ne.s32.totalorder %s112, %s114
      %p118 = scmp.eq.s32.totalorder %s24, 0
      %p119 = por %p117, %p118
      %p120 = scmp.ne.s32.totalorder %s112, %s114
      %p121 = scmp.eq.s32.totalorder %s29, 3
      %p122 = por %p120, %p121
      %p123 = scmp.ne.s32.totalorder %s114, %s115
      %p124 = scmp.eq.s32.totalorder %s29, 0
      %p125 = por %p123, %p124
      %p126 = scmp.ne.s32.totalorder %s114, %s115
      %p127 = scmp.eq.s32.totalorder %s30, 3
      %p128 = por %p126, %p127
      %p130 = scmp.ne.s32.totalorder %s115, %s129
      %p131 = scmp.eq.s32.totalorder %s30, 0
      %p132 = por %p130, %p131
      %s134 = sadd.s32 %s133, 1
      %p137 = scmp.eq.s32.totalorder %s24, 3
      %p138 = scmp.ne.s32.totalorder %s133, %s135
      %p139 = scmp.eq.s32.totalorder %s24, 0
      %p140 = por %p138, %p139
      %p141 = scmp.ne.s32.totalorder %s133, %s135
      %p142 = scmp.eq.s32.totalorder %s29, 3
      %p143 = por %p141, %p142
      %p144 = scmp.ne.s32.totalorder %s135, %s136
      %p145 = scmp.eq.s32.totalorder %s29, 0
      %p146 = por %p144, %p145
      %p147 = scmp.ne.s32.totalorder %s135, %s136
      %p148 = scmp.eq.s32.totalorder %s30, 3
      %p149 = por %p147, %p148
      %p151 = scmp.ne.s32.totalorder %s136, %s150
      %p152 = scmp.eq.s32.totalorder %s30, 0
      %p153 = por %p151, %p152
      %s155 = sadd.s32 %s154, 1
      %p158 = scmp.eq.s32.totalorder %s24, 3
      %p159 = scmp.ne.s32.totalorder %s154, %s156
      %p160 = scmp.eq.s32.totalorder %s24, 0
      %p161 = por %p159, %p160
      %p162 = scmp.ne.s32.totalorder %s154, %s156
      %p163 = scmp.eq.s32.totalorder %s29, 3
      %p164 = por %p162, %p163
      %p165 = scmp.ne.s32.totalorder %s156, %s157
      %p166 = scmp.eq.s32.totalorder %s29, 0
      %p167 = por %p165, %p166
      %p168 = scmp.ne.s32.totalorder %s156, %s157
      %p169 = scmp.eq.s32.totalorder %s30, 3
      %p170 = por %p168, %p169
      %p172 = scmp.ne.s32.totalorder %s157, %s171
      %p173 = scmp.eq.s32.totalorder %s30, 0
      %p174 = por %p172, %p173
      %s176 = sadd.s32 %s175, 1
      %p179 = scmp.eq.s32.totalorder %s24, 3
      %p180 = scmp.ne.s32.totalorder %s175, %s177
      %p181 = scmp.eq.s32.totalorder %s24, 0
      %p182 = por %p180, %p181
      %p183 = scmp.ne.s32.totalorder %s175, %s177
      %p184 = scmp.eq.s32.totalorder %s29, 3
      %p185 = por %p183, %p184
      %p186 = scmp.ne.s32.totalorder %s177, %s178
      %p187 = scmp.eq.s32.totalorder %s29, 0
      %p188 = por %p186, %p187
      %p189 = scmp.ne.s32.totalorder %s177, %s178
      %p190 = scmp.eq.s32.totalorder %s30, 3
      %p191 = por %p189, %p190
      %p193 = scmp.ne.s32.totalorder %s178, %s192
      %p194 = scmp.eq.s32.totalorder %s30, 0
      %p195 = por %p193, %p194
      %s197 = sadd.s32 %s196, 1
      %p200 = scmp.eq.s32.totalorder %s24, 3
      %p201 = scmp.ne.s32.totalorder %s196, %s198
      %p202 = scmp.eq.s32.totalorder %s24, 0
      %p203 = por %p201, %p202
      %p204 = scmp.ne.s32.totalorder %s196, %s198
      %p205 = scmp.eq.s32.totalorder %s29, 3
      %p206 = por %p204, %p205
      %p207 = scmp.ne.s32.totalorder %s198, %s199
      %p208 = scmp.eq.s32.totalorder %s29, 0
      %p209 = por %p207, %p208
      %p210 = scmp.ne.s32.totalorder %s198, %s199
      %p211 = scmp.eq.s32.totalorder %s30, 3
      %p212 = por %p210, %p211
      %p214 = scmp.ne.s32.totalorder %s199, %s213
      %p215 = scmp.eq.s32.totalorder %s30, 0
      %p216 = por %p214, %p215
      %s217 = ssub.s32 %s31, %s43
      %s218 = ssub.s32 %s32, %s39
      %s219 = sor.u32 %s217, %s218
      %p220 = scmp.eq.s32.totalorder %s219, 0
      %s222 = sadd.s32 %s221, 1
      %s223 = scalar_select %p220, %s221, %s222
      %p226 = pneg %p220
      %p227 = scmp.eq.s32.totalorder %s24, 3
      %p228 = por %p226, %p227
      %p229 = scmp.ne.s32.totalorder %s221, %s224
      %p230 = scmp.eq.s32.totalorder %s24, 0
      %p231 = por %p229, %p230
      %p232 = scmp.ne.s32.totalorder %s221, %s224
      %p233 = scmp.eq.s32.totalorder %s29, 3
      %p234 = por %p232, %p233
      %p235 = scmp.ne.s32.totalorder %s224, %s225
      %p236 = scmp.eq.s32.totalorder %s29, 0
      %p237 = por %p235, %p236
      %p238 = scmp.ne.s32.totalorder %s224, %s225
      %p239 = scmp.eq.s32.totalorder %s30, 3
      %p240 = por %p238, %p239
      %p242 = scmp.ne.s32.totalorder %s225, %s241
      %p243 = scmp.eq.s32.totalorder %s30, 0
      %p244 = por %p242, %p243
      %p245 = scmp.le.s32.totalorder 1, %s24
      %p246 = scmp.lt.s32.totalorder %s24, 5
      %p247 = pnand %p245, %p246
      %p248 = pneg %p247
      // Predicated region
      $region9: #{tpu_custom_call.1} parent=5 // pred_check
        _
      $region10: #{tpu_custom_call.1} parent=5 // pred_check_branch
        %250 = sbr.rel (%p247) target = $region12
      $region11: #{tpu_custom_call.1} parent=5 // pred_region
        %s251 = ssub.s32 %s24, 1
        // Predicated region
        $region13: #{tpu_custom_call.1} parent=11 // pred_check
          %p252 = pneg %p83
        $region14: #{tpu_custom_call.1} parent=11 // pred_check_branch
          %254 = sbr.rel (%p252) target = $region16
        $region15: #{tpu_custom_call.1} parent=11 // pred_region
          %s256 = ssub.s32 256, 256
          %257 = vsyncadd [#allocation10], %s256
          %s258 = sshll.u32 [#allocation9], 4
          %s259 = int_to_ptr.vmem [resolvable:$true] %s258
          %264 = dma.hbm_to_vmem [thread:$0]  %s1, 256, %s259, [#allocation10], 64, 64, 4
        $region16: #{tpu_custom_call.1} parent=11 // pred_fallthru
          _
        // Predicated region
        $region17: #{tpu_custom_call.1} parent=11 // pred_check
          %p265 = pneg %p104
        $region18: #{tpu_custom_call.1} parent=11 // pred_check_branch
          %267 = sbr.rel (%p265) target = $region20
        $region19: #{tpu_custom_call.1} parent=11 // pred_region
          %s269 = ssub.s32 16, 16
          %270 = vsyncadd [#allocation10], %s269
          %s272 = sshll.u32 [#allocation11], 4
          %s273 = int_to_ptr.vmem [resolvable:$true] %s272
          %275 = dma.hbm_to_vmem [thread:$0]  %s2, 16, %s273, [#allocation10]
        $region20: #{tpu_custom_call.1} parent=11 // pred_fallthru
          _
        // Predicated region
        $region21: #{tpu_custom_call.1} parent=11 // pred_check
          %p276 = pneg %p125
        $region22: #{tpu_custom_call.1} parent=11 // pred_check_branch
          %278 = sbr.rel (%p276) target = $region24
        $region23: #{tpu_custom_call.1} parent=11 // pred_region
          %s280 = ssub.s32 256, 256
          %281 = vsyncadd [#allocation13], %s280
          %s282 = sshll.u32 [#allocation12], 4
          %s283 = int_to_ptr.vmem [resolvable:$true] %s282
          %288 = dma.hbm_to_vmem [thread:$0]  %s3, 256, %s283, [#allocation13], 64, 64, 4
        $region24: #{tpu_custom_call.1} parent=11 // pred_fallthru
          _
        // Predicated region
        $region25: #{tpu_custom_call.1} parent=11 // pred_check
          %p289 = pneg %p146
        $region26: #{tpu_custom_call.1} parent=11 // pred_check_branch
          %291 = sbr.rel (%p289) target = $region28
        $region27: #{tpu_custom_call.1} parent=11 // pred_region
          %s293 = ssub.s32 16, 16
          %294 = vsyncadd [#allocation13], %s293
          %s296 = sshll.u32 [#allocation14], 4
          %s297 = int_to_ptr.vmem [resolvable:$true] %s296
          %299 = dma.hbm_to_vmem [thread:$0]  %s4, 16, %s297, [#allocation13]
        $region28: #{tpu_custom_call.1} parent=11 // pred_fallthru
          _
        // Predicated region
        $region29: #{tpu_custom_call.1} parent=11 // pred_check
          %p300 = pneg %p167
        $region30: #{tpu_custom_call.1} parent=11 // pred_check_branch
          %302 = sbr.rel (%p300) target = $region32
        $region31: #{tpu_custom_call.1} parent=11 // pred_region
          %s304 = ssub.s32 256, 256
          %305 = vsyncadd [#allocation16], %s304
          %s306 = sshll.u32 [#allocation15], 4
          %s307 = int_to_ptr.vmem [resolvable:$true] %s306
          %312 = dma.hbm_to_vmem [thread:$0]  %s5, 256, %s307, [#allocation16], 64, 64, 4
        $region32: #{tpu_custom_call.1} parent=11 // pred_fallthru
          _
        // Predicated region
        $region33: #{tpu_custom_call.1} parent=11 // pred_check
          %p313 = pneg %p188
        $region34: #{tpu_custom_call.1} parent=11 // pred_check_branch
          %315 = sbr.rel (%p313) target = $region36
        $region35: #{tpu_custom_call.1} parent=11 // pred_region
          %s317 = ssub.s32 16, 16
          %318 = vsyncadd [#allocation16], %s317
          %s320 = sshll.u32 [#allocation17], 4
          %s321 = int_to_ptr.vmem [resolvable:$true] %s320
          %323 = dma.hbm_to_vmem [thread:$0]  %s6, 16, %s321, [#allocation16]
        $region36: #{tpu_custom_call.1} parent=11 // pred_fallthru
          _
        // Predicated region
        $region37: #{tpu_custom_call.1} parent=11 // pred_check
          %p324 = pneg %p209
        $region38: #{tpu_custom_call.1} parent=11 // pred_check_branch
          %326 = sbr.rel (%p324) target = $region40
        $region39: #{tpu_custom_call.1} parent=11 // pred_region
          _
        $region40: #{tpu_custom_call.1} parent=11 // pred_fallthru
          _
      $region12: #{tpu_custom_call.1} parent=5 // pred_fallthru
        _
      %p327 = scmp.lt.s32.totalorder %s24, 4
      // Predicated region
      $region41: #{tpu_custom_call.1} parent=5 // pred_check
        %p328 = pneg %p327
      $region42: #{tpu_custom_call.1} parent=5 // pred_check_branch
        %330 = sbr.rel (%p328) target = $region44
      $region43: #{tpu_custom_call.1} parent=5 // pred_region
        // Predicated region
        $region45: #{tpu_custom_call.1} parent=43 // pred_check
          %p331 = pneg %p56
        $region46: #{tpu_custom_call.1} parent=43 // pred_check_branch
          %333 = sbr.rel (%p331) target = $region48
        $region47: #{tpu_custom_call.1} parent=43 // pred_region
          %s334 = sand.u32 %s46, 1
          %s335 = scalar_lea.sflag [#allocation7], %s334
          %s336 = sand.u32 %s46, 1
          %s337 = smul.addr %s336, 256
          %s338 = scalar_lea.vmem [#allocation6], %s337
          %s340 = ssub.s32 4096, 4096
          %341 = vsyncadd %s335, %s340
          %s342 = smul.addr %s31, 32
          %s343 = smul.addr %s342, 128
          %s344 = scalar_lea.hbm %s0, %s343
          %s345 = sshll.u32 %s338, 4
          %s346 = int_to_ptr.vmem [resolvable:$true] %s345
          %351 = dma.hbm_to_vmem [thread:$0]  %s344, 4096, %s346, %s335, 128, 128, 8
        $region48: #{tpu_custom_call.1} parent=43 // pred_fallthru
          _
      $region44: #{tpu_custom_call.1} parent=5 // pred_fallthru
        _
      %p352 = scmp.le.s32.totalorder 1, %s24
      %p353 = scmp.lt.s32.totalorder %s24, 5
      %p354 = pnand %p352, %p353
      %p355 = pneg %p354
      // Predicated region
      $region49: #{tpu_custom_call.1} parent=5 // pred_check
        _
      $region50: #{tpu_custom_call.1} parent=5 // pred_check_branch
        %357 = sbr.rel (%p354) target = $region52
      $region51: #{tpu_custom_call.1} parent=5 // pred_region
        %s358 = ssub.s32 %s24, 1
        %s359 = sand.u32 %s49, 1
        %s360 = scalar_lea.sflag [#allocation7], %s359
        %s361 = sand.u32 %s49, 1
        %s362 = smul.addr %s361, 256
        %s363 = scalar_lea.vmem [#allocation6], %s362
        // Predicated region
        $region53: #{tpu_custom_call.1} parent=51 // pred_check
          %p364 = pneg %p62
        $region54: #{tpu_custom_call.1} parent=51 // pred_check_branch
          %366 = sbr.rel (%p364) target = $region56
        $region55: #{tpu_custom_call.1} parent=51 // pred_region
          %367 = dma.done %s360, 4096
        $region56: #{tpu_custom_call.1} parent=51 // pred_fallthru
          _
        // Predicated region
        $region57: #{tpu_custom_call.1} parent=51 // pred_check
          %p368 = pneg %p83
        $region58: #{tpu_custom_call.1} parent=51 // pred_check_branch
          %370 = sbr.rel (%p368) target = $region60
        $region59: #{tpu_custom_call.1} parent=51 // pred_region
          %371 = dma.done [#allocation10], 256
        $region60: #{tpu_custom_call.1} parent=51 // pred_fallthru
          _
        // Predicated region
        $region61: #{tpu_custom_call.1} parent=51 // pred_check
          %p372 = pneg %p104
        $region62: #{tpu_custom_call.1} parent=51 // pred_check_branch
          %374 = sbr.rel (%p372) target = $region64
        $region63: #{tpu_custom_call.1} parent=51 // pred_region
          %375 = dma.done [#allocation10], 16
        $region64: #{tpu_custom_call.1} parent=51 // pred_fallthru
          _
        // Predicated region
        $region65: #{tpu_custom_call.1} parent=51 // pred_check
          %p376 = pneg %p125
        $region66: #{tpu_custom_call.1} parent=51 // pred_check_branch
          %378 = sbr.rel (%p376) target = $region68
        $region67: #{tpu_custom_call.1} parent=51 // pred_region
          %379 = dma.done [#allocation13], 256
        $region68: #{tpu_custom_call.1} parent=51 // pred_fallthru
          _
        // Predicated region
        $region69: #{tpu_custom_call.1} parent=51 // pred_check
          %p380 = pneg %p146
        $region70: #{tpu_custom_call.1} parent=51 // pred_check_branch
          %382 = sbr.rel (%p380) target = $region72
        $region71: #{tpu_custom_call.1} parent=51 // pred_region
          %383 = dma.done [#allocation13], 16
        $region72: #{tpu_custom_call.1} parent=51 // pred_fallthru
          _
        // Predicated region
        $region73: #{tpu_custom_call.1} parent=51 // pred_check
          %p384 = pneg %p167
        $region74: #{tpu_custom_call.1} parent=51 // pred_check_branch
          %386 = sbr.rel (%p384) target = $region76
        $region75: #{tpu_custom_call.1} parent=51 // pred_region
          %387 = dma.done [#allocation16], 256
        $region76: #{tpu_custom_call.1} parent=51 // pred_fallthru
          _
        // Predicated region
        $region77: #{tpu_custom_call.1} parent=51 // pred_check
          %p388 = pneg %p188
        $region78: #{tpu_custom_call.1} parent=51 // pred_check_branch
          %390 = sbr.rel (%p388) target = $region80
        $region79: #{tpu_custom_call.1} parent=51 // pred_region
          %391 = dma.done [#allocation16], 16
        $region80: #{tpu_custom_call.1} parent=51 // pred_fallthru
          _
        %s392 = sand.u32 %s49, 1
        %s393 = scalar_lea.sflag [#allocation7], %s392
        %s394 = sand.u32 %s49, 1
        %s395 = smul.addr %s394, 256
        %s396 = scalar_lea.vmem [#allocation6], %s395
        %p397 = pneg %p62
        %p398 = pneg %p59
        %p399 = pneg %p83
        %p400 = pneg %p80
        %p401 = pneg %p104
        %p402 = pneg %p101
        %p403 = pneg %p125
        %p404 = pneg %p122
        %p405 = pneg %p146
        %p406 = pneg %p143
        %p407 = pneg %p167
        %p408 = pneg %p164
        %p409 = pneg %p188
        %p410 = pneg %p185
        %p411 = pneg %p209
        %p412 = pneg %p206
        %p413 = pneg %p237
        %p414 = pneg %p234
        %s415 = sand.u32 %s224, 1
        %s416 = scalar_lea.sflag [#allocation8], %s415
        %s417 = sand.u32 %s224, 1
        %s418 = smul.addr %s417, 128
        %s419 = scalar_lea.vmem [#allocation18], %s418
        %s420 = smul.u32 8, %s34
        %s422 = sld [smem:[#allocation5]]
        %p423 = scmp.eq.s32.totalorder %s34, 0
        // Predicated region
        $region81: #{tpu_custom_call.1} parent=51 // pred_check
          %p424 = pneg %p423
        $region82: #{tpu_custom_call.1} parent=51 // pred_check_branch
          %426 = sbr.rel (%p424) target = $region84
        $region83: #{tpu_custom_call.1} parent=51 // pred_region
          %v427 = vld [vmem:[%s363] sm:$0xff]
          %v428 = vld [vmem:[%s363 + $0x8] sm:$0xff]
          %v429 = vld [vmem:[%s363 + $0x10] sm:$0xff]
          %v430 = vld [vmem:[%s363 + $0x18] sm:$0xff]
          %v431 = vld [vmem:[%s363 + $0x20] sm:$0xff]
          %v432 = vld [vmem:[%s363 + $0x28] sm:$0xff]
          %v433 = vld [vmem:[%s363 + $0x30] sm:$0xff]
          %v434 = vld [vmem:[%s363 + $0x38] sm:$0xff]
          %v435 = vld [vmem:[%s363 + $0x40] sm:$0xff]
          %v436 = vld [vmem:[%s363 + $0x48] sm:$0xff]
          %v437 = vld [vmem:[%s363 + $0x50] sm:$0xff]
          %v438 = vld [vmem:[%s363 + $0x58] sm:$0xff]
          %v439 = vld [vmem:[%s363 + $0x60] sm:$0xff]
          %v440 = vld [vmem:[%s363 + $0x68] sm:$0xff]
          %v441 = vld [vmem:[%s363 + $0x70] sm:$0xff]
          %v442 = vld [vmem:[%s363 + $0x78] sm:$0xff]
          %v443 = vld [vmem:[%s363 + $0x80] sm:$0xff]
          %v444 = vld [vmem:[%s363 + $0x88] sm:$0xff]
          %v445 = vld [vmem:[%s363 + $0x90] sm:$0xff]
          %v446 = vld [vmem:[%s363 + $0x98] sm:$0xff]
          %v447 = vld [vmem:[%s363 + $0xa0] sm:$0xff]
          %v448 = vld [vmem:[%s363 + $0xa8] sm:$0xff]
          %v449 = vld [vmem:[%s363 + $0xb0] sm:$0xff]
          %v450 = vld [vmem:[%s363 + $0xb8] sm:$0xff]
          %v451 = vld [vmem:[%s363 + $0xc0] sm:$0xff]
          %v452 = vld [vmem:[%s363 + $0xc8] sm:$0xff]
          %v453 = vld [vmem:[%s363 + $0xd0] sm:$0xff]
          %v454 = vld [vmem:[%s363 + $0xd8] sm:$0xff]
          %v455 = vld [vmem:[%s363 + $0xe0] sm:$0xff]
          %v456 = vld [vmem:[%s363 + $0xe8] sm:$0xff]
          %v457 = vld [vmem:[%s363 + $0xf0] sm:$0xff]
          %v458 = vld [vmem:[%s363 + $0xf8] sm:$0xff]
          %v459 = vpack.c.bf16 %v428, %v427
          %v460 = vpack.c.bf16 %v430, %v429
          %v461 = vpack.c.bf16 %v432, %v431
          %v462 = vpack.c.bf16 %v434, %v433
          %v463 = vpack.c.bf16 %v436, %v435
          %v464 = vpack.c.bf16 %v438, %v437
          %v465 = vpack.c.bf16 %v440, %v439
          %v466 = vpack.c.bf16 %v442, %v441
          %v467 = vpack.c.bf16 %v444, %v443
          %v468 = vpack.c.bf16 %v446, %v445
          %v469 = vpack.c.bf16 %v448, %v447
          %v470 = vpack.c.bf16 %v450, %v449
          %v471 = vpack.c.bf16 %v452, %v451
          %v472 = vpack.c.bf16 %v454, %v453
          %v473 = vpack.c.bf16 %v456, %v455
          %v474 = vpack.c.bf16 %v458, %v457
          %v475 = vld [vmem:[#allocation12] sm:$0xf]
          %v476 = vld [vmem:[#allocation12 + $0x4] sm:$0xf]
          %v477 = vld [vmem:[#allocation12 + $0x8] sm:$0xf]
          %v478 = vld [vmem:[#allocation12 + $0xc] sm:$0xf]
          %v479 = vld [vmem:[#allocation14] sm:$0x1]
          %v480 = vunpack.c.l.bf16 %v479
          %v481 = vlaneseq
          %v482 = vshrl.u32 %v481, 7
          %v483 = vsub.s32 0, %v482
          %v484 = vrot.slane %v480, %v483
          %v489 = vunpack.c.l.b16 %v475
          %v490 = vunpack.c.l.b16 %v476
          %v491 = vunpack.c.l.b16 %v477
          %v492 = vunpack.c.l.b16 %v478
          %v493 = vpack.c.b16 %v490, %v489
          %v494 = vpack.c.b16 %v492, %v491
          %vm497 = vcmask 261120
          %v499 = vsel %vm497, %v459, 0
          %v502 = vsel %vm497, %v460, 0
          %v505 = vsel %vm497, %v461, 0
          %v508 = vsel %vm497, %v462, 0
          %v511 = vsel %vm497, %v463, 0
          %v514 = vsel %vm497, %v464, 0
          %v517 = vsel %vm497, %v465, 0
          %v520 = vsel %vm497, %v466, 0
          %v523 = vsel %vm497, %v467, 0
          %v526 = vsel %vm497, %v468, 0
          %v529 = vsel %vm497, %v469, 0
          %v532 = vsel %vm497, %v470, 0
          %v535 = vsel %vm497, %v471, 0
          %v538 = vsel %vm497, %v472, 0
          %v541 = vsel %vm497, %v473, 0
          %v544 = vsel %vm497, %v474, 0
          %546 = vmatprep.subr.bf16.mxu0 0
          %547 = vmatpush1.bf16.msra.mxu0 %v493
          %548 = vmatprep.subr.bf16.mxu0 0
          %549 = vmatpush1.bf16.msra.mxu0 %v494
          %550 = vmatprep.subr.bf16.mxu0 0
          %551 = vmatpush1.bf16.msra.mxu0 0
          %552 = vmatprep.subr.bf16.mxu0 0
          %553 = vmatpush1.bf16.msra.mxu0 0
          %554 = vmatprep.subr.bf16.mxu0 0
          %555 = vmatpush1.bf16.msra.mxu0 0
          %556 = vmatprep.subr.bf16.mxu0 0
          %557 = vmatpush1.bf16.msra.mxu0 0
          %558 = vmatprep.subr.bf16.mxu0 0
          %559 = vmatpush1.bf16.msra.mxu0 0
          %560 = vmatprep.subr.bf16.mxu0 0
          %561 = vmatpush1.bf16.msra.mxu0 0
          %562 = vmatprep.subr.bf16.mxu0 0
          %563 = vmatpush1.bf16.msra.mxu0 0
          %564 = vmatprep.subr.bf16.mxu0 0
          %565 = vmatpush1.bf16.msra.mxu0 0
          %566 = vmatprep.subr.bf16.mxu0 0
          %567 = vmatpush1.bf16.msra.mxu0 0
          %568 = vmatprep.subr.bf16.mxu0 0
          %569 = vmatpush1.bf16.msra.mxu0 0
          %570 = vmatprep.subr.bf16.mxu0 0
          %571 = vmatpush1.bf16.msra.mxu0 0
          %572 = vmatprep.subr.bf16.mxu0 0
          %573 = vmatpush1.bf16.msra.mxu0 0
          %574 = vmatprep.subr.bf16.mxu0 0
          %575 = vmatpush1.bf16.msra.mxu0 0
          %576 = vmatprep.subr.bf16.mxu0 0
          %577 = vmatpush1.bf16.msra.mxu0 0
          %578 = vmatprep.mubr.bf16.mxu0 0
          %579 = vmatmul.mubr.bf16.gmra.mrb[0].mxu0 %v499
          %v580 = vpop.f32.mrb[0].mxu0
          %v581 = vadd.f32 %v484, %v580
          %v582 = vpop.f32.mrb[0].mxu0
          %v583 = vpop.f32.mrb[0].mxu0
          %v584 = vadd.f32 %v484, %v583
          %v585 = vpop.f32.mrb[0].mxu0
          %586 = vmatprep.mubr.bf16.mxu0 0
          %587 = vmatmul.mubr.bf16.gmra.mrb[0].mxu0 %v502
          %v588 = vpop.f32.mrb[0].mxu0
          %v589 = vadd.f32 %v484, %v588
          %v590 = vpop.f32.mrb[0].mxu0
          %v591 = vpop.f32.mrb[0].mxu0
          %v592 = vadd.f32 %v484, %v591
          %v593 = vpop.f32.mrb[0].mxu0
          %594 = vmatprep.mubr.bf16.mxu0 0
          %595 = vmatmul.mubr.bf16.gmra.mrb[0].mxu0 %v505
          %v596 = vpop.f32.mrb[0].mxu0
          %v597 = vadd.f32 %v484, %v596
          %v598 = vpop.f32.mrb[0].mxu0
          %v599 = vpop.f32.mrb[0].mxu0
          %v600 = vadd.f32 %v484, %v599
          %v601 = vpop.f32.mrb[0].mxu0
          %602 = vmatprep.mubr.bf16.mxu0 0
          %603 = vmatmul.mubr.bf16.gmra.mrb[0].mxu0 %v508
          %v604 = vpop.f32.mrb[0].mxu0
          %v605 = vadd.f32 %v484, %v604
          %v606 = vpop.f32.mrb[0].mxu0
          %v607 = vpop.f32.mrb[0].mxu0
          %v608 = vadd.f32 %v484, %v607
          %v609 = vpop.f32.mrb[0].mxu0
          %610 = vmatprep.mubr.bf16.mxu0 0
          %611 = vmatmul.mubr.bf16.gmra.mrb[0].mxu0 %v511
          %v612 = vpop.f32.mrb[0].mxu0
          %v613 = vadd.f32 %v484, %v612
          %v614 = vpop.f32.mrb[0].mxu0
          %v615 = vpop.f32.mrb[0].mxu0
          %v616 = vadd.f32 %v484, %v615
          %v617 = vpop.f32.mrb[0].mxu0
          %618 = vmatprep.mubr.bf16.mxu0 0
          %619 = vmatmul.mubr.bf16.gmra.mrb[0].mxu0 %v514
          %v620 = vpop.f32.mrb[0].mxu0
          %v621 = vadd.f32 %v484, %v620
          %v622 = vpop.f32.mrb[0].mxu0
          %v623 = vpop.f32.mrb[0].mxu0
          %v624 = vadd.f32 %v484, %v623
          %v625 = vpop.f32.mrb[0].mxu0
          %626 = vmatprep.mubr.bf16.mxu0 0
          %627 = vmatmul.mubr.bf16.gmra.mrb[0].mxu0 %v517
          %v628 = vpop.f32.mrb[0].mxu0
          %v629 = vadd.f32 %v484, %v628
          %v630 = vpop.f32.mrb[0].mxu0
          %v631 = vpop.f32.mrb[0].mxu0
          %v632 = vadd.f32 %v484, %v631
          %v633 = vpop.f32.mrb[0].mxu0
          %634 = vmatprep.mubr.bf16.mxu0 0
          %635 = vmatmul.mubr.bf16.gmra.mrb[0].mxu0 %v520
          %v636 = vpop.f32.mrb[0].mxu0
          %v637 = vadd.f32 %v484, %v636
          %v638 = vpop.f32.mrb[0].mxu0
          %v639 = vpop.f32.mrb[0].mxu0
          %v640 = vadd.f32 %v484, %v639
          %v641 = vpop.f32.mrb[0].mxu0
          %642 = vmatprep.mubr.bf16.mxu0 0
          %643 = vmatmul.mubr.bf16.gmra.mrb[0].mxu0 %v523
          %v644 = vpop.f32.mrb[0].mxu0
          %v645 = vadd.f32 %v484, %v644
          %v646 = vpop.f32.mrb[0].mxu0
          %v647 = vpop.f32.mrb[0].mxu0
          %v648 = vadd.f32 %v484, %v647
          %v649 = vpop.f32.mrb[0].mxu0
          %650 = vmatprep.mubr.bf16.mxu0 0
          %651 = vmatmul.mubr.bf16.gmra.mrb[0].mxu0 %v526
          %v652 = vpop.f32.mrb[0].mxu0
          %v653 = vadd.f32 %v484, %v652
          %v654 = vpop.f32.mrb[0].mxu0
          %v655 = vpop.f32.mrb[0].mxu0
          %v656 = vadd.f32 %v484, %v655
          %v657 = vpop.f32.mrb[0].mxu0
          %658 = vmatprep.mubr.bf16.mxu0 0
          %659 = vmatmul.mubr.bf16.gmra.mrb[0].mxu0 %v529
          %v660 = vpop.f32.mrb[0].mxu0
          %v661 = vadd.f32 %v484, %v660
          %v662 = vpop.f32.mrb[0].mxu0
          %v663 = vpop.f32.mrb[0].mxu0
          %v664 = vadd.f32 %v484, %v663
          %v665 = vpop.f32.mrb[0].mxu0
          %666 = vmatprep.mubr.bf16.mxu0 0
          %667 = vmatmul.mubr.bf16.gmra.mrb[0].mxu0 %v532
          %v668 = vpop.f32.mrb[0].mxu0
          %v669 = vadd.f32 %v484, %v668
          %v670 = vpop.f32.mrb[0].mxu0
          %v671 = vpop.f32.mrb[0].mxu0
          %v672 = vadd.f32 %v484, %v671
          %v673 = vpop.f32.mrb[0].mxu0
          %674 = vmatprep.mubr.bf16.mxu0 0
          %675 = vmatmul.mubr.bf16.gmra.mrb[0].mxu0 %v535
          %v676 = vpop.f32.mrb[0].mxu0
          %v677 = vadd.f32 %v484, %v676
          %v678 = vpop.f32.mrb[0].mxu0
          %v679 = vpop.f32.mrb[0].mxu0
          %v680 = vadd.f32 %v484, %v679
          %v681 = vpop.f32.mrb[0].mxu0
          %682 = vmatprep.mubr.bf16.mxu0 0
          %683 = vmatmul.mubr.bf16.gmra.mrb[0].mxu0 %v538
          %v684 = vpop.f32.mrb[0].mxu0
          %v685 = vadd.f32 %v484, %v684
          %v686 = vpop.f32.mrb[0].mxu0
          %v687 = vpop.f32.mrb[0].mxu0
          %v688 = vadd.f32 %v484, %v687
          %v689 = vpop.f32.mrb[0].mxu0
          %690 = vmatprep.mubr.bf16.mxu0 0
          %691 = vmatmul.mubr.bf16.gmra.mrb[0].mxu0 %v541
          %v692 = vpop.f32.mrb[0].mxu0
          %v693 = vadd.f32 %v484, %v692
          %v694 = vpop.f32.mrb[0].mxu0
          %v695 = vpop.f32.mrb[0].mxu0
          %v696 = vadd.f32 %v484, %v695
          %v697 = vpop.f32.mrb[0].mxu0
          %698 = vmatprep.mubr.bf16.mxu0 0
          %699 = vmatmul.mubr.bf16.gmra.mrb[0].mxu0 %v544
          %v700 = vpop.f32.mrb[0].mxu0
          %v701 = vadd.f32 %v484, %v700
          %v702 = vpop.f32.mrb[0].mxu0
          %v703 = vpop.f32.mrb[0].mxu0
          %v704 = vadd.f32 %v484, %v703
          %v705 = vpop.f32.mrb[0].mxu0
          %706 = vdwg.mxu0
          %v707 = vpack.c.bf16 %v584, %v581
          %v708 = vpack.c.bf16 %v592, %v589
          %v709 = vpack.c.bf16 %v600, %v597
          %v710 = vpack.c.bf16 %v608, %v605
          %v711 = vpack.c.bf16 %v616, %v613
          %v712 = vpack.c.bf16 %v624, %v621
          %v713 = vpack.c.bf16 %v632, %v629
          %v714 = vpack.c.bf16 %v640, %v637
          %v715 = vpack.c.bf16 %v648, %v645
          %v716 = vpack.c.bf16 %v656, %v653
          %v717 = vpack.c.bf16 %v664, %v661
          %v718 = vpack.c.bf16 %v672, %v669
          %v719 = vpack.c.bf16 %v680, %v677
          %v720 = vpack.c.bf16 %v688, %v685
          %v721 = vpack.c.bf16 %v696, %v693
          %v722 = vpack.c.bf16 %v704, %v701
          %v723 = vcombine.low %v707, %v711
          %v724 = vcombine.high %v707, %v711
          %v726 = vunpack.c.l.s4 1983009808
          %v727 = vunpack.c.0.s8 %v726
          %v728 = vlaneseq
          %v729 = vshrl.u32 %v728, 7
          %v730 = vsub.s32 %v727, %v729
          %v731 = vrot.slane %v723, %v730
          %v733 = vunpack.c.l.s4 1983009808
          %v734 = vunpack.c.0.s8 %v733
          %v735 = vlaneseq
          %v736 = vshrl.u32 %v735, 7
          %v737 = vsub.s32 %v734, %v736
          %v738 = vrot.slane %v724, %v737
          %v739 = vcombine.low %v709, %v713
          %v740 = vcombine.high %v709, %v713
          %v742 = vunpack.c.l.s4 1983009808
          %v743 = vunpack.c.0.s8 %v742
          %v744 = vlaneseq
          %v745 = vshrl.u32 %v744, 7
          %v746 = vsub.s32 %v743, %v745
          %v747 = vrot.slane %v739, %v746
          %v749 = vunpack.c.l.s4 1983009808
          %v750 = vunpack.c.0.s8 %v749
          %v751 = vlaneseq
          %v752 = vshrl.u32 %v751, 7
          %v753 = vsub.s32 %v750, %v752
          %v754 = vrot.slane %v740, %v753
          %v755 = vcombine.low %v715, %v719
          %v756 = vcombine.high %v715, %v719
          %v758 = vunpack.c.l.s4 1983009808
          %v759 = vunpack.c.0.s8 %v758
          %v760 = vlaneseq
          %v761 = vshrl.u32 %v760, 7
          %v762 = vsub.s32 %v759, %v761
          %v763 = vrot.slane %v755, %v762
          %v765 = vunpack.c.l.s4 1983009808
          %v766 = vunpack.c.0.s8 %v765
          %v767 = vlaneseq
          %v768 = vshrl.u32 %v767, 7
          %v769 = vsub.s32 %v766, %v768
          %v770 = vrot.slane %v756, %v769
          %v771 = vcombine.low %v717, %v721
          %v772 = vcombine.high %v717, %v721
          %v774 = vunpack.c.l.s4 1983009808
          %v775 = vunpack.c.0.s8 %v774
          %v776 = vlaneseq
          %v777 = vshrl.u32 %v776, 7
          %v778 = vsub.s32 %v775, %v777
          %v779 = vrot.slane %v771, %v778
          %v781 = vunpack.c.l.s4 1983009808
          %v782 = vunpack.c.0.s8 %v781
          %v783 = vlaneseq
          %v784 = vshrl.u32 %v783, 7
          %v785 = vsub.s32 %v782, %v784
          %v786 = vrot.slane %v772, %v785
          %v787 = vcombine.low %v731, %v747
          %v788 = vcombine.high %v731, %v747
          %v790 = vunpack.c.l.s4 1934713408
          %v791 = vunpack.c.0.s8 %v790
          %v792 = vlaneseq
          %v793 = vshrl.u32 %v792, 7
          %v794 = vsub.s32 %v791, %v793
          %v795 = vrot.slane %v787, %v794
          %v797 = vunpack.c.l.s4 1934713408
          %v798 = vunpack.c.0.s8 %v797
          %v799 = vlaneseq
          %v800 = vshrl.u32 %v799, 7
          %v801 = vsub.s32 %v798, %v800
          %v802 = vrot.slane %v788, %v801
          %v803 = vcombine.low %v738, %v754
          %v804 = vcombine.high %v738, %v754
          %v806 = vunpack.c.l.s4 1934713408
          %v807 = vunpack.c.0.s8 %v806
          %v808 = vlaneseq
          %v809 = vshrl.u32 %v808, 7
          %v810 = vsub.s32 %v807, %v809
          %v811 = vrot.slane %v803, %v810
          %v813 = vunpack.c.l.s4 1934713408
          %v814 = vunpack.c.0.s8 %v813
          %v815 = vlaneseq
          %v816 = vshrl.u32 %v815, 7
          %v817 = vsub.s32 %v814, %v816
          %v818 = vrot.slane %v804, %v817
          %v819 = vcombine.low %v763, %v779
          %v820 = vcombine.high %v763, %v779
          %v822 = vunpack.c.l.s4 1934713408
          %v823 = vunpack.c.0.s8 %v822
          %v824 = vlaneseq
          %v825 = vshrl.u32 %v824, 7
          %v826 = vsub.s32 %v823, %v825
          %v827 = vrot.slane %v819, %v826
          %v829 = vunpack.c.l.s4 1934713408
          %v830 = vunpack.c.0.s8 %v829
          %v831 = vlaneseq
          %v832 = vshrl.u32 %v831, 7
          %v833 = vsub.s32 %v830, %v832
          %v834 = vrot.slane %v820, %v833
          %v835 = vcombine.low %v770, %v786
          %v836 = vcombine.high %v770, %v786
          %v838 = vunpack.c.l.s4 1934713408
          %v839 = vunpack.c.0.s8 %v838
          %v840 = vlaneseq
          %v841 = vshrl.u32 %v840, 7
          %v842 = vsub.s32 %v839, %v841
          %v843 = vrot.slane %v835, %v842
          %v845 = vunpack.c.l.s4 1934713408
          %v846 = vunpack.c.0.s8 %v845
          %v847 = vlaneseq
          %v848 = vshrl.u32 %v847, 7
          %v849 = vsub.s32 %v846, %v848
          %v850 = vrot.slane %v836, %v849
          %v851 = vcombine.low %v795, %v827
          %v852 = vcombine.high %v795, %v827
          %v853 = vcombine.low %v802, %v834
          %v854 = vcombine.high %v802, %v834
          %v855 = vcombine.low %v811, %v843
          %v856 = vcombine.high %v811, %v843
          %v857 = vcombine.low %v818, %v850
          %v858 = vcombine.high %v818, %v850
          %v859 = vcombine.low %v708, %v712
          %v860 = vcombine.high %v708, %v712
          %v862 = vunpack.c.l.s4 1983009808
          %v863 = vunpack.c.0.s8 %v862
          %v864 = vlaneseq
          %v865 = vshrl.u32 %v864, 7
          %v866 = vsub.s32 %v863, %v865
          %v867 = vrot.slane %v859, %v866
          %v869 = vunpack.c.l.s4 1983009808
          %v870 = vunpack.c.0.s8 %v869
          %v871 = vlaneseq
          %v872 = vshrl.u32 %v871, 7
          %v873 = vsub.s32 %v870, %v872
          %v874 = vrot.slane %v860, %v873
          %v875 = vcombine.low %v710, %v714
          %v876 = vcombine.high %v710, %v714
          %v878 = vunpack.c.l.s4 1983009808
          %v879 = vunpack.c.0.s8 %v878
          %v880 = vlaneseq
          %v881 = vshrl.u32 %v880, 7
          %v882 = vsub.s32 %v879, %v881
          %v883 = vrot.slane %v875, %v882
          %v885 = vunpack.c.l.s4 1983009808
          %v886 = vunpack.c.0.s8 %v885
          %v887 = vlaneseq
          %v888 = vshrl.u32 %v887, 7
          %v889 = vsub.s32 %v886, %v888
          %v890 = vrot.slane %v876, %v889
          %v891 = vcombine.low %v716, %v720
          %v892 = vcombine.high %v716, %v720
          %v894 = vunpack.c.l.s4 1983009808
          %v895 = vunpack.c.0.s8 %v894
          %v896 = vlaneseq
          %v897 = vshrl.u32 %v896, 7
          %v898 = vsub.s32 %v895, %v897
          %v899 = vrot.slane %v891, %v898
          %v901 = vunpack.c.l.s4 1983009808
          %v902 = vunpack.c.0.s8 %v901
          %v903 = vlaneseq
          %v904 = vshrl.u32 %v903, 7
          %v905 = vsub.s32 %v902, %v904
          %v906 = vrot.slane %v892, %v905
          %v907 = vcombine.low %v718, %v722
          %v908 = vcombine.high %v718, %v722
          %v910 = vunpack.c.l.s4 1983009808
          %v911 = vunpack.c.0.s8 %v910
          %v912 = vlaneseq
          %v913 = vshrl.u32 %v912, 7
          %v914 = vsub.s32 %v911, %v913
          %v915 = vrot.slane %v907, %v914
          %v917 = vunpack.c.l.s4 1983009808
          %v918 = vunpack.c.0.s8 %v917
          %v919 = vlaneseq
          %v920 = vshrl.u32 %v919, 7
          %v921 = vsub.s32 %v918, %v920
          %v922 = vrot.slane %v908, %v921
          %v923 = vcombine.low %v867, %v883
          %v924 = vcombine.high %v867, %v883
          %v926 = vunpack.c.l.s4 1934713408
          %v927 = vunpack.c.0.s8 %v926
          %v928 = vlaneseq
          %v929 = vshrl.u32 %v928, 7
          %v930 = vsub.s32 %v927, %v929
          %v931 = vrot.slane %v923, %v930
          %v933 = vunpack.c.l.s4 1934713408
          %v934 = vunpack.c.0.s8 %v933
          %v935 = vlaneseq
          %v936 = vshrl.u32 %v935, 7
          %v937 = vsub.s32 %v934, %v936
          %v938 = vrot.slane %v924, %v937
          %v939 = vcombine.low %v874, %v890
          %v940 = vcombine.high %v874, %v890
          %v942 = vunpack.c.l.s4 1934713408
          %v943 = vunpack.c.0.s8 %v942
          %v944 = vlaneseq
          %v945 = vshrl.u32 %v944, 7
          %v946 = vsub.s32 %v943, %v945
          %v947 = vrot.slane %v939, %v946
          %v949 = vunpack.c.l.s4 1934713408
          %v950 = vunpack.c.0.s8 %v949
          %v951 = vlaneseq
          %v952 = vshrl.u32 %v951, 7
          %v953 = vsub.s32 %v950, %v952
          %v954 = vrot.slane %v940, %v953
          %v955 = vcombine.low %v899, %v915
          %v956 = vcombine.high %v899, %v915
          %v958 = vunpack.c.l.s4 1934713408
          %v959 = vunpack.c.0.s8 %v958
          %v960 = vlaneseq
          %v961 = vshrl.u32 %v960, 7
          %v962 = vsub.s32 %v959, %v961
          %v963 = vrot.slane %v955, %v962
          %v965 = vunpack.c.l.s4 1934713408
          %v966 = vunpack.c.0.s8 %v965
          %v967 = vlaneseq
          %v968 = vshrl.u32 %v967, 7
          %v969 = vsub.s32 %v966, %v968
          %v970 = vrot.slane %v956, %v969
          %v971 = vcombine.low %v906, %v922
          %v972 = vcombine.high %v906, %v922
          %v974 = vunpack.c.l.s4 1934713408
          %v975 = vunpack.c.0.s8 %v974
          %v976 = vlaneseq
          %v977 = vshrl.u32 %v976, 7
          %v978 = vsub.s32 %v975, %v977
          %v979 = vrot.slane %v971, %v978
          %v981 = vunpack.c.l.s4 1934713408
          %v982 = vunpack.c.0.s8 %v981
          %v983 = vlaneseq
          %v984 = vshrl.u32 %v983, 7
          %v985 = vsub.s32 %v982, %v984
          %v986 = vrot.slane %v972, %v985
          %v987 = vcombine.low %v931, %v963
          %v988 = vcombine.high %v931, %v963
          %v989 = vcombine.low %v938, %v970
          %v990 = vcombine.high %v938, %v970
          %v991 = vcombine.low %v947, %v979
          %v992 = vcombine.high %v947, %v979
          %v993 = vcombine.low %v954, %v986
          %v994 = vcombine.high %v954, %v986
          %v997 = vpack.i.b16 %v987, %v851
          %v999 = vshrl.u32 %v851, 16
          %v1000 = vshrl.u32 %v987, 16
          %v1001 = vpack.i.b16 %v1000, %v999
          %v1005 = vpack.i.b16 %v988, %v852
          %v1007 = vshrl.u32 %v852, 16
          %v1008 = vshrl.u32 %v988, 16
          %v1009 = vpack.i.b16 %v1008, %v1007
          %v1013 = vpack.i.b16 %v989, %v853
          %v1015 = vshrl.u32 %v853, 16
          %v1016 = vshrl.u32 %v989, 16
          %v1017 = vpack.i.b16 %v1016, %v1015
          %v1021 = vpack.i.b16 %v990, %v854
          %v1023 = vshrl.u32 %v854, 16
          %v1024 = vshrl.u32 %v990, 16
          %v1025 = vpack.i.b16 %v1024, %v1023
          %v1029 = vpack.i.b16 %v991, %v855
          %v1031 = vshrl.u32 %v855, 16
          %v1032 = vshrl.u32 %v991, 16
          %v1033 = vpack.i.b16 %v1032, %v1031
          %v1037 = vpack.i.b16 %v992, %v856
          %v1039 = vshrl.u32 %v856, 16
          %v1040 = vshrl.u32 %v992, 16
          %v1041 = vpack.i.b16 %v1040, %v1039
          %v1045 = vpack.i.b16 %v993, %v857
          %v1047 = vshrl.u32 %v857, 16
          %v1048 = vshrl.u32 %v993, 16
          %v1049 = vpack.i.b16 %v1048, %v1047
          %v1053 = vpack.i.b16 %v994, %v858
          %v1055 = vshrl.u32 %v858, 16
          %v1056 = vshrl.u32 %v994, 16
          %v1057 = vpack.i.b16 %v1056, %v1055
          %1059 = vst [vmem:[#allocation4] sm:$0xff] %v997
          %1060 = vst [vmem:[#allocation4 + $0x8] sm:$0xff] %v1001
          %1061 = vst [vmem:[#allocation4 + $0x10] sm:$0xff] %v1005
          %1062 = vst [vmem:[#allocation4 + $0x18] sm:$0xff] %v1009
          %1063 = vst [vmem:[#allocation4 + $0x20] sm:$0xff] %v1013
          %1064 = vst [vmem:[#allocation4 + $0x28] sm:$0xff] %v1017
          %1065 = vst [vmem:[#allocation4 + $0x30] sm:$0xff] %v1021
          %1066 = vst [vmem:[#allocation4 + $0x38] sm:$0xff] %v1025
          %1067 = vst [vmem:[#allocation4 + $0x40] sm:$0xff] %v1029
          %1068 = vst [vmem:[#allocation4 + $0x48] sm:$0xff] %v1033
          %1069 = vst [vmem:[#allocation4 + $0x50] sm:$0xff] %v1037
          %1070 = vst [vmem:[#allocation4 + $0x58] sm:$0xff] %v1041
          %1071 = vst [vmem:[#allocation4 + $0x60] sm:$0xff] %v1045
          %1072 = vst [vmem:[#allocation4 + $0x68] sm:$0xff] %v1049
          %1073 = vst [vmem:[#allocation4 + $0x70] sm:$0xff] %v1053
          %1074 = vst [vmem:[#allocation4 + $0x78] sm:$0xff] %v1057
          %v1075 = vld [vmem:[#allocation15] sm:$0xf]
          %v1076 = vld [vmem:[#allocation15 + $0x4] sm:$0xf]
          %v1077 = vld [vmem:[#allocation15 + $0x8] sm:$0xf]
          %v1078 = vld [vmem:[#allocation15 + $0xc] sm:$0xf]
          %v1079 = vld [vmem:[#allocation17] sm:$0x1]
          %v1080 = vunpack.c.l.bf16 %v1079
          %v1081 = vlaneseq
          %v1082 = vshrl.u32 %v1081, 7
          %v1083 = vsub.s32 0, %v1082
          %v1084 = vrot.slane %v1080, %v1083
          %v1089 = vunpack.c.l.b16 %v1075
          %v1090 = vunpack.c.l.b16 %v1076
          %v1091 = vunpack.c.l.b16 %v1077
          %v1092 = vunpack.c.l.b16 %v1078
          %v1093 = vpack.c.b16 %v1090, %v1089
          %v1094 = vpack.c.b16 %v1092, %v1091
          %1097 = vmatprep.subr.bf16.mxu0 0
          %1098 = vmatpush1.bf16.msra.mxu0 %v1093
          %1099 = vmatprep.subr.bf16.mxu0 0
          %1100 = vmatpush1.bf16.msra.mxu0 %v1094
          %1101 = vmatprep.subr.bf16.mxu0 0
          %1102 = vmatpush1.bf16.msra.mxu0 0
          %1103 = vmatprep.subr.bf16.mxu0 0
          %1104 = vmatpush1.bf16.msra.mxu0 0
          %1105 = vmatprep.subr.bf16.mxu0 0
          %1106 = vmatpush1.bf16.msra.mxu0 0
          %1107 = vmatprep.subr.bf16.mxu0 0
          %1108 = vmatpush1.bf16.msra.mxu0 0
          %1109 = vmatprep.subr.bf16.mxu0 0
          %1110 = vmatpush1.bf16.msra.mxu0 0
          %1111 = vmatprep.subr.bf16.mxu0 0
          %1112 = vmatpush1.bf16.msra.mxu0 0
          %1113 = vmatprep.subr.bf16.mxu0 0
          %1114 = vmatpush1.bf16.msra.mxu0 0
          %1115 = vmatprep.subr.bf16.mxu0 0
          %1116 = vmatpush1.bf16.msra.mxu0 0
          %1117 = vmatprep.subr.bf16.mxu0 0
          %1118 = vmatpush1.bf16.msra.mxu0 0
          %1119 = vmatprep.subr.bf16.mxu0 0
          %1120 = vmatpush1.bf16.msra.mxu0 0
          %1121 = vmatprep.subr.bf16.mxu0 0
          %1122 = vmatpush1.bf16.msra.mxu0 0
          %1123 = vmatprep.subr.bf16.mxu0 0
          %1124 = vmatpush1.bf16.msra.mxu0 0
          %1125 = vmatprep.subr.bf16.mxu0 0
          %1126 = vmatpush1.bf16.msra.mxu0 0
          %1127 = vmatprep.subr.bf16.mxu0 0
          %1128 = vmatpush1.bf16.msra.mxu0 0
          %1129 = vmatprep.mubr.bf16.mxu0 0
          %1130 = vmatmul.mubr.bf16.gmra.mrb[0].mxu0 %v499
          %v1131 = vpop.f32.mrb[0].mxu0
          %v1132 = vadd.f32 %v1084, %v1131
          %v1133 = vpop.f32.mrb[0].mxu0
          %v1134 = vpop.f32.mrb[0].mxu0
          %v1135 = vadd.f32 %v1084, %v1134
          %v1136 = vpop.f32.mrb[0].mxu0
          %1137 = vmatprep.mubr.bf16.mxu0 0
          %1138 = vmatmul.mubr.bf16.gmra.mrb[0].mxu0 %v502
          %v1139 = vpop.f32.mrb[0].mxu0
          %v1140 = vadd.f32 %v1084, %v1139
          %v1141 = vpop.f32.mrb[0].mxu0
          %v1142 = vpop.f32.mrb[0].mxu0
          %v1143 = vadd.f32 %v1084, %v1142
          %v1144 = vpop.f32.mrb[0].mxu0
          %1145 = vmatprep.mubr.bf16.mxu0 0
          %1146 = vmatmul.mubr.bf16.gmra.mrb[0].mxu0 %v505
          %v1147 = vpop.f32.mrb[0].mxu0
          %v1148 = vadd.f32 %v1084, %v1147
          %v1149 = vpop.f32.mrb[0].mxu0
          %v1150 = vpop.f32.mrb[0].mxu0
          %v1151 = vadd.f32 %v1084, %v1150
          %v1152 = vpop.f32.mrb[0].mxu0
          %1153 = vmatprep.mubr.bf16.mxu0 0
          %1154 = vmatmul.mubr.bf16.gmra.mrb[0].mxu0 %v508
          %v1155 = vpop.f32.mrb[0].mxu0
          %v1156 = vadd.f32 %v1084, %v1155
          %v1157 = vpop.f32.mrb[0].mxu0
          %v1158 = vpop.f32.mrb[0].mxu0
          %v1159 = vadd.f32 %v1084, %v1158
          %v1160 = vpop.f32.mrb[0].mxu0
          %1161 = vmatprep.mubr.bf16.mxu0 0
          %1162 = vmatmul.mubr.bf16.gmra.mrb[0].mxu0 %v511
          %v1163 = vpop.f32.mrb[0].mxu0
          %v1164 = vadd.f32 %v1084, %v1163
          %v1165 = vpop.f32.mrb[0].mxu0
          %v1166 = vpop.f32.mrb[0].mxu0
          %v1167 = vadd.f32 %v1084, %v1166
          %v1168 = vpop.f32.mrb[0].mxu0
          %1169 = vmatprep.mubr.bf16.mxu0 0
          %1170 = vmatmul.mubr.bf16.gmra.mrb[0].mxu0 %v514
          %v1171 = vpop.f32.mrb[0].mxu0
          %v1172 = vadd.f32 %v1084, %v1171
          %v1173 = vpop.f32.mrb[0].mxu0
          %v1174 = vpop.f32.mrb[0].mxu0
          %v1175 = vadd.f32 %v1084, %v1174
          %v1176 = vpop.f32.mrb[0].mxu0
          %1177 = vmatprep.mubr.bf16.mxu0 0
          %1178 = vmatmul.mubr.bf16.gmra.mrb[0].mxu0 %v517
          %v1179 = vpop.f32.mrb[0].mxu0
          %v1180 = vadd.f32 %v1084, %v1179
          %v1181 = vpop.f32.mrb[0].mxu0
          %v1182 = vpop.f32.mrb[0].mxu0
          %v1183 = vadd.f32 %v1084, %v1182
          %v1184 = vpop.f32.mrb[0].mxu0
          %1185 = vmatprep.mubr.bf16.mxu0 0
          %1186 = vmatmul.mubr.bf16.gmra.mrb[0].mxu0 %v520
          %v1187 = vpop.f32.mrb[0].mxu0
          %v1188 = vadd.f32 %v1084, %v1187
          %v1189 = vpop.f32.mrb[0].mxu0
          %v1190 = vpop.f32.mrb[0].mxu0
          %v1191 = vadd.f32 %v1084, %v1190
          %v1192 = vpop.f32.mrb[0].mxu0
          %1193 = vmatprep.mubr.bf16.mxu0 0
          %1194 = vmatmul.mubr.bf16.gmra.mrb[0].mxu0 %v523
          %v1195 = vpop.f32.mrb[0].mxu0
          %v1196 = vadd.f32 %v1084, %v1195
          %v1197 = vpop.f32.mrb[0].mxu0
          %v1198 = vpop.f32.mrb[0].mxu0
          %v1199 = vadd.f32 %v1084, %v1198
          %v1200 = vpop.f32.mrb[0].mxu0
          %1201 = vmatprep.mubr.bf16.mxu0 0
          %1202 = vmatmul.mubr.bf16.gmra.mrb[0].mxu0 %v526
          %v1203 = vpop.f32.mrb[0].mxu0
          %v1204 = vadd.f32 %v1084, %v1203
          %v1205 = vpop.f32.mrb[0].mxu0
          %v1206 = vpop.f32.mrb[0].mxu0
          %v1207 = vadd.f32 %v1084, %v1206
          %v1208 = vpop.f32.mrb[0].mxu0
          %1209 = vmatprep.mubr.bf16.mxu0 0
          %1210 = vmatmul.mubr.bf16.gmra.mrb[0].mxu0 %v529
          %v1211 = vpop.f32.mrb[0].mxu0
          %v1212 = vadd.f32 %v1084, %v1211
          %v1213 = vpop.f32.mrb[0].mxu0
          %v1214 = vpop.f32.mrb[0].mxu0
          %v1215 = vadd.f32 %v1084, %v1214
          %v1216 = vpop.f32.mrb[0].mxu0
          %1217 = vmatprep.mubr.bf16.mxu0 0
          %1218 = vmatmul.mubr.bf16.gmra.mrb[0].mxu0 %v532
          %v1219 = vpop.f32.mrb[0].mxu0
          %v1220 = vadd.f32 %v1084, %v1219
          %v1221 = vpop.f32.mrb[0].mxu0
          %v1222 = vpop.f32.mrb[0].mxu0
          %v1223 = vadd.f32 %v1084, %v1222
          %v1224 = vpop.f32.mrb[0].mxu0
          %1225 = vmatprep.mubr.bf16.mxu0 0
          %1226 = vmatmul.mubr.bf16.gmra.mrb[0].mxu0 %v535
          %v1227 = vpop.f32.mrb[0].mxu0
          %v1228 = vadd.f32 %v1084, %v1227
          %v1229 = vpop.f32.mrb[0].mxu0
          %v1230 = vpop.f32.mrb[0].mxu0
          %v1231 = vadd.f32 %v1084, %v1230
          %v1232 = vpop.f32.mrb[0].mxu0
          %1233 = vmatprep.mubr.bf16.mxu0 0
          %1234 = vmatmul.mubr.bf16.gmra.mrb[0].mxu0 %v538
          %v1235 = vpop.f32.mrb[0].mxu0
          %v1236 = vadd.f32 %v1084, %v1235
          %v1237 = vpop.f32.mrb[0].mxu0
          %v1238 = vpop.f32.mrb[0].mxu0
          %v1239 = vadd.f32 %v1084, %v1238
          %v1240 = vpop.f32.mrb[0].mxu0
          %1241 = vmatprep.mubr.bf16.mxu0 0
          %1242 = vmatmul.mubr.bf16.gmra.mrb[0].mxu0 %v541
          %v1243 = vpop.f32.mrb[0].mxu0
          %v1244 = vadd.f32 %v1084, %v1243
          %v1245 = vpop.f32.mrb[0].mxu0
          %v1246 = vpop.f32.mrb[0].mxu0
          %v1247 = vadd.f32 %v1084, %v1246
          %v1248 = vpop.f32.mrb[0].mxu0
          %1249 = vmatprep.mubr.bf16.mxu0 0
          %1250 = vmatmul.mubr.bf16.gmra.mrb[0].mxu0 %v544
          %v1251 = vpop.f32.mrb[0].mxu0
          %v1252 = vadd.f32 %v1084, %v1251
          %v1253 = vpop.f32.mrb[0].mxu0
          %v1254 = vpop.f32.mrb[0].mxu0
          %v1255 = vadd.f32 %v1084, %v1254
          %v1256 = vpop.f32.mrb[0].mxu0
          %1257 = vdwg.mxu0
          %v1258 = vpack.c.bf16 %v1135, %v1132
          %v1259 = vpack.c.bf16 %v1143, %v1140
          %v1260 = vpack.c.bf16 %v1151, %v1148
          %v1261 = vpack.c.bf16 %v1159, %v1156
          %v1262 = vpack.c.bf16 %v1167, %v1164
          %v1263 = vpack.c.bf16 %v1175, %v1172
          %v1264 = vpack.c.bf16 %v1183, %v1180
          %v1265 = vpack.c.bf16 %v1191, %v1188
          %v1266 = vpack.c.bf16 %v1199, %v1196
          %v1267 = vpack.c.bf16 %v1207, %v1204
          %v1268 = vpack.c.bf16 %v1215, %v1212
          %v1269 = vpack.c.bf16 %v1223, %v1220
          %v1270 = vpack.c.bf16 %v1231, %v1228
          %v1271 = vpack.c.bf16 %v1239, %v1236
          %v1272 = vpack.c.bf16 %v1247, %v1244
          %v1273 = vpack.c.bf16 %v1255, %v1252
          %1274 = vst.msk [vmem:[#allocation2] sm:$0xff] %vm497, %v1258
          %1275 = vst.msk [vmem:[#allocation2 + $0x8] sm:$0xff] %vm497, %v1259
          %1276 = vst.msk [vmem:[#allocation2 + $0x10] sm:$0xff] %vm497, %v1260
          %1277 = vst.msk [vmem:[#allocation2 + $0x18] sm:$0xff] %vm497, %v1261
          %1278 = vst.msk [vmem:[#allocation2 + $0x20] sm:$0xff] %vm497, %v1262
          %1279 = vst.msk [vmem:[#allocation2 + $0x28] sm:$0xff] %vm497, %v1263
          %1280 = vst.msk [vmem:[#allocation2 + $0x30] sm:$0xff] %vm497, %v1264
          %1281 = vst.msk [vmem:[#allocation2 + $0x38] sm:$0xff] %vm497, %v1265
          %1282 = vst.msk [vmem:[#allocation2 + $0x40] sm:$0xff] %vm497, %v1266
          %1283 = vst.msk [vmem:[#allocation2 + $0x48] sm:$0xff] %vm497, %v1267
          %1284 = vst.msk [vmem:[#allocation2 + $0x50] sm:$0xff] %vm497, %v1268
          %1285 = vst.msk [vmem:[#allocation2 + $0x58] sm:$0xff] %vm497, %v1269
          %1286 = vst.msk [vmem:[#allocation2 + $0x60] sm:$0xff] %vm497, %v1270
          %1287 = vst.msk [vmem:[#allocation2 + $0x68] sm:$0xff] %vm497, %v1271
          %1288 = vst.msk [vmem:[#allocation2 + $0x70] sm:$0xff] %vm497, %v1272
          %1289 = vst.msk [vmem:[#allocation2 + $0x78] sm:$0xff] %vm497, %v1273
          %v1290 = vcombine.low %v1258, %v1262
          %v1291 = vcombine.high %v1258, %v1262
          %v1293 = vunpack.c.l.s4 1983009808
          %v1294 = vunpack.c.0.s8 %v1293
          %v1295 = vlaneseq
          %v1296 = vshrl.u32 %v1295, 7
          %v1297 = vsub.s32 %v1294, %v1296
          %v1298 = vrot.slane %v1290, %v1297
          %v1300 = vunpack.c.l.s4 1983009808
          %v1301 = vunpack.c.0.s8 %v1300
          %v1302 = vlaneseq
          %v1303 = vshrl.u32 %v1302, 7
          %v1304 = vsub.s32 %v1301, %v1303
          %v1305 = vrot.slane %v1291, %v1304
          %v1306 = vcombine.low %v1260, %v1264
          %v1307 = vcombine.high %v1260, %v1264
          %v1309 = vunpack.c.l.s4 1983009808
          %v1310 = vunpack.c.0.s8 %v1309
          %v1311 = vlaneseq
          %v1312 = vshrl.u32 %v1311, 7
          %v1313 = vsub.s32 %v1310, %v1312
          %v1314 = vrot.slane %v1306, %v1313
          %v1316 = vunpack.c.l.s4 1983009808
          %v1317 = vunpack.c.0.s8 %v1316
          %v1318 = vlaneseq
          %v1319 = vshrl.u32 %v1318, 7
          %v1320 = vsub.s32 %v1317, %v1319
          %v1321 = vrot.slane %v1307, %v1320
          %v1322 = vcombine.low %v1266, %v1270
          %v1323 = vcombine.high %v1266, %v1270
          %v1325 = vunpack.c.l.s4 1983009808
          %v1326 = vunpack.c.0.s8 %v1325
          %v1327 = vlaneseq
          %v1328 = vshrl.u32 %v1327, 7
          %v1329 = vsub.s32 %v1326, %v1328
          %v1330 = vrot.slane %v1322, %v1329
          %v1332 = vunpack.c.l.s4 1983009808
          %v1333 = vunpack.c.0.s8 %v1332
          %v1334 = vlaneseq
          %v1335 = vshrl.u32 %v1334, 7
          %v1336 = vsub.s32 %v1333, %v1335
          %v1337 = vrot.slane %v1323, %v1336
          %v1338 = vcombine.low %v1268, %v1272
          %v1339 = vcombine.high %v1268, %v1272
          %v1341 = vunpack.c.l.s4 1983009808
          %v1342 = vunpack.c.0.s8 %v1341
          %v1343 = vlaneseq
          %v1344 = vshrl.u32 %v1343, 7
          %v1345 = vsub.s32 %v1342, %v1344
          %v1346 = vrot.slane %v1338, %v1345
          %v1348 = vunpack.c.l.s4 1983009808
          %v1349 = vunpack.c.0.s8 %v1348
          %v1350 = vlaneseq
          %v1351 = vshrl.u32 %v1350, 7
          %v1352 = vsub.s32 %v1349, %v1351
          %v1353 = vrot.slane %v1339, %v1352
          %v1354 = vcombine.low %v1298, %v1314
          %v1355 = vcombine.high %v1298, %v1314
          %v1357 = vunpack.c.l.s4 1934713408
          %v1358 = vunpack.c.0.s8 %v1357
          %v1359 = vlaneseq
          %v1360 = vshrl.u32 %v1359, 7
          %v1361 = vsub.s32 %v1358, %v1360
          %v1362 = vrot.slane %v1354, %v1361
          %v1364 = vunpack.c.l.s4 1934713408
          %v1365 = vunpack.c.0.s8 %v1364
          %v1366 = vlaneseq
          %v1367 = vshrl.u32 %v1366, 7
          %v1368 = vsub.s32 %v1365, %v1367
          %v1369 = vrot.slane %v1355, %v1368
          %v1370 = vcombine.low %v1305, %v1321
          %v1371 = vcombine.high %v1305, %v1321
          %v1373 = vunpack.c.l.s4 1934713408
          %v1374 = vunpack.c.0.s8 %v1373
          %v1375 = vlaneseq
          %v1376 = vshrl.u32 %v1375, 7
          %v1377 = vsub.s32 %v1374, %v1376
          %v1378 = vrot.slane %v1370, %v1377
          %v1380 = vunpack.c.l.s4 1934713408
          %v1381 = vunpack.c.0.s8 %v1380
          %v1382 = vlaneseq
          %v1383 = vshrl.u32 %v1382, 7
          %v1384 = vsub.s32 %v1381, %v1383
          %v1385 = vrot.slane %v1371, %v1384
          %v1386 = vcombine.low %v1330, %v1346
          %v1387 = vcombine.high %v1330, %v1346
          %v1389 = vunpack.c.l.s4 1934713408
          %v1390 = vunpack.c.0.s8 %v1389
          %v1391 = vlaneseq
          %v1392 = vshrl.u32 %v1391, 7
          %v1393 = vsub.s32 %v1390, %v1392
          %v1394 = vrot.slane %v1386, %v1393
          %v1396 = vunpack.c.l.s4 1934713408
          %v1397 = vunpack.c.0.s8 %v1396
          %v1398 = vlaneseq
          %v1399 = vshrl.u32 %v1398, 7
          %v1400 = vsub.s32 %v1397, %v1399
          %v1401 = vrot.slane %v1387, %v1400
          %v1402 = vcombine.low %v1337, %v1353
          %v1403 = vcombine.high %v1337, %v1353
          %v1405 = vunpack.c.l.s4 1934713408
          %v1406 = vunpack.c.0.s8 %v1405
          %v1407 = vlaneseq
          %v1408 = vshrl.u32 %v1407, 7
          %v1409 = vsub.s32 %v1406, %v1408
          %v1410 = vrot.slane %v1402, %v1409
          %v1412 = vunpack.c.l.s4 1934713408
          %v1413 = vunpack.c.0.s8 %v1412
          %v1414 = vlaneseq
          %v1415 = vshrl.u32 %v1414, 7
          %v1416 = vsub.s32 %v1413, %v1415
          %v1417 = vrot.slane %v1403, %v1416
          %v1418 = vcombine.low %v1362, %v1394
          %v1419 = vcombine.high %v1362, %v1394
          %v1420 = vcombine.low %v1369, %v1401
          %v1421 = vcombine.high %v1369, %v1401
          %v1422 = vcombine.low %v1378, %v1410
          %v1423 = vcombine.high %v1378, %v1410
          %v1424 = vcombine.low %v1385, %v1417
          %v1425 = vcombine.high %v1385, %v1417
          %v1426 = vcombine.low %v1259, %v1263
          %v1427 = vcombine.high %v1259, %v1263
          %v1429 = vunpack.c.l.s4 1983009808
          %v1430 = vunpack.c.0.s8 %v1429
          %v1431 = vlaneseq
          %v1432 = vshrl.u32 %v1431, 7
          %v1433 = vsub.s32 %v1430, %v1432
          %v1434 = vrot.slane %v1426, %v1433
          %v1436 = vunpack.c.l.s4 1983009808
          %v1437 = vunpack.c.0.s8 %v1436
          %v1438 = vlaneseq
          %v1439 = vshrl.u32 %v1438, 7
          %v1440 = vsub.s32 %v1437, %v1439
          %v1441 = vrot.slane %v1427, %v1440
          %v1442 = vcombine.low %v1261, %v1265
          %v1443 = vcombine.high %v1261, %v1265
          %v1445 = vunpack.c.l.s4 1983009808
          %v1446 = vunpack.c.0.s8 %v1445
          %v1447 = vlaneseq
          %v1448 = vshrl.u32 %v1447, 7
          %v1449 = vsub.s32 %v1446, %v1448
          %v1450 = vrot.slane %v1442, %v1449
          %v1452 = vunpack.c.l.s4 1983009808
          %v1453 = vunpack.c.0.s8 %v1452
          %v1454 = vlaneseq
          %v1455 = vshrl.u32 %v1454, 7
          %v1456 = vsub.s32 %v1453, %v1455
          %v1457 = vrot.slane %v1443, %v1456
          %v1458 = vcombine.low %v1267, %v1271
          %v1459 = vcombine.high %v1267, %v1271
          %v1461 = vunpack.c.l.s4 1983009808
          %v1462 = vunpack.c.0.s8 %v1461
          %v1463 = vlaneseq
          %v1464 = vshrl.u32 %v1463, 7
          %v1465 = vsub.s32 %v1462, %v1464
          %v1466 = vrot.slane %v1458, %v1465
          %v1468 = vunpack.c.l.s4 1983009808
          %v1469 = vunpack.c.0.s8 %v1468
          %v1470 = vlaneseq
          %v1471 = vshrl.u32 %v1470, 7
          %v1472 = vsub.s32 %v1469, %v1471
          %v1473 = vrot.slane %v1459, %v1472
          %v1474 = vcombine.low %v1269, %v1273
          %v1475 = vcombine.high %v1269, %v1273
          %v1477 = vunpack.c.l.s4 1983009808
          %v1478 = vunpack.c.0.s8 %v1477
          %v1479 = vlaneseq
          %v1480 = vshrl.u32 %v1479, 7
          %v1481 = vsub.s32 %v1478, %v1480
          %v1482 = vrot.slane %v1474, %v1481
          %v1484 = vunpack.c.l.s4 1983009808
          %v1485 = vunpack.c.0.s8 %v1484
          %v1486 = vlaneseq
          %v1487 = vshrl.u32 %v1486, 7
          %v1488 = vsub.s32 %v1485, %v1487
          %v1489 = vrot.slane %v1475, %v1488
          %v1490 = vcombine.low %v1434, %v1450
          %v1491 = vcombine.high %v1434, %v1450
          %v1493 = vunpack.c.l.s4 1934713408
          %v1494 = vunpack.c.0.s8 %v1493
          %v1495 = vlaneseq
          %v1496 = vshrl.u32 %v1495, 7
          %v1497 = vsub.s32 %v1494, %v1496
          %v1498 = vrot.slane %v1490, %v1497
          %v1500 = vunpack.c.l.s4 1934713408
          %v1501 = vunpack.c.0.s8 %v1500
          %v1502 = vlaneseq
          %v1503 = vshrl.u32 %v1502, 7
          %v1504 = vsub.s32 %v1501, %v1503
          %v1505 = vrot.slane %v1491, %v1504
          %v1506 = vcombine.low %v1441, %v1457
          %v1507 = vcombine.high %v1441, %v1457
          %v1509 = vunpack.c.l.s4 1934713408
          %v1510 = vunpack.c.0.s8 %v1509
          %v1511 = vlaneseq
          %v1512 = vshrl.u32 %v1511, 7
          %v1513 = vsub.s32 %v1510, %v1512
          %v1514 = vrot.slane %v1506, %v1513
          %v1516 = vunpack.c.l.s4 1934713408
          %v1517 = vunpack.c.0.s8 %v1516
          %v1518 = vlaneseq
          %v1519 = vshrl.u32 %v1518, 7
          %v1520 = vsub.s32 %v1517, %v1519
          %v1521 = vrot.slane %v1507, %v1520
          %v1522 = vcombine.low %v1466, %v1482
          %v1523 = vcombine.high %v1466, %v1482
          %v1525 = vunpack.c.l.s4 1934713408
          %v1526 = vunpack.c.0.s8 %v1525
          %v1527 = vlaneseq
          %v1528 = vshrl.u32 %v1527, 7
          %v1529 = vsub.s32 %v1526, %v1528
          %v1530 = vrot.slane %v1522, %v1529
          %v1532 = vunpack.c.l.s4 1934713408
          %v1533 = vunpack.c.0.s8 %v1532
          %v1534 = vlaneseq
          %v1535 = vshrl.u32 %v1534, 7
          %v1536 = vsub.s32 %v1533, %v1535
          %v1537 = vrot.slane %v1523, %v1536
          %v1538 = vcombine.low %v1473, %v1489
          %v1539 = vcombine.high %v1473, %v1489
          %v1541 = vunpack.c.l.s4 1934713408
          %v1542 = vunpack.c.0.s8 %v1541
          %v1543 = vlaneseq
          %v1544 = vshrl.u32 %v1543, 7
          %v1545 = vsub.s32 %v1542, %v1544
          %v1546 = vrot.slane %v1538, %v1545
          %v1548 = vunpack.c.l.s4 1934713408
          %v1549 = vunpack.c.0.s8 %v1548
          %v1550 = vlaneseq
          %v1551 = vshrl.u32 %v1550, 7
          %v1552 = vsub.s32 %v1549, %v1551
          %v1553 = vrot.slane %v1539, %v1552
          %v1554 = vcombine.low %v1498, %v1530
          %v1555 = vcombine.high %v1498, %v1530
          %v1556 = vcombine.low %v1505, %v1537
          %v1557 = vcombine.high %v1505, %v1537
          %v1558 = vcombine.low %v1514, %v1546
          %v1559 = vcombine.high %v1514, %v1546
          %v1560 = vcombine.low %v1521, %v1553
          %v1561 = vcombine.high %v1521, %v1553
          %v1564 = vpack.i.b16 %v1554, %v1418
          %v1566 = vshrl.u32 %v1418, 16
          %v1567 = vshrl.u32 %v1554, 16
          %v1568 = vpack.i.b16 %v1567, %v1566
          %v1572 = vpack.i.b16 %v1555, %v1419
          %v1574 = vshrl.u32 %v1419, 16
          %v1575 = vshrl.u32 %v1555, 16
          %v1576 = vpack.i.b16 %v1575, %v1574
          %v1580 = vpack.i.b16 %v1556, %v1420
          %v1582 = vshrl.u32 %v1420, 16
          %v1583 = vshrl.u32 %v1556, 16
          %v1584 = vpack.i.b16 %v1583, %v1582
          %v1588 = vpack.i.b16 %v1557, %v1421
          %v1590 = vshrl.u32 %v1421, 16
          %v1591 = vshrl.u32 %v1557, 16
          %v1592 = vpack.i.b16 %v1591, %v1590
          %v1596 = vpack.i.b16 %v1558, %v1422
          %v1598 = vshrl.u32 %v1422, 16
          %v1599 = vshrl.u32 %v1558, 16
          %v1600 = vpack.i.b16 %v1599, %v1598
          %v1604 = vpack.i.b16 %v1559, %v1423
          %v1606 = vshrl.u32 %v1423, 16
          %v1607 = vshrl.u32 %v1559, 16
          %v1608 = vpack.i.b16 %v1607, %v1606
          %v1612 = vpack.i.b16 %v1560, %v1424
          %v1614 = vshrl.u32 %v1424, 16
          %v1615 = vshrl.u32 %v1560, 16
          %v1616 = vpack.i.b16 %v1615, %v1614
          %v1620 = vpack.i.b16 %v1561, %v1425
          %v1622 = vshrl.u32 %v1425, 16
          %v1623 = vshrl.u32 %v1561, 16
          %v1624 = vpack.i.b16 %v1623, %v1622
          %1626 = vst.msk [vmem:[#allocation3] sm:$0xff] %vm497, %v1564
          %1627 = vst.msk [vmem:[#allocation3 + $0x8] sm:$0xff] %vm497, %v1568
          %1628 = vst.msk [vmem:[#allocation3 + $0x10] sm:$0xff] %vm497, %v1572
          %1629 = vst.msk [vmem:[#allocation3 + $0x18] sm:$0xff] %vm497, %v1576
          %1630 = vst.msk [vmem:[#allocation3 + $0x20] sm:$0xff] %vm497, %v1580
          %1631 = vst.msk [vmem:[#allocation3 + $0x28] sm:$0xff] %vm497, %v1584
          %1632 = vst.msk [vmem:[#allocation3 + $0x30] sm:$0xff] %vm497, %v1588
          %1633 = vst.msk [vmem:[#allocation3 + $0x38] sm:$0xff] %vm497, %v1592
          %1634 = vst.msk [vmem:[#allocation3 + $0x40] sm:$0xff] %vm497, %v1596
          %1635 = vst.msk [vmem:[#allocation3 + $0x48] sm:$0xff] %vm497, %v1600
          %1636 = vst.msk [vmem:[#allocation3 + $0x50] sm:$0xff] %vm497, %v1604
          %1637 = vst.msk [vmem:[#allocation3 + $0x58] sm:$0xff] %vm497, %v1608
          %1638 = vst.msk [vmem:[#allocation3 + $0x60] sm:$0xff] %vm497, %v1612
          %1639 = vst.msk [vmem:[#allocation3 + $0x68] sm:$0xff] %vm497, %v1616
          %1640 = vst.msk [vmem:[#allocation3 + $0x70] sm:$0xff] %vm497, %v1620
          %1641 = vst.msk [vmem:[#allocation3 + $0x78] sm:$0xff] %vm497, %v1624
        $region84: #{tpu_custom_call.1} parent=51 // pred_fallthru
          _
        %s1642 = smul.u32 %s34, 8
        %s1643 = smul.u32 %s1642, 16
        %s1644 = scalar_lea.vmem %s363, %s1643 [#allocation6]
        %v1645 = vld [vmem:[%s1644] sm:$0xff]
        %v1646 = vld [vmem:[%s1644 + $0x8] sm:$0xff]
        %v1647 = vld [vmem:[%s1644 + $0x10] sm:$0xff]
        %v1648 = vld [vmem:[%s1644 + $0x18] sm:$0xff]
        %v1649 = vld [vmem:[%s1644 + $0x20] sm:$0xff]
        %v1650 = vld [vmem:[%s1644 + $0x28] sm:$0xff]
        %v1651 = vld [vmem:[%s1644 + $0x30] sm:$0xff]
        %v1652 = vld [vmem:[%s1644 + $0x38] sm:$0xff]
        %v1653 = vld [vmem:[%s1644 + $0x40] sm:$0xff]
        %v1654 = vld [vmem:[%s1644 + $0x48] sm:$0xff]
        %v1655 = vld [vmem:[%s1644 + $0x50] sm:$0xff]
        %v1656 = vld [vmem:[%s1644 + $0x58] sm:$0xff]
        %v1657 = vld [vmem:[%s1644 + $0x60] sm:$0xff]
        %v1658 = vld [vmem:[%s1644 + $0x68] sm:$0xff]
        %v1659 = vld [vmem:[%s1644 + $0x70] sm:$0xff]
        %v1660 = vld [vmem:[%s1644 + $0x78] sm:$0xff]
        %v1661 = vpack.c.bf16 %v1646, %v1645
        %v1662 = vpack.c.bf16 %v1648, %v1647
        %v1663 = vpack.c.bf16 %v1650, %v1649
        %v1664 = vpack.c.bf16 %v1652, %v1651
        %v1665 = vpack.c.bf16 %v1654, %v1653
        %v1666 = vpack.c.bf16 %v1656, %v1655
        %v1667 = vpack.c.bf16 %v1658, %v1657
        %v1668 = vpack.c.bf16 %v1660, %v1659
        %v1669 = vld [vmem:[#allocation9] sm:$0xf]
        %v1670 = vld [vmem:[#allocation9 + $0x4] sm:$0xf]
        %v1671 = vld [vmem:[#allocation9 + $0x8] sm:$0xf]
        %v1672 = vld [vmem:[#allocation9 + $0xc] sm:$0xf]
        %v1673 = vld [vmem:[#allocation11] sm:$0x1]
        %v1674 = vunpack.c.l.bf16 %v1673
        %v1675 = vlaneseq
        %v1676 = vshrl.u32 %v1675, 7
        %v1677 = vsub.s32 0, %v1676
        %v1678 = vrot.slane %v1674, %v1677
        %v1683 = vunpack.c.l.b16 %v1669
        %v1684 = vunpack.c.l.b16 %v1670
        %v1685 = vunpack.c.l.b16 %v1671
        %v1686 = vunpack.c.l.b16 %v1672
        %v1687 = vpack.c.b16 %v1684, %v1683
        %v1688 = vpack.c.b16 %v1686, %v1685
        %vm1691 = vcmask 261120
        %v1693 = vsel %vm1691, %v1661, 0
        %v1696 = vsel %vm1691, %v1662, 0
        %v1699 = vsel %vm1691, %v1663, 0
        %v1702 = vsel %vm1691, %v1664, 0
        %v1705 = vsel %vm1691, %v1665, 0
        %v1708 = vsel %vm1691, %v1666, 0
        %v1711 = vsel %vm1691, %v1667, 0
        %v1714 = vsel %vm1691, %v1668, 0
        %1716 = vmatprep.subr.bf16.mxu0 0
        %1717 = vmatpush1.bf16.msra.mxu0 %v1687
        %1718 = vmatprep.subr.bf16.mxu0 0
        %1719 = vmatpush1.bf16.msra.mxu0 %v1688
        %1720 = vmatprep.subr.bf16.mxu0 0
        %1721 = vmatpush1.bf16.msra.mxu0 0
        %1722 = vmatprep.subr.bf16.mxu0 0
        %1723 = vmatpush1.bf16.msra.mxu0 0
        %1724 = vmatprep.subr.bf16.mxu0 0
        %1725 = vmatpush1.bf16.msra.mxu0 0
        %1726 = vmatprep.subr.bf16.mxu0 0
        %1727 = vmatpush1.bf16.msra.mxu0 0
        %1728 = vmatprep.subr.bf16.mxu0 0
        %1729 = vmatpush1.bf16.msra.mxu0 0
        %1730 = vmatprep.subr.bf16.mxu0 0
        %1731 = vmatpush1.bf16.msra.mxu0 0
        %1732 = vmatprep.subr.bf16.mxu0 0
        %1733 = vmatpush1.bf16.msra.mxu0 0
        %1734 = vmatprep.subr.bf16.mxu0 0
        %1735 = vmatpush1.bf16.msra.mxu0 0
        %1736 = vmatprep.subr.bf16.mxu0 0
        %1737 = vmatpush1.bf16.msra.mxu0 0
        %1738 = vmatprep.subr.bf16.mxu0 0
        %1739 = vmatpush1.bf16.msra.mxu0 0
        %1740 = vmatprep.subr.bf16.mxu0 0
        %1741 = vmatpush1.bf16.msra.mxu0 0
        %1742 = vmatprep.subr.bf16.mxu0 0
        %1743 = vmatpush1.bf16.msra.mxu0 0
        %1744 = vmatprep.subr.bf16.mxu0 0
        %1745 = vmatpush1.bf16.msra.mxu0 0
        %1746 = vmatprep.subr.bf16.mxu0 0
        %1747 = vmatpush1.bf16.msra.mxu0 0
        %1748 = vmatprep.mubr.bf16.mxu0 0
        %1749 = vmatmul.mubr.bf16.gmra.mrb[0].mxu0 %v1693
        %v1750 = vpop.f32.mrb[0].mxu0
        %v1751 = vadd.f32 %v1678, %v1750
        %v1752 = vpop.f32.mrb[0].mxu0
        %v1753 = vpop.f32.mrb[0].mxu0
        %v1754 = vadd.f32 %v1678, %v1753
        %v1755 = vpop.f32.mrb[0].mxu0
        %1756 = vmatprep.mubr.bf16.mxu0 0
        %1757 = vmatmul.mubr.bf16.gmra.mrb[0].mxu0 %v1696
        %v1758 = vpop.f32.mrb[0].mxu0
        %v1759 = vadd.f32 %v1678, %v1758
        %v1760 = vpop.f32.mrb[0].mxu0
        %v1761 = vpop.f32.mrb[0].mxu0
        %v1762 = vadd.f32 %v1678, %v1761
        %v1763 = vpop.f32.mrb[0].mxu0
        %1764 = vmatprep.mubr.bf16.mxu0 0
        %1765 = vmatmul.mubr.bf16.gmra.mrb[0].mxu0 %v1699
        %v1766 = vpop.f32.mrb[0].mxu0
        %v1767 = vadd.f32 %v1678, %v1766
        %v1768 = vpop.f32.mrb[0].mxu0
        %v1769 = vpop.f32.mrb[0].mxu0
        %v1770 = vadd.f32 %v1678, %v1769
        %v1771 = vpop.f32.mrb[0].mxu0
        %1772 = vmatprep.mubr.bf16.mxu0 0
        %1773 = vmatmul.mubr.bf16.gmra.mrb[0].mxu0 %v1702
        %v1774 = vpop.f32.mrb[0].mxu0
        %v1775 = vadd.f32 %v1678, %v1774
        %v1776 = vpop.f32.mrb[0].mxu0
        %v1777 = vpop.f32.mrb[0].mxu0
        %v1778 = vadd.f32 %v1678, %v1777
        %v1779 = vpop.f32.mrb[0].mxu0
        %1780 = vmatprep.mubr.bf16.mxu0 0
        %1781 = vmatmul.mubr.bf16.gmra.mrb[0].mxu0 %v1705
        %v1782 = vpop.f32.mrb[0].mxu0
        %v1783 = vadd.f32 %v1678, %v1782
        %v1784 = vpop.f32.mrb[0].mxu0
        %v1785 = vpop.f32.mrb[0].mxu0
        %v1786 = vadd.f32 %v1678, %v1785
        %v1787 = vpop.f32.mrb[0].mxu0
        %1788 = vmatprep.mubr.bf16.mxu0 0
        %1789 = vmatmul.mubr.bf16.gmra.mrb[0].mxu0 %v1708
        %v1790 = vpop.f32.mrb[0].mxu0
        %v1791 = vadd.f32 %v1678, %v1790
        %v1792 = vpop.f32.mrb[0].mxu0
        %v1793 = vpop.f32.mrb[0].mxu0
        %v1794 = vadd.f32 %v1678, %v1793
        %v1795 = vpop.f32.mrb[0].mxu0
        %1796 = vmatprep.mubr.bf16.mxu0 0
        %1797 = vmatmul.mubr.bf16.gmra.mrb[0].mxu0 %v1711
        %v1798 = vpop.f32.mrb[0].mxu0
        %v1799 = vadd.f32 %v1678, %v1798
        %v1800 = vpop.f32.mrb[0].mxu0
        %v1801 = vpop.f32.mrb[0].mxu0
        %v1802 = vadd.f32 %v1678, %v1801
        %v1803 = vpop.f32.mrb[0].mxu0
        %1804 = vmatprep.mubr.bf16.mxu0 0
        %1805 = vmatmul.mubr.bf16.gmra.mrb[0].mxu0 %v1714
        %v1806 = vpop.f32.mrb[0].mxu0
        %v1807 = vadd.f32 %v1678, %v1806
        %v1808 = vpop.f32.mrb[0].mxu0
        %v1809 = vpop.f32.mrb[0].mxu0
        %v1810 = vadd.f32 %v1678, %v1809
        %v1811 = vpop.f32.mrb[0].mxu0
        %1812 = vdwg.mxu0
        %v1813 = vpack.c.bf16 %v1754, %v1751
        %v1814 = vpack.c.bf16 %v1762, %v1759
        %v1815 = vpack.c.bf16 %v1770, %v1767
        %v1816 = vpack.c.bf16 %v1778, %v1775
        %v1817 = vpack.c.bf16 %v1786, %v1783
        %v1818 = vpack.c.bf16 %v1794, %v1791
        %v1819 = vpack.c.bf16 %v1802, %v1799
        %v1820 = vpack.c.bf16 %v1810, %v1807
        %v1821 = vld [vmem:[#allocation12] sm:$0xf]
        %v1822 = vld [vmem:[#allocation12 + $0x4] sm:$0xf]
        %v1823 = vld [vmem:[#allocation12 + $0x8] sm:$0xf]
        %v1824 = vld [vmem:[#allocation12 + $0xc] sm:$0xf]
        %v1825 = vld [vmem:[#allocation14] sm:$0x1]
        %v1826 = vunpack.c.l.bf16 %v1825
        %v1827 = vlaneseq
        %v1828 = vshrl.u32 %v1827, 7
        %v1829 = vsub.s32 0, %v1828
        %v1830 = vrot.slane %v1826, %v1829
        %v1835 = vunpack.c.l.b16 %v1821
        %v1836 = vunpack.c.l.b16 %v1822
        %v1837 = vunpack.c.l.b16 %v1823
        %v1838 = vunpack.c.l.b16 %v1824
        %v1839 = vpack.c.b16 %v1836, %v1835
        %v1840 = vpack.c.b16 %v1838, %v1837
        %1843 = vmatprep.subr.bf16.mxu0 0
        %1844 = vmatpush1.bf16.msra.mxu0 %v1839
        %1845 = vmatprep.subr.bf16.mxu0 0
        %1846 = vmatpush1.bf16.msra.mxu0 %v1840
        %1847 = vmatprep.subr.bf16.mxu0 0
        %1848 = vmatpush1.bf16.msra.mxu0 0
        %1849 = vmatprep.subr.bf16.mxu0 0
        %1850 = vmatpush1.bf16.msra.mxu0 0
        %1851 = vmatprep.subr.bf16.mxu0 0
        %1852 = vmatpush1.bf16.msra.mxu0 0
        %1853 = vmatprep.subr.bf16.mxu0 0
        %1854 = vmatpush1.bf16.msra.mxu0 0
        %1855 = vmatprep.subr.bf16.mxu0 0
        %1856 = vmatpush1.bf16.msra.mxu0 0
        %1857 = vmatprep.subr.bf16.mxu0 0
        %1858 = vmatpush1.bf16.msra.mxu0 0
        %1859 = vmatprep.subr.bf16.mxu0 0
        %1860 = vmatpush1.bf16.msra.mxu0 0
        %1861 = vmatprep.subr.bf16.mxu0 0
        %1862 = vmatpush1.bf16.msra.mxu0 0
        %1863 = vmatprep.subr.bf16.mxu0 0
        %1864 = vmatpush1.bf16.msra.mxu0 0
        %1865 = vmatprep.subr.bf16.mxu0 0
        %1866 = vmatpush1.bf16.msra.mxu0 0
        %1867 = vmatprep.subr.bf16.mxu0 0
        %1868 = vmatpush1.bf16.msra.mxu0 0
        %1869 = vmatprep.subr.bf16.mxu0 0
        %1870 = vmatpush1.bf16.msra.mxu0 0
        %1871 = vmatprep.subr.bf16.mxu0 0
        %1872 = vmatpush1.bf16.msra.mxu0 0
        %1873 = vmatprep.subr.bf16.mxu0 0
        %1874 = vmatpush1.bf16.msra.mxu0 0
        %1875 = vmatprep.mubr.bf16.mxu0 0
        %1876 = vmatmul.mubr.bf16.gmra.mrb[0].mxu0 %v1693
        %v1877 = vpop.f32.mrb[0].mxu0
        %v1878 = vadd.f32 %v1830, %v1877
        %v1879 = vpop.f32.mrb[0].mxu0
        %v1880 = vpop.f32.mrb[0].mxu0
        %v1881 = vadd.f32 %v1830, %v1880
        %v1882 = vpop.f32.mrb[0].mxu0
        %1883 = vmatprep.mubr.bf16.mxu0 0
        %1884 = vmatmul.mubr.bf16.gmra.mrb[0].mxu0 %v1696
        %v1885 = vpop.f32.mrb[0].mxu0
        %v1886 = vadd.f32 %v1830, %v1885
        %v1887 = vpop.f32.mrb[0].mxu0
        %v1888 = vpop.f32.mrb[0].mxu0
        %v1889 = vadd.f32 %v1830, %v1888
        %v1890 = vpop.f32.mrb[0].mxu0
        %1891 = vmatprep.mubr.bf16.mxu0 0
        %1892 = vmatmul.mubr.bf16.gmra.mrb[0].mxu0 %v1699
        %v1893 = vpop.f32.mrb[0].mxu0
        %v1894 = vadd.f32 %v1830, %v1893
        %v1895 = vpop.f32.mrb[0].mxu0
        %v1896 = vpop.f32.mrb[0].mxu0
        %v1897 = vadd.f32 %v1830, %v1896
        %v1898 = vpop.f32.mrb[0].mxu0
        %1899 = vmatprep.mubr.bf16.mxu0 0
        %1900 = vmatmul.mubr.bf16.gmra.mrb[0].mxu0 %v1702
        %v1901 = vpop.f32.mrb[0].mxu0
        %v1902 = vadd.f32 %v1830, %v1901
        %v1903 = vpop.f32.mrb[0].mxu0
        %v1904 = vpop.f32.mrb[0].mxu0
        %v1905 = vadd.f32 %v1830, %v1904
        %v1906 = vpop.f32.mrb[0].mxu0
        %1907 = vmatprep.mubr.bf16.mxu0 0
        %1908 = vmatmul.mubr.bf16.gmra.mrb[0].mxu0 %v1705
        %v1909 = vpop.f32.mrb[0].mxu0
        %v1910 = vadd.f32 %v1830, %v1909
        %v1911 = vpop.f32.mrb[0].mxu0
        %v1912 = vpop.f32.mrb[0].mxu0
        %v1913 = vadd.f32 %v1830, %v1912
        %v1914 = vpop.f32.mrb[0].mxu0
        %1915 = vmatprep.mubr.bf16.mxu0 0
        %1916 = vmatmul.mubr.bf16.gmra.mrb[0].mxu0 %v1708
        %v1917 = vpop.f32.mrb[0].mxu0
        %v1918 = vadd.f32 %v1830, %v1917
        %v1919 = vpop.f32.mrb[0].mxu0
        %v1920 = vpop.f32.mrb[0].mxu0
        %v1921 = vadd.f32 %v1830, %v1920
        %v1922 = vpop.f32.mrb[0].mxu0
        %1923 = vmatprep.mubr.bf16.mxu0 0
        %1924 = vmatmul.mubr.bf16.gmra.mrb[0].mxu0 %v1711
        %v1925 = vpop.f32.mrb[0].mxu0
        %v1926 = vadd.f32 %v1830, %v1925
        %v1927 = vpop.f32.mrb[0].mxu0
        %v1928 = vpop.f32.mrb[0].mxu0
        %v1929 = vadd.f32 %v1830, %v1928
        %v1930 = vpop.f32.mrb[0].mxu0
        %1931 = vmatprep.mubr.bf16.mxu0 0
        %1932 = vmatmul.mubr.bf16.gmra.mrb[0].mxu0 %v1714
        %v1933 = vpop.f32.mrb[0].mxu0
        %v1934 = vadd.f32 %v1830, %v1933
        %v1935 = vpop.f32.mrb[0].mxu0
        %v1936 = vpop.f32.mrb[0].mxu0
        %v1937 = vadd.f32 %v1830, %v1936
        %v1938 = vpop.f32.mrb[0].mxu0
        %1939 = vdwg.mxu0
        %v1940 = vpack.c.bf16 %v1881, %v1878
        %v1941 = vpack.c.bf16 %v1889, %v1886
        %v1942 = vpack.c.bf16 %v1897, %v1894
        %v1943 = vpack.c.bf16 %v1905, %v1902
        %v1944 = vpack.c.bf16 %v1913, %v1910
        %v1945 = vpack.c.bf16 %v1921, %v1918
        %v1946 = vpack.c.bf16 %v1929, %v1926
        %v1947 = vpack.c.bf16 %v1937, %v1934
        %s1948 = smul.addr %s1642, 8
        %s1949 = scalar_lea.vmem [#allocation2], %s1948
        %v1950 = vld [vmem:[%s1949] sm:$0xff]
        %v1951 = vld [vmem:[%s1949 + $0x8] sm:$0xff]
        %v1952 = vld [vmem:[%s1949 + $0x10] sm:$0xff]
        %v1953 = vld [vmem:[%s1949 + $0x18] sm:$0xff]
        %v1954 = vld [vmem:[%s1949 + $0x20] sm:$0xff]
        %v1955 = vld [vmem:[%s1949 + $0x28] sm:$0xff]
        %v1956 = vld [vmem:[%s1949 + $0x30] sm:$0xff]
        %v1957 = vld [vmem:[%s1949 + $0x38] sm:$0xff]
        %v1960 = vpack.i.b16 %v1814, %v1813
        %v1962 = vshrl.u32 %v1813, 16
        %v1963 = vshrl.u32 %v1814, 16
        %v1964 = vpack.i.b16 %v1963, %v1962
        %v1968 = vpack.i.b16 %v1816, %v1815
        %v1970 = vshrl.u32 %v1815, 16
        %v1971 = vshrl.u32 %v1816, 16
        %v1972 = vpack.i.b16 %v1971, %v1970
        %v1976 = vpack.i.b16 %v1818, %v1817
        %v1978 = vshrl.u32 %v1817, 16
        %v1979 = vshrl.u32 %v1818, 16
        %v1980 = vpack.i.b16 %v1979, %v1978
        %v1984 = vpack.i.b16 %v1820, %v1819
        %v1986 = vshrl.u32 %v1819, 16
        %v1987 = vshrl.u32 %v1820, 16
        %v1988 = vpack.i.b16 %v1987, %v1986
        %v1990 = vcombine.low %v1960, %v1976
        %v1991 = vcombine.high %v1960, %v1976
        %v1993 = vunpack.c.l.s4 1983009808
        %v1994 = vunpack.c.0.s8 %v1993
        %v1995 = vlaneseq
        %v1996 = vshrl.u32 %v1995, 7
        %v1997 = vsub.s32 %v1994, %v1996
        %v1998 = vrot.slane %v1990, %v1997
        %v2000 = vunpack.c.l.s4 1983009808
        %v2001 = vunpack.c.0.s8 %v2000
        %v2002 = vlaneseq
        %v2003 = vshrl.u32 %v2002, 7
        %v2004 = vsub.s32 %v2001, %v2003
        %v2005 = vrot.slane %v1991, %v2004
        %v2006 = vcombine.low %v1968, %v1984
        %v2007 = vcombine.high %v1968, %v1984
        %v2009 = vunpack.c.l.s4 1983009808
        %v2010 = vunpack.c.0.s8 %v2009
        %v2011 = vlaneseq
        %v2012 = vshrl.u32 %v2011, 7
        %v2013 = vsub.s32 %v2010, %v2012
        %v2014 = vrot.slane %v2006, %v2013
        %v2016 = vunpack.c.l.s4 1983009808
        %v2017 = vunpack.c.0.s8 %v2016
        %v2018 = vlaneseq
        %v2019 = vshrl.u32 %v2018, 7
        %v2020 = vsub.s32 %v2017, %v2019
        %v2021 = vrot.slane %v2007, %v2020
        %v2022 = vcombine.low %v1998, %v2014
        %v2023 = vcombine.high %v1998, %v2014
        %v2025 = vunpack.c.l.s4 1934713408
        %v2026 = vunpack.c.0.s8 %v2025
        %v2027 = vlaneseq
        %v2028 = vshrl.u32 %v2027, 7
        %v2029 = vsub.s32 %v2026, %v2028
        %v2030 = vrot.slane %v2022, %v2029
        %v2032 = vunpack.c.l.s4 1934713408
        %v2033 = vunpack.c.0.s8 %v2032
        %v2034 = vlaneseq
        %v2035 = vshrl.u32 %v2034, 7
        %v2036 = vsub.s32 %v2033, %v2035
        %v2037 = vrot.slane %v2023, %v2036
        %v2038 = vcombine.low %v2005, %v2021
        %v2039 = vcombine.high %v2005, %v2021
        %v2041 = vunpack.c.l.s4 1934713408
        %v2042 = vunpack.c.0.s8 %v2041
        %v2043 = vlaneseq
        %v2044 = vshrl.u32 %v2043, 7
        %v2045 = vsub.s32 %v2042, %v2044
        %v2046 = vrot.slane %v2038, %v2045
        %v2048 = vunpack.c.l.s4 1934713408
        %v2049 = vunpack.c.0.s8 %v2048
        %v2050 = vlaneseq
        %v2051 = vshrl.u32 %v2050, 7
        %v2052 = vsub.s32 %v2049, %v2051
        %v2053 = vrot.slane %v2039, %v2052
        %v2054 = vcombine.high %v2030, 0
        %v2055 = vcombine.high %v2037, 0
        %v2056 = vcombine.high %v2046, 0
        %v2057 = vcombine.high %v2053, 0
        %v2058 = vcombine.low %v1964, %v1980
        %v2059 = vcombine.high %v1964, %v1980
        %v2061 = vunpack.c.l.s4 1983009808
        %v2062 = vunpack.c.0.s8 %v2061
        %v2063 = vlaneseq
        %v2064 = vshrl.u32 %v2063, 7
        %v2065 = vsub.s32 %v2062, %v2064
        %v2066 = vrot.slane %v2058, %v2065
        %v2068 = vunpack.c.l.s4 1983009808
        %v2069 = vunpack.c.0.s8 %v2068
        %v2070 = vlaneseq
        %v2071 = vshrl.u32 %v2070, 7
        %v2072 = vsub.s32 %v2069, %v2071
        %v2073 = vrot.slane %v2059, %v2072
        %v2074 = vcombine.low %v1972, %v1988
        %v2075 = vcombine.high %v1972, %v1988
        %v2077 = vunpack.c.l.s4 1983009808
        %v2078 = vunpack.c.0.s8 %v2077
        %v2079 = vlaneseq
        %v2080 = vshrl.u32 %v2079, 7
        %v2081 = vsub.s32 %v2078, %v2080
        %v2082 = vrot.slane %v2074, %v2081
        %v2084 = vunpack.c.l.s4 1983009808
        %v2085 = vunpack.c.0.s8 %v2084
        %v2086 = vlaneseq
        %v2087 = vshrl.u32 %v2086, 7
        %v2088 = vsub.s32 %v2085, %v2087
        %v2089 = vrot.slane %v2075, %v2088
        %v2090 = vcombine.low %v2066, %v2082
        %v2091 = vcombine.high %v2066, %v2082
        %v2093 = vunpack.c.l.s4 1934713408
        %v2094 = vunpack.c.0.s8 %v2093
        %v2095 = vlaneseq
        %v2096 = vshrl.u32 %v2095, 7
        %v2097 = vsub.s32 %v2094, %v2096
        %v2098 = vrot.slane %v2090, %v2097
        %v2100 = vunpack.c.l.s4 1934713408
        %v2101 = vunpack.c.0.s8 %v2100
        %v2102 = vlaneseq
        %v2103 = vshrl.u32 %v2102, 7
        %v2104 = vsub.s32 %v2101, %v2103
        %v2105 = vrot.slane %v2091, %v2104
        %v2106 = vcombine.low %v2073, %v2089
        %v2107 = vcombine.high %v2073, %v2089
        %v2109 = vunpack.c.l.s4 1934713408
        %v2110 = vunpack.c.0.s8 %v2109
        %v2111 = vlaneseq
        %v2112 = vshrl.u32 %v2111, 7
        %v2113 = vsub.s32 %v2110, %v2112
        %v2114 = vrot.slane %v2106, %v2113
        %v2116 = vunpack.c.l.s4 1934713408
        %v2117 = vunpack.c.0.s8 %v2116
        %v2118 = vlaneseq
        %v2119 = vshrl.u32 %v2118, 7
        %v2120 = vsub.s32 %v2117, %v2119
        %v2121 = vrot.slane %v2107, %v2120
        %v2122 = vcombine.high %v2098, 0
        %v2123 = vcombine.high %v2105, 0
        %v2124 = vcombine.high %v2114, 0
        %v2125 = vcombine.high %v2121, 0
        %v2126 = vld [vmem:[#allocation4] sm:$0xff]
        %v2127 = vld [vmem:[#allocation4 + $0x8] sm:$0xff]
        %v2128 = vld [vmem:[#allocation4 + $0x10] sm:$0xff]
        %v2129 = vld [vmem:[#allocation4 + $0x18] sm:$0xff]
        %v2130 = vld [vmem:[#allocation4 + $0x20] sm:$0xff]
        %v2131 = vld [vmem:[#allocation4 + $0x28] sm:$0xff]
        %v2132 = vld [vmem:[#allocation4 + $0x30] sm:$0xff]
        %v2133 = vld [vmem:[#allocation4 + $0x38] sm:$0xff]
        %v2134 = vld [vmem:[#allocation4 + $0x40] sm:$0xff]
        %v2135 = vld [vmem:[#allocation4 + $0x48] sm:$0xff]
        %v2136 = vld [vmem:[#allocation4 + $0x50] sm:$0xff]
        %v2137 = vld [vmem:[#allocation4 + $0x58] sm:$0xff]
        %v2138 = vld [vmem:[#allocation4 + $0x60] sm:$0xff]
        %v2139 = vld [vmem:[#allocation4 + $0x68] sm:$0xff]
        %v2140 = vld [vmem:[#allocation4 + $0x70] sm:$0xff]
        %v2141 = vld [vmem:[#allocation4 + $0x78] sm:$0xff]
        %2142 = vmatprep.subr.bf16.mxu0 0
        %2143 = vmatpush1.bf16.xpose.msra.mxu0 %v2126
        %2144 = vmatprep.subr.bf16.mxu0 0
        %2145 = vmatpush1.bf16.xpose.msra.mxu0 0
        %2146 = vmatprep.subr.bf16.mxu0 0
        %2147 = vmatpush1.bf16.xpose.msra.mxu0 0
        %2148 = vmatprep.subr.bf16.mxu0 0
        %2149 = vmatpush1.bf16.xpose.msra.mxu0 0
        %2150 = vmatprep.subr.bf16.mxu0 0
        %2151 = vmatpush1.bf16.xpose.msra.mxu0 0
        %2152 = vmatprep.subr.bf16.mxu0 0
        %2153 = vmatpush1.bf16.xpose.msra.mxu0 0
        %2154 = vmatprep.subr.bf16.mxu0 0
        %2155 = vmatpush1.bf16.xpose.msra.mxu0 0
        %2156 = vmatprep.subr.bf16.mxu0 0
        %2157 = vmatpush1.bf16.xpose.msra.mxu0 0
        %2158 = vmatprep.subr.bf16.mxu0 0
        %2159 = vmatpush1.bf16.xpose.msra.mxu0 0
        %2160 = vmatprep.subr.bf16.mxu0 0
        %2161 = vmatpush1.bf16.xpose.msra.mxu0 0
        %2162 = vmatprep.subr.bf16.mxu0 0
        %2163 = vmatpush1.bf16.xpose.msra.mxu0 0
        %2164 = vmatprep.subr.bf16.mxu0 0
        %2165 = vmatpush1.bf16.xpose.msra.mxu0 0
        %2166 = vmatprep.subr.bf16.mxu0 0
        %2167 = vmatpush1.bf16.xpose.msra.mxu0 0
        %2168 = vmatprep.subr.bf16.mxu0 0
        %2169 = vmatpush1.bf16.xpose.msra.mxu0 0
        %2170 = vmatprep.subr.bf16.mxu0 0
        %2171 = vmatpush1.bf16.xpose.msra.mxu0 0
        %2172 = vmatprep.subr.bf16.mxu0 0
        %2173 = vmatpush1.bf16.xpose.msra.mxu0 0
        %2174 = vmatprep.mubr.bf16.mxu0 0
        %2175 = vmatmul.mubr.bf16.gmra.mrb[0].mxu0 %v2030
        %v2176 = vpop.f32.mrb[0].mxu0
        %v2177 = vadd.f32 0.0, %v2176
        %v2178 = vpop.f32.mrb[0].mxu0
        %v2179 = vpop.f32.mrb[0].mxu0
        %v2180 = vpop.f32.mrb[0].mxu0
        %2181 = vdwg.mxu0
        %2182 = vmatprep.subr.bf16.mxu0 0
        %2183 = vmatpush1.bf16.xpose.msra.mxu0 %v2127
        %2184 = vmatprep.subr.bf16.mxu0 0
        %2185 = vmatpush1.bf16.xpose.msra.mxu0 0
        %2186 = vmatprep.subr.bf16.mxu0 0
        %2187 = vmatpush1.bf16.xpose.msra.mxu0 0
        %2188 = vmatprep.subr.bf16.mxu0 0
        %2189 = vmatpush1.bf16.xpose.msra.mxu0 0
        %2190 = vmatprep.subr.bf16.mxu0 0
        %2191 = vmatpush1.bf16.xpose.msra.mxu0 0
        %2192 = vmatprep.subr.bf16.mxu0 0
        %2193 = vmatpush1.bf16.xpose.msra.mxu0 0
        %2194 = vmatprep.subr.bf16.mxu0 0
        %2195 = vmatpush1.bf16.xpose.msra.mxu0 0
        %2196 = vmatprep.subr.bf16.mxu0 0
        %2197 = vmatpush1.bf16.xpose.msra.mxu0 0
        %2198 = vmatprep.subr.bf16.mxu0 0
        %2199 = vmatpush1.bf16.xpose.msra.mxu0 0
        %2200 = vmatprep.subr.bf16.mxu0 0
        %2201 = vmatpush1.bf16.xpose.msra.mxu0 0
        %2202 = vmatprep.subr.bf16.mxu0 0
        %2203 = vmatpush1.bf16.xpose.msra.mxu0 0
        %2204 = vmatprep.subr.bf16.mxu0 0
        %2205 = vmatpush1.bf16.xpose.msra.mxu0 0
        %2206 = vmatprep.subr.bf16.mxu0 0
        %2207 = vmatpush1.bf16.xpose.msra.mxu0 0
        %2208 = vmatprep.subr.bf16.mxu0 0
        %2209 = vmatpush1.bf16.xpose.msra.mxu0 0
        %2210 = vmatprep.subr.bf16.mxu0 0
        %2211 = vmatpush1.bf16.xpose.msra.mxu0 0
        %2212 = vmatprep.subr.bf16.mxu0 0
        %2213 = vmatpush1.bf16.xpose.msra.mxu0 0
        %2214 = vmatprep.mubr.bf16.mxu0 0
        %2215 = vmatmul.mubr.bf16.gmra.mrb[0].mxu0 %v2098
        %v2216 = vpop.f32.mrb[0].mxu0
        %v2217 = vadd.f32 0.0, %v2216
        %v2218 = vpop.f32.mrb[0].mxu0
        %v2219 = vpop.f32.mrb[0].mxu0
        %v2220 = vpop.f32.mrb[0].mxu0
        %2221 = vdwg.mxu0
        %2222 = vmatprep.subr.bf16.mxu0 0
        %2223 = vmatpush1.bf16.xpose.msra.mxu0 %v2128
        %2224 = vmatprep.subr.bf16.mxu0 0
        %2225 = vmatpush1.bf16.xpose.msra.mxu0 0
        %2226 = vmatprep.subr.bf16.mxu0 0
        %2227 = vmatpush1.bf16.xpose.msra.mxu0 0
        %2228 = vmatprep.subr.bf16.mxu0 0
        %2229 = vmatpush1.bf16.xpose.msra.mxu0 0
        %2230 = vmatprep.subr.bf16.mxu0 0
        %2231 = vmatpush1.bf16.xpose.msra.mxu0 0
        %2232 = vmatprep.subr.bf16.mxu0 0
        %2233 = vmatpush1.bf16.xpose.msra.mxu0 0
        %2234 = vmatprep.subr.bf16.mxu0 0
        %2235 = vmatpush1.bf16.xpose.msra.mxu0 0
        %2236 = vmatprep.subr.bf16.mxu0 0
        %2237 = vmatpush1.bf16.xpose.msra.mxu0 0
        %2238 = vmatprep.subr.bf16.mxu0 0
        %2239 = vmatpush1.bf16.xpose.msra.mxu0 0
        %2240 = vmatprep.subr.bf16.mxu0 0
        %2241 = vmatpush1.bf16.xpose.msra.mxu0 0
        %2242 = vmatprep.subr.bf16.mxu0 0
        %2243 = vmatpush1.bf16.xpose.msra.mxu0 0
        %2244 = vmatprep.subr.bf16.mxu0 0
        %2245 = vmatpush1.bf16.xpose.msra.mxu0 0
        %2246 = vmatprep.subr.bf16.mxu0 0
        %2247 = vmatpush1.bf16.xpose.msra.mxu0 0
        %2248 = vmatprep.subr.bf16.mxu0 0
        %2249 = vmatpush1.bf16.xpose.msra.mxu0 0
        %2250 = vmatprep.subr.bf16.mxu0 0
        %2251 = vmatpush1.bf16.xpose.msra.mxu0 0
        %2252 = vmatprep.subr.bf16.mxu0 0
        %2253 = vmatpush1.bf16.xpose.msra.mxu0 0
        %2254 = vmatprep.mubr.bf16.mxu0 0
        %2255 = vmatmul.mubr.bf16.gmra.mrb[0].mxu0 %v2054
        %v2256 = vpop.f32.mrb[0].mxu0
        %v2257 = vadd.f32 0.0, %v2256
        %v2258 = vpop.f32.mrb[0].mxu0
        %v2259 = vpop.f32.mrb[0].mxu0
        %v2260 = vpop.f32.mrb[0].mxu0
        %2261 = vdwg.mxu0
        %2262 = vmatprep.subr.bf16.mxu0 0
        %2263 = vmatpush1.bf16.xpose.msra.mxu0 %v2129
        %2264 = vmatprep.subr.bf16.mxu0 0
        %2265 = vmatpush1.bf16.xpose.msra.mxu0 0
        %2266 = vmatprep.subr.bf16.mxu0 0
        %2267 = vmatpush1.bf16.xpose.msra.mxu0 0
        %2268 = vmatprep.subr.bf16.mxu0 0
        %2269 = vmatpush1.bf16.xpose.msra.mxu0 0
        %2270 = vmatprep.subr.bf16.mxu0 0
        %2271 = vmatpush1.bf16.xpose.msra.mxu0 0
        %2272 = vmatprep.subr.bf16.mxu0 0
        %2273 = vmatpush1.bf16.xpose.msra.mxu0 0
        %2274 = vmatprep.subr.bf16.mxu0 0
        %2275 = vmatpush1.bf16.xpose.msra.mxu0 0
        %2276 = vmatprep.subr.bf16.mxu0 0
        %2277 = vmatpush1.bf16.xpose.msra.mxu0 0
        %2278 = vmatprep.subr.bf16.mxu0 0
        %2279 = vmatpush1.bf16.xpose.msra.mxu0 0
        %2280 = vmatprep.subr.bf16.mxu0 0
        %2281 = vmatpush1.bf16.xpose.msra.mxu0 0
        %2282 = vmatprep.subr.bf16.mxu0 0
        %2283 = vmatpush1.bf16.xpose.msra.mxu0 0
        %2284 = vmatprep.subr.bf16.mxu0 0
        %2285 = vmatpush1.bf16.xpose.msra.mxu0 0
        %2286 = vmatprep.subr.bf16.mxu0 0
        %2287 = vmatpush1.bf16.xpose.msra.mxu0 0
        %2288 = vmatprep.subr.bf16.mxu0 0
        %2289 = vmatpush1.bf16.xpose.msra.mxu0 0
        %2290 = vmatprep.subr.bf16.mxu0 0
        %2291 = vmatpush1.bf16.xpose.msra.mxu0 0
        %2292 = vmatprep.subr.bf16.mxu0 0
        %2293 = vmatpush1.bf16.xpose.msra.mxu0 0
        %2294 = vmatprep.mubr.bf16.mxu0 0
        %2295 = vmatmul.mubr.bf16.gmra.mrb[0].mxu0 %v2122
        %v2296 = vpop.f32.mrb[0].mxu0
        %v2297 = vadd.f32 0.0, %v2296
        %v2298 = vpop.f32.mrb[0].mxu0
        %v2299 = vpop.f32.mrb[0].mxu0
        %v2300 = vpop.f32.mrb[0].mxu0
        %2301 = vdwg.mxu0
        %2302 = vmatprep.subr.bf16.mxu0 0
        %2303 = vmatpush1.bf16.xpose.msra.mxu0 %v2130
        %2304 = vmatprep.subr.bf16.mxu0 0
        %2305 = vmatpush1.bf16.xpose.msra.mxu0 0
        %2306 = vmatprep.subr.bf16.mxu0 0
        %2307 = vmatpush1.bf16.xpose.msra.mxu0 0
        %2308 = vmatprep.subr.bf16.mxu0 0
        %2309 = vmatpush1.bf16.xpose.msra.mxu0 0
        %2310 = vmatprep.subr.bf16.mxu0 0
        %2311 = vmatpush1.bf16.xpose.msra.mxu0 0
        %2312 = vmatprep.subr.bf16.mxu0 0
        %2313 = vmatpush1.bf16.xpose.msra.mxu0 0
        %2314 = vmatprep.subr.bf16.mxu0 0
        %2315 = vmatpush1.bf16.xpose.msra.mxu0 0
        %2316 = vmatprep.subr.bf16.mxu0 0
        %2317 = vmatpush1.bf16.xpose.msra.mxu0 0
        %2318 = vmatprep.subr.bf16.mxu0 0
        %2319 = vmatpush1.bf16.xpose.msra.mxu0 0
        %2320 = vmatprep.subr.bf16.mxu0 0
        %2321 = vmatpush1.bf16.xpose.msra.mxu0 0
        %2322 = vmatprep.subr.bf16.mxu0 0
        %2323 = vmatpush1.bf16.xpose.msra.mxu0 0
        %2324 = vmatprep.subr.bf16.mxu0 0
        %2325 = vmatpush1.bf16.xpose.msra.mxu0 0
        %2326 = vmatprep.subr.bf16.mxu0 0
        %2327 = vmatpush1.bf16.xpose.msra.mxu0 0
        %2328 = vmatprep.subr.bf16.mxu0 0
        %2329 = vmatpush1.bf16.xpose.msra.mxu0 0
        %2330 = vmatprep.subr.bf16.mxu0 0
        %2331 = vmatpush1.bf16.xpose.msra.mxu0 0
        %2332 = vmatprep.subr.bf16.mxu0 0
        %2333 = vmatpush1.bf16.xpose.msra.mxu0 0
        %2334 = vmatprep.mubr.bf16.mxu0 0
        %2335 = vmatmul.mubr.bf16.gmra.mrb[0].mxu0 %v2037
        %v2336 = vpop.f32.mrb[0].mxu0
        %v2337 = vadd.f32 0.0, %v2336
        %v2338 = vpop.f32.mrb[0].mxu0
        %v2339 = vpop.f32.mrb[0].mxu0
        %v2340 = vpop.f32.mrb[0].mxu0
        %2341 = vdwg.mxu0
        %2342 = vmatprep.subr.bf16.mxu0 0
        %2343 = vmatpush1.bf16.xpose.msra.mxu0 %v2131
        %2344 = vmatprep.subr.bf16.mxu0 0
        %2345 = vmatpush1.bf16.xpose.msra.mxu0 0
        %2346 = vmatprep.subr.bf16.mxu0 0
        %2347 = vmatpush1.bf16.xpose.msra.mxu0 0
        %2348 = vmatprep.subr.bf16.mxu0 0
        %2349 = vmatpush1.bf16.xpose.msra.mxu0 0
        %2350 = vmatprep.subr.bf16.mxu0 0
        %2351 = vmatpush1.bf16.xpose.msra.mxu0 0
        %2352 = vmatprep.subr.bf16.mxu0 0
        %2353 = vmatpush1.bf16.xpose.msra.mxu0 0
        %2354 = vmatprep.subr.bf16.mxu0 0
        %2355 = vmatpush1.bf16.xpose.msra.mxu0 0
        %2356 = vmatprep.subr.bf16.mxu0 0
        %2357 = vmatpush1.bf16.xpose.msra.mxu0 0
        %2358 = vmatprep.subr.bf16.mxu0 0
        %2359 = vmatpush1.bf16.xpose.msra.mxu0 0
        %2360 = vmatprep.subr.bf16.mxu0 0
        %2361 = vmatpush1.bf16.xpose.msra.mxu0 0
        %2362 = vmatprep.subr.bf16.mxu0 0
        %2363 = vmatpush1.bf16.xpose.msra.mxu0 0
        %2364 = vmatprep.subr.bf16.mxu0 0
        %2365 = vmatpush1.bf16.xpose.msra.mxu0 0
        %2366 = vmatprep.subr.bf16.mxu0 0
        %2367 = vmatpush1.bf16.xpose.msra.mxu0 0
        %2368 = vmatprep.subr.bf16.mxu0 0
        %2369 = vmatpush1.bf16.xpose.msra.mxu0 0
        %2370 = vmatprep.subr.bf16.mxu0 0
        %2371 = vmatpush1.bf16.xpose.msra.mxu0 0
        %2372 = vmatprep.subr.bf16.mxu0 0
        %2373 = vmatpush1.bf16.xpose.msra.mxu0 0
        %2374 = vmatprep.mubr.bf16.mxu0 0
        %2375 = vmatmul.mubr.bf16.gmra.mrb[0].mxu0 %v2105
        %v2376 = vpop.f32.mrb[0].mxu0
        %v2377 = vadd.f32 0.0, %v2376
        %v2378 = vpop.f32.mrb[0].mxu0
        %v2379 = vpop.f32.mrb[0].mxu0
        %v2380 = vpop.f32.mrb[0].mxu0
        %2381 = vdwg.mxu0
        %2382 = vmatprep.subr.bf16.mxu0 0
        %2383 = vmatpush1.bf16.xpose.msra.mxu0 %v2132
        %2384 = vmatprep.subr.bf16.mxu0 0
        %2385 = vmatpush1.bf16.xpose.msra.mxu0 0
        %2386 = vmatprep.subr.bf16.mxu0 0
        %2387 = vmatpush1.bf16.xpose.msra.mxu0 0
        %2388 = vmatprep.subr.bf16.mxu0 0
        %2389 = vmatpush1.bf16.xpose.msra.mxu0 0
        %2390 = vmatprep.subr.bf16.mxu0 0
        %2391 = vmatpush1.bf16.xpose.msra.mxu0 0
        %2392 = vmatprep.subr.bf16.mxu0 0
        %2393 = vmatpush1.bf16.xpose.msra.mxu0 0
        %2394 = vmatprep.subr.bf16.mxu0 0
        %2395 = vmatpush1.bf16.xpose.msra.mxu0 0
        %2396 = vmatprep.subr.bf16.mxu0 0
        %2397 = vmatpush1.bf16.xpose.msra.mxu0 0
        %2398 = vmatprep.subr.bf16.mxu0 0
        %2399 = vmatpush1.bf16.xpose.msra.mxu0 0
        %2400 = vmatprep.subr.bf16.mxu0 0
        %2401 = vmatpush1.bf16.xpose.msra.mxu0 0
        %2402 = vmatprep.subr.bf16.mxu0 0
        %2403 = vmatpush1.bf16.xpose.msra.mxu0 0
        %2404 = vmatprep.subr.bf16.mxu0 0
        %2405 = vmatpush1.bf16.xpose.msra.mxu0 0
        %2406 = vmatprep.subr.bf16.mxu0 0
        %2407 = vmatpush1.bf16.xpose.msra.mxu0 0
        %2408 = vmatprep.subr.bf16.mxu0 0
        %2409 = vmatpush1.bf16.xpose.msra.mxu0 0
        %2410 = vmatprep.subr.bf16.mxu0 0
        %2411 = vmatpush1.bf16.xpose.msra.mxu0 0
        %2412 = vmatprep.subr.bf16.mxu0 0
        %2413 = vmatpush1.bf16.xpose.msra.mxu0 0
        %2414 = vmatprep.mubr.bf16.mxu0 0
        %2415 = vmatmul.mubr.bf16.gmra.mrb[0].mxu0 %v2055
        %v2416 = vpop.f32.mrb[0].mxu0
        %v2417 = vadd.f32 0.0, %v2416
        %v2418 = vpop.f32.mrb[0].mxu0
        %v2419 = vpop.f32.mrb[0].mxu0
        %v2420 = vpop.f32.mrb[0].mxu0
        %2421 = vdwg.mxu0
        %2422 = vmatprep.subr.bf16.mxu0 0
        %2423 = vmatpush1.bf16.xpose.msra.mxu0 %v2133
        %2424 = vmatprep.subr.bf16.mxu0 0
        %2425 = vmatpush1.bf16.xpose.msra.mxu0 0
        %2426 = vmatprep.subr.bf16.mxu0 0
        %2427 = vmatpush1.bf16.xpose.msra.mxu0 0
        %2428 = vmatprep.subr.bf16.mxu0 0
        %2429 = vmatpush1.bf16.xpose.msra.mxu0 0
        %2430 = vmatprep.subr.bf16.mxu0 0
        %2431 = vmatpush1.bf16.xpose.msra.mxu0 0
        %2432 = vmatprep.subr.bf16.mxu0 0
        %2433 = vmatpush1.bf16.xpose.msra.mxu0 0
        %2434 = vmatprep.subr.bf16.mxu0 0
        %2435 = vmatpush1.bf16.xpose.msra.mxu0 0
        %2436 = vmatprep.subr.bf16.mxu0 0
        %2437 = vmatpush1.bf16.xpose.msra.mxu0 0
        %2438 = vmatprep.subr.bf16.mxu0 0
        %2439 = vmatpush1.bf16.xpose.msra.mxu0 0
        %2440 = vmatprep.subr.bf16.mxu0 0
        %2441 = vmatpush1.bf16.xpose.msra.mxu0 0
        %2442 = vmatprep.subr.bf16.mxu0 0
        %2443 = vmatpush1.bf16.xpose.msra.mxu0 0
        %2444 = vmatprep.subr.bf16.mxu0 0
        %2445 = vmatpush1.bf16.xpose.msra.mxu0 0
        %2446 = vmatprep.subr.bf16.mxu0 0
        %2447 = vmatpush1.bf16.xpose.msra.mxu0 0
        %2448 = vmatprep.subr.bf16.mxu0 0
        %2449 = vmatpush1.bf16.xpose.msra.mxu0 0
        %2450 = vmatprep.subr.bf16.mxu0 0
        %2451 = vmatpush1.bf16.xpose.msra.mxu0 0
        %2452 = vmatprep.subr.bf16.mxu0 0
        %2453 = vmatpush1.bf16.xpose.msra.mxu0 0
        %2454 = vmatprep.mubr.bf16.mxu0 0
        %2455 = vmatmul.mubr.bf16.gmra.mrb[0].mxu0 %v2123
        %v2456 = vpop.f32.mrb[0].mxu0
        %v2457 = vadd.f32 0.0, %v2456
        %v2458 = vpop.f32.mrb[0].mxu0
        %v2459 = vpop.f32.mrb[0].mxu0
        %v2460 = vpop.f32.mrb[0].mxu0
        %2461 = vdwg.mxu0
        %2462 = vmatprep.subr.bf16.mxu0 0
        %2463 = vmatpush1.bf16.xpose.msra.mxu0 %v2134
        %2464 = vmatprep.subr.bf16.mxu0 0
        %2465 = vmatpush1.bf16.xpose.msra.mxu0 0
        %2466 = vmatprep.subr.bf16.mxu0 0
        %2467 = vmatpush1.bf16.xpose.msra.mxu0 0
        %2468 = vmatprep.subr.bf16.mxu0 0
        %2469 = vmatpush1.bf16.xpose.msra.mxu0 0
        %2470 = vmatprep.subr.bf16.mxu0 0
        %2471 = vmatpush1.bf16.xpose.msra.mxu0 0
        %2472 = vmatprep.subr.bf16.mxu0 0
        %2473 = vmatpush1.bf16.xpose.msra.mxu0 0
        %2474 = vmatprep.subr.bf16.mxu0 0
        %2475 = vmatpush1.bf16.xpose.msra.mxu0 0
        %2476 = vmatprep.subr.bf16.mxu0 0
        %2477 = vmatpush1.bf16.xpose.msra.mxu0 0
        %2478 = vmatprep.subr.bf16.mxu0 0
        %2479 = vmatpush1.bf16.xpose.msra.mxu0 0
        %2480 = vmatprep.subr.bf16.mxu0 0
        %2481 = vmatpush1.bf16.xpose.msra.mxu0 0
        %2482 = vmatprep.subr.bf16.mxu0 0
        %2483 = vmatpush1.bf16.xpose.msra.mxu0 0
        %2484 = vmatprep.subr.bf16.mxu0 0
        %2485 = vmatpush1.bf16.xpose.msra.mxu0 0
        %2486 = vmatprep.subr.bf16.mxu0 0
        %2487 = vmatpush1.bf16.xpose.msra.mxu0 0
        %2488 = vmatprep.subr.bf16.mxu0 0
        %2489 = vmatpush1.bf16.xpose.msra.mxu0 0
        %2490 = vmatprep.subr.bf16.mxu0 0
        %2491 = vmatpush1.bf16.xpose.msra.mxu0 0
        %2492 = vmatprep.subr.bf16.mxu0 0
        %2493 = vmatpush1.bf16.xpose.msra.mxu0 0
        %2494 = vmatprep.mubr.bf16.mxu0 0
        %2495 = vmatmul.mubr.bf16.gmra.mrb[0].mxu0 %v2046
        %v2496 = vpop.f32.mrb[0].mxu0
        %v2497 = vadd.f32 0.0, %v2496
        %v2498 = vpop.f32.mrb[0].mxu0
        %v2499 = vpop.f32.mrb[0].mxu0
        %v2500 = vpop.f32.mrb[0].mxu0
        %2501 = vdwg.mxu0
        %2502 = vmatprep.subr.bf16.mxu0 0
        %2503 = vmatpush1.bf16.xpose.msra.mxu0 %v2135
        %2504 = vmatprep.subr.bf16.mxu0 0
        %2505 = vmatpush1.bf16.xpose.msra.mxu0 0
        %2506 = vmatprep.subr.bf16.mxu0 0
        %2507 = vmatpush1.bf16.xpose.msra.mxu0 0
        %2508 = vmatprep.subr.bf16.mxu0 0
        %2509 = vmatpush1.bf16.xpose.msra.mxu0 0
        %2510 = vmatprep.subr.bf16.mxu0 0
        %2511 = vmatpush1.bf16.xpose.msra.mxu0 0
        %2512 = vmatprep.subr.bf16.mxu0 0
        %2513 = vmatpush1.bf16.xpose.msra.mxu0 0
        %2514 = vmatprep.subr.bf16.mxu0 0
        %2515 = vmatpush1.bf16.xpose.msra.mxu0 0
        %2516 = vmatprep.subr.bf16.mxu0 0
        %2517 = vmatpush1.bf16.xpose.msra.mxu0 0
        %2518 = vmatprep.subr.bf16.mxu0 0
        %2519 = vmatpush1.bf16.xpose.msra.mxu0 0
        %2520 = vmatprep.subr.bf16.mxu0 0
        %2521 = vmatpush1.bf16.xpose.msra.mxu0 0
        %2522 = vmatprep.subr.bf16.mxu0 0
        %2523 = vmatpush1.bf16.xpose.msra.mxu0 0
        %2524 = vmatprep.subr.bf16.mxu0 0
        %2525 = vmatpush1.bf16.xpose.msra.mxu0 0
        %2526 = vmatprep.subr.bf16.mxu0 0
        %2527 = vmatpush1.bf16.xpose.msra.mxu0 0
        %2528 = vmatprep.subr.bf16.mxu0 0
        %2529 = vmatpush1.bf16.xpose.msra.mxu0 0
        %2530 = vmatprep.subr.bf16.mxu0 0
        %2531 = vmatpush1.bf16.xpose.msra.mxu0 0
        %2532 = vmatprep.subr.bf16.mxu0 0
        %2533 = vmatpush1.bf16.xpose.msra.mxu0 0
        %2534 = vmatprep.mubr.bf16.mxu0 0
        %2535 = vmatmul.mubr.bf16.gmra.mrb[0].mxu0 %v2114
        %v2536 = vpop.f32.mrb[0].mxu0
        %v2537 = vadd.f32 0.0, %v2536
        %v2538 = vpop.f32.mrb[0].mxu0
        %v2539 = vpop.f32.mrb[0].mxu0
        %v2540 = vpop.f32.mrb[0].mxu0
        %2541 = vdwg.mxu0
        %2542 = vmatprep.subr.bf16.mxu0 0
        %2543 = vmatpush1.bf16.xpose.msra.mxu0 %v2136
        %2544 = vmatprep.subr.bf16.mxu0 0
        %2545 = vmatpush1.bf16.xpose.msra.mxu0 0
        %2546 = vmatprep.subr.bf16.mxu0 0
        %2547 = vmatpush1.bf16.xpose.msra.mxu0 0
        %2548 = vmatprep.subr.bf16.mxu0 0
        %2549 = vmatpush1.bf16.xpose.msra.mxu0 0
        %2550 = vmatprep.subr.bf16.mxu0 0
        %2551 = vmatpush1.bf16.xpose.msra.mxu0 0
        %2552 = vmatprep.subr.bf16.mxu0 0
        %2553 = vmatpush1.bf16.xpose.msra.mxu0 0
        %2554 = vmatprep.subr.bf16.mxu0 0
        %2555 = vmatpush1.bf16.xpose.msra.mxu0 0
        %2556 = vmatprep.subr.bf16.mxu0 0
        %2557 = vmatpush1.bf16.xpose.msra.mxu0 0
        %2558 = vmatprep.subr.bf16.mxu0 0
        %2559 = vmatpush1.bf16.xpose.msra.mxu0 0
        %2560 = vmatprep.subr.bf16.mxu0 0
        %2561 = vmatpush1.bf16.xpose.msra.mxu0 0
        %2562 = vmatprep.subr.bf16.mxu0 0
        %2563 = vmatpush1.bf16.xpose.msra.mxu0 0
        %2564 = vmatprep.subr.bf16.mxu0 0
        %2565 = vmatpush1.bf16.xpose.msra.mxu0 0
        %2566 = vmatprep.subr.bf16.mxu0 0
        %2567 = vmatpush1.bf16.xpose.msra.mxu0 0
        %2568 = vmatprep.subr.bf16.mxu0 0
        %2569 = vmatpush1.bf16.xpose.msra.mxu0 0
        %2570 = vmatprep.subr.bf16.mxu0 0
        %2571 = vmatpush1.bf16.xpose.msra.mxu0 0
        %2572 = vmatprep.subr.bf16.mxu0 0
        %2573 = vmatpush1.bf16.xpose.msra.mxu0 0
        %2574 = vmatprep.mubr.bf16.mxu0 0
        %2575 = vmatmul.mubr.bf16.gmra.mrb[0].mxu0 %v2056
        %v2576 = vpop.f32.mrb[0].mxu0
        %v2577 = vadd.f32 0.0, %v2576
        %v2578 = vpop.f32.mrb[0].mxu0
        %v2579 = vpop.f32.mrb[0].mxu0
        %v2580 = vpop.f32.mrb[0].mxu0
        %2581 = vdwg.mxu0
        %2582 = vmatprep.subr.bf16.mxu0 0
        %2583 = vmatpush1.bf16.xpose.msra.mxu0 %v2137
        %2584 = vmatprep.subr.bf16.mxu0 0
        %2585 = vmatpush1.bf16.xpose.msra.mxu0 0
        %2586 = vmatprep.subr.bf16.mxu0 0
        %2587 = vmatpush1.bf16.xpose.msra.mxu0 0
        %2588 = vmatprep.subr.bf16.mxu0 0
        %2589 = vmatpush1.bf16.xpose.msra.mxu0 0
        %2590 = vmatprep.subr.bf16.mxu0 0
        %2591 = vmatpush1.bf16.xpose.msra.mxu0 0
        %2592 = vmatprep.subr.bf16.mxu0 0
        %2593 = vmatpush1.bf16.xpose.msra.mxu0 0
        %2594 = vmatprep.subr.bf16.mxu0 0
        %2595 = vmatpush1.bf16.xpose.msra.mxu0 0
        %2596 = vmatprep.subr.bf16.mxu0 0
        %2597 = vmatpush1.bf16.xpose.msra.mxu0 0
        %2598 = vmatprep.subr.bf16.mxu0 0
        %2599 = vmatpush1.bf16.xpose.msra.mxu0 0
        %2600 = vmatprep.subr.bf16.mxu0 0
        %2601 = vmatpush1.bf16.xpose.msra.mxu0 0
        %2602 = vmatprep.subr.bf16.mxu0 0
        %2603 = vmatpush1.bf16.xpose.msra.mxu0 0
        %2604 = vmatprep.subr.bf16.mxu0 0
        %2605 = vmatpush1.bf16.xpose.msra.mxu0 0
        %2606 = vmatprep.subr.bf16.mxu0 0
        %2607 = vmatpush1.bf16.xpose.msra.mxu0 0
        %2608 = vmatprep.subr.bf16.mxu0 0
        %2609 = vmatpush1.bf16.xpose.msra.mxu0 0
        %2610 = vmatprep.subr.bf16.mxu0 0
        %2611 = vmatpush1.bf16.xpose.msra.mxu0 0
        %2612 = vmatprep.subr.bf16.mxu0 0
        %2613 = vmatpush1.bf16.xpose.msra.mxu0 0
        %2614 = vmatprep.mubr.bf16.mxu0 0
        %2615 = vmatmul.mubr.bf16.gmra.mrb[0].mxu0 %v2124
        %v2616 = vpop.f32.mrb[0].mxu0
        %v2617 = vadd.f32 0.0, %v2616
        %v2618 = vpop.f32.mrb[0].mxu0
        %v2619 = vpop.f32.mrb[0].mxu0
        %v2620 = vpop.f32.mrb[0].mxu0
        %2621 = vdwg.mxu0
        %2622 = vmatprep.subr.bf16.mxu0 0
        %2623 = vmatpush1.bf16.xpose.msra.mxu0 %v2138
        %2624 = vmatprep.subr.bf16.mxu0 0
        %2625 = vmatpush1.bf16.xpose.msra.mxu0 0
        %2626 = vmatprep.subr.bf16.mxu0 0
        %2627 = vmatpush1.bf16.xpose.msra.mxu0 0
        %2628 = vmatprep.subr.bf16.mxu0 0
        %2629 = vmatpush1.bf16.xpose.msra.mxu0 0
        %2630 = vmatprep.subr.bf16.mxu0 0
        %2631 = vmatpush1.bf16.xpose.msra.mxu0 0
        %2632 = vmatprep.subr.bf16.mxu0 0
        %2633 = vmatpush1.bf16.xpose.msra.mxu0 0
        %2634 = vmatprep.subr.bf16.mxu0 0
        %2635 = vmatpush1.bf16.xpose.msra.mxu0 0
        %2636 = vmatprep.subr.bf16.mxu0 0
        %2637 = vmatpush1.bf16.xpose.msra.mxu0 0
        %2638 = vmatprep.subr.bf16.mxu0 0
        %2639 = vmatpush1.bf16.xpose.msra.mxu0 0
        %2640 = vmatprep.subr.bf16.mxu0 0
        %2641 = vmatpush1.bf16.xpose.msra.mxu0 0
        %2642 = vmatprep.subr.bf16.mxu0 0
        %2643 = vmatpush1.bf16.xpose.msra.mxu0 0
        %2644 = vmatprep.subr.bf16.mxu0 0
        %2645 = vmatpush1.bf16.xpose.msra.mxu0 0
        %2646 = vmatprep.subr.bf16.mxu0 0
        %2647 = vmatpush1.bf16.xpose.msra.mxu0 0
        %2648 = vmatprep.subr.bf16.mxu0 0
        %2649 = vmatpush1.bf16.xpose.msra.mxu0 0
        %2650 = vmatprep.subr.bf16.mxu0 0
        %2651 = vmatpush1.bf16.xpose.msra.mxu0 0
        %2652 = vmatprep.subr.bf16.mxu0 0
        %2653 = vmatpush1.bf16.xpose.msra.mxu0 0
        %2654 = vmatprep.mubr.bf16.mxu0 0
        %2655 = vmatmul.mubr.bf16.gmra.mrb[0].mxu0 %v2053
        %v2656 = vpop.f32.mrb[0].mxu0
        %v2657 = vadd.f32 0.0, %v2656
        %v2658 = vpop.f32.mrb[0].mxu0
        %v2659 = vpop.f32.mrb[0].mxu0
        %v2660 = vpop.f32.mrb[0].mxu0
        %2661 = vdwg.mxu0
        %2662 = vmatprep.subr.bf16.mxu0 0
        %2663 = vmatpush1.bf16.xpose.msra.mxu0 %v2139
        %2664 = vmatprep.subr.bf16.mxu0 0
        %2665 = vmatpush1.bf16.xpose.msra.mxu0 0
        %2666 = vmatprep.subr.bf16.mxu0 0
        %2667 = vmatpush1.bf16.xpose.msra.mxu0 0
        %2668 = vmatprep.subr.bf16.mxu0 0
        %2669 = vmatpush1.bf16.xpose.msra.mxu0 0
        %2670 = vmatprep.subr.bf16.mxu0 0
        %2671 = vmatpush1.bf16.xpose.msra.mxu0 0
        %2672 = vmatprep.subr.bf16.mxu0 0
        %2673 = vmatpush1.bf16.xpose.msra.mxu0 0
        %2674 = vmatprep.subr.bf16.mxu0 0
        %2675 = vmatpush1.bf16.xpose.msra.mxu0 0
        %2676 = vmatprep.subr.bf16.mxu0 0
        %2677 = vmatpush1.bf16.xpose.msra.mxu0 0
        %2678 = vmatprep.subr.bf16.mxu0 0
        %2679 = vmatpush1.bf16.xpose.msra.mxu0 0
        %2680 = vmatprep.subr.bf16.mxu0 0
        %2681 = vmatpush1.bf16.xpose.msra.mxu0 0
        %2682 = vmatprep.subr.bf16.mxu0 0
        %2683 = vmatpush1.bf16.xpose.msra.mxu0 0
        %2684 = vmatprep.subr.bf16.mxu0 0
        %2685 = vmatpush1.bf16.xpose.msra.mxu0 0
        %2686 = vmatprep.subr.bf16.mxu0 0
        %2687 = vmatpush1.bf16.xpose.msra.mxu0 0
        %2688 = vmatprep.subr.bf16.mxu0 0
        %2689 = vmatpush1.bf16.xpose.msra.mxu0 0
        %2690 = vmatprep.subr.bf16.mxu0 0
        %2691 = vmatpush1.bf16.xpose.msra.mxu0 0
        %2692 = vmatprep.subr.bf16.mxu0 0
        %2693 = vmatpush1.bf16.xpose.msra.mxu0 0
        %2694 = vmatprep.mubr.bf16.mxu0 0
        %2695 = vmatmul.mubr.bf16.gmra.mrb[0].mxu0 %v2121
        %v2696 = vpop.f32.mrb[0].mxu0
        %v2697 = vadd.f32 0.0, %v2696
        %v2698 = vpop.f32.mrb[0].mxu0
        %v2699 = vpop.f32.mrb[0].mxu0
        %v2700 = vpop.f32.mrb[0].mxu0
        %2701 = vdwg.mxu0
        %2702 = vmatprep.subr.bf16.mxu0 0
        %2703 = vmatpush1.bf16.xpose.msra.mxu0 %v2140
        %2704 = vmatprep.subr.bf16.mxu0 0
        %2705 = vmatpush1.bf16.xpose.msra.mxu0 0
        %2706 = vmatprep.subr.bf16.mxu0 0
        %2707 = vmatpush1.bf16.xpose.msra.mxu0 0
        %2708 = vmatprep.subr.bf16.mxu0 0
        %2709 = vmatpush1.bf16.xpose.msra.mxu0 0
        %2710 = vmatprep.subr.bf16.mxu0 0
        %2711 = vmatpush1.bf16.xpose.msra.mxu0 0
        %2712 = vmatprep.subr.bf16.mxu0 0
        %2713 = vmatpush1.bf16.xpose.msra.mxu0 0
        %2714 = vmatprep.subr.bf16.mxu0 0
        %2715 = vmatpush1.bf16.xpose.msra.mxu0 0
        %2716 = vmatprep.subr.bf16.mxu0 0
        %2717 = vmatpush1.bf16.xpose.msra.mxu0 0
        %2718 = vmatprep.subr.bf16.mxu0 0
        %2719 = vmatpush1.bf16.xpose.msra.mxu0 0
        %2720 = vmatprep.subr.bf16.mxu0 0
        %2721 = vmatpush1.bf16.xpose.msra.mxu0 0
        %2722 = vmatprep.subr.bf16.mxu0 0
        %2723 = vmatpush1.bf16.xpose.msra.mxu0 0
        %2724 = vmatprep.subr.bf16.mxu0 0
        %2725 = vmatpush1.bf16.xpose.msra.mxu0 0
        %2726 = vmatprep.subr.bf16.mxu0 0
        %2727 = vmatpush1.bf16.xpose.msra.mxu0 0
        %2728 = vmatprep.subr.bf16.mxu0 0
        %2729 = vmatpush1.bf16.xpose.msra.mxu0 0
        %2730 = vmatprep.subr.bf16.mxu0 0
        %2731 = vmatpush1.bf16.xpose.msra.mxu0 0
        %2732 = vmatprep.subr.bf16.mxu0 0
        %2733 = vmatpush1.bf16.xpose.msra.mxu0 0
        %2734 = vmatprep.mubr.bf16.mxu0 0
        %2735 = vmatmul.mubr.bf16.gmra.mrb[0].mxu0 %v2057
        %v2736 = vpop.f32.mrb[0].mxu0
        %v2737 = vadd.f32 0.0, %v2736
        %v2738 = vpop.f32.mrb[0].mxu0
        %v2739 = vpop.f32.mrb[0].mxu0
        %v2740 = vpop.f32.mrb[0].mxu0
        %2741 = vdwg.mxu0
        %2742 = vmatprep.subr.bf16.mxu0 0
        %2743 = vmatpush1.bf16.xpose.msra.mxu0 %v2141
        %2744 = vmatprep.subr.bf16.mxu0 0
        %2745 = vmatpush1.bf16.xpose.msra.mxu0 0
        %2746 = vmatprep.subr.bf16.mxu0 0
        %2747 = vmatpush1.bf16.xpose.msra.mxu0 0
        %2748 = vmatprep.subr.bf16.mxu0 0
        %2749 = vmatpush1.bf16.xpose.msra.mxu0 0
        %2750 = vmatprep.subr.bf16.mxu0 0
        %2751 = vmatpush1.bf16.xpose.msra.mxu0 0
        %2752 = vmatprep.subr.bf16.mxu0 0
        %2753 = vmatpush1.bf16.xpose.msra.mxu0 0
        %2754 = vmatprep.subr.bf16.mxu0 0
        %2755 = vmatpush1.bf16.xpose.msra.mxu0 0
        %2756 = vmatprep.subr.bf16.mxu0 0
        %2757 = vmatpush1.bf16.xpose.msra.mxu0 0
        %2758 = vmatprep.subr.bf16.mxu0 0
        %2759 = vmatpush1.bf16.xpose.msra.mxu0 0
        %2760 = vmatprep.subr.bf16.mxu0 0
        %2761 = vmatpush1.bf16.xpose.msra.mxu0 0
        %2762 = vmatprep.subr.bf16.mxu0 0
        %2763 = vmatpush1.bf16.xpose.msra.mxu0 0
        %2764 = vmatprep.subr.bf16.mxu0 0
        %2765 = vmatpush1.bf16.xpose.msra.mxu0 0
        %2766 = vmatprep.subr.bf16.mxu0 0
        %2767 = vmatpush1.bf16.xpose.msra.mxu0 0
        %2768 = vmatprep.subr.bf16.mxu0 0
        %2769 = vmatpush1.bf16.xpose.msra.mxu0 0
        %2770 = vmatprep.subr.bf16.mxu0 0
        %2771 = vmatpush1.bf16.xpose.msra.mxu0 0
        %2772 = vmatprep.subr.bf16.mxu0 0
        %2773 = vmatpush1.bf16.xpose.msra.mxu0 0
        %2774 = vmatprep.mubr.bf16.mxu0 0
        %2775 = vmatmul.mubr.bf16.gmra.mrb[0].mxu0 %v2125
        %v2776 = vpop.f32.mrb[0].mxu0
        %v2777 = vadd.f32 0.0, %v2776
        %v2778 = vpop.f32.mrb[0].mxu0
        %v2779 = vpop.f32.mrb[0].mxu0
        %v2780 = vpop.f32.mrb[0].mxu0
        %2781 = vdwg.mxu0
        %v2782 = vlaneseq
        %v2783 = vshrl.u32 %v2782, 7
        %v2784 = vstv %s1642
        %v2785 = vadd.s32 %v2783, %v2784
        %v2786 = vlaneseq
        %v2787 = vand.u32 %v2786, 127
        %vm2788 = vcmp.eq.s32.totalorder %v2785, %v2787
        %v2789 = vsel %vm2788, 1, 0
        %vm2790 = vcmp.eq.s32.totalorder %v2789, 1
        %v2791 = vsel %vm2790, -1e+30, %v2177
        %v2792 = vsel %vm2790, -1e+30, %v2217
        %v2793 = vsel %vm2790, -1e+30, %v2257
        %v2794 = vsel %vm2790, -1e+30, %v2297
        %v2795 = vsel %vm2790, -1e+30, %v2337
        %v2796 = vsel %vm2790, -1e+30, %v2377
        %v2797 = vsel %vm2790, -1e+30, %v2417
        %v2798 = vsel %vm2790, -1e+30, %v2457
        %v2799 = vsel %vm2790, -1e+30, %v2497
        %v2800 = vsel %vm2790, -1e+30, %v2537
        %v2801 = vsel %vm2790, -1e+30, %v2577
        %v2802 = vsel %vm2790, -1e+30, %v2617
        %v2803 = vsel %vm2790, -1e+30, %v2657
        %v2804 = vsel %vm2790, -1e+30, %v2697
        %v2805 = vsel %vm2790, -1e+30, %v2737
        %v2806 = vsel %vm2790, -1e+30, %v2777
        %2807 = vmatprep.subr.bf16.mxu0 0
        %2808 = vmatpush1.bf16.xpose.msra.mxu0 %v1940
        %2809 = vmatprep.subr.bf16.mxu0 0
        %2810 = vmatpush1.bf16.xpose.msra.mxu0 0
        %2811 = vmatprep.subr.bf16.mxu0 0
        %2812 = vmatpush1.bf16.xpose.msra.mxu0 0
        %2813 = vmatprep.subr.bf16.mxu0 0
        %2814 = vmatpush1.bf16.xpose.msra.mxu0 0
        %2815 = vmatprep.subr.bf16.mxu0 0
        %2816 = vmatpush1.bf16.xpose.msra.mxu0 0
        %2817 = vmatprep.subr.bf16.mxu0 0
        %2818 = vmatpush1.bf16.xpose.msra.mxu0 0
        %2819 = vmatprep.subr.bf16.mxu0 0
        %2820 = vmatpush1.bf16.xpose.msra.mxu0 0
        %2821 = vmatprep.subr.bf16.mxu0 0
        %2822 = vmatpush1.bf16.xpose.msra.mxu0 0
        %2823 = vmatprep.subr.bf16.mxu0 0
        %2824 = vmatpush1.bf16.xpose.msra.mxu0 0
        %2825 = vmatprep.subr.bf16.mxu0 0
        %2826 = vmatpush1.bf16.xpose.msra.mxu0 0
        %2827 = vmatprep.subr.bf16.mxu0 0
        %2828 = vmatpush1.bf16.xpose.msra.mxu0 0
        %2829 = vmatprep.subr.bf16.mxu0 0
        %2830 = vmatpush1.bf16.xpose.msra.mxu0 0
        %2831 = vmatprep.subr.bf16.mxu0 0
        %2832 = vmatpush1.bf16.xpose.msra.mxu0 0
        %2833 = vmatprep.subr.bf16.mxu0 0
        %2834 = vmatpush1.bf16.xpose.msra.mxu0 0
        %2835 = vmatprep.subr.bf16.mxu0 0
        %2836 = vmatpush1.bf16.xpose.msra.mxu0 0
        %2837 = vmatprep.subr.bf16.mxu0 0
        %2838 = vmatpush1.bf16.xpose.msra.mxu0 0
        %2839 = vmatprep.mubr.bf16.mxu0 0
        %2840 = vmatmul.mubr.bf16.gmra.mrb[0].mxu0 %v1813
        %v2841 = vpop.f32.mrb[0].mxu0
        %v2842 = vadd.f32 0.0, %v2841
        %v2843 = vpop.f32.mrb[0].mxu0
        %v2844 = vpop.f32.mrb[0].mxu0
        %v2845 = vadd.f32 0.0, %v2844
        %v2846 = vpop.f32.mrb[0].mxu0
        %2847 = vdwg.mxu0
        %2848 = vmatprep.subr.bf16.mxu0 0
        %2849 = vmatpush1.bf16.xpose.msra.mxu0 %v1941
        %2850 = vmatprep.subr.bf16.mxu0 0
        %2851 = vmatpush1.bf16.xpose.msra.mxu0 0
        %2852 = vmatprep.subr.bf16.mxu0 0
        %2853 = vmatpush1.bf16.xpose.msra.mxu0 0
        %2854 = vmatprep.subr.bf16.mxu0 0
        %2855 = vmatpush1.bf16.xpose.msra.mxu0 0
        %2856 = vmatprep.subr.bf16.mxu0 0
        %2857 = vmatpush1.bf16.xpose.msra.mxu0 0
        %2858 = vmatprep.subr.bf16.mxu0 0
        %2859 = vmatpush1.bf16.xpose.msra.mxu0 0
        %2860 = vmatprep.subr.bf16.mxu0 0
        %2861 = vmatpush1.bf16.xpose.msra.mxu0 0
        %2862 = vmatprep.subr.bf16.mxu0 0
        %2863 = vmatpush1.bf16.xpose.msra.mxu0 0
        %2864 = vmatprep.subr.bf16.mxu0 0
        %2865 = vmatpush1.bf16.xpose.msra.mxu0 0
        %2866 = vmatprep.subr.bf16.mxu0 0
        %2867 = vmatpush1.bf16.xpose.msra.mxu0 0
        %2868 = vmatprep.subr.bf16.mxu0 0
        %2869 = vmatpush1.bf16.xpose.msra.mxu0 0
        %2870 = vmatprep.subr.bf16.mxu0 0
        %2871 = vmatpush1.bf16.xpose.msra.mxu0 0
        %2872 = vmatprep.subr.bf16.mxu0 0
        %2873 = vmatpush1.bf16.xpose.msra.mxu0 0
        %2874 = vmatprep.subr.bf16.mxu0 0
        %2875 = vmatpush1.bf16.xpose.msra.mxu0 0
        %2876 = vmatprep.subr.bf16.mxu0 0
        %2877 = vmatpush1.bf16.xpose.msra.mxu0 0
        %2878 = vmatprep.subr.bf16.mxu0 0
        %2879 = vmatpush1.bf16.xpose.msra.mxu0 0
        %2880 = vmatprep.mubr.bf16.mxu0 0
        %2881 = vmatmul.mubr.bf16.gmra.mrb[0].mxu0 %v1814
        %v2882 = vpop.f32.mrb[0].mxu0
        %v2883 = vadd.f32 0.0, %v2882
        %v2884 = vpop.f32.mrb[0].mxu0
        %v2885 = vpop.f32.mrb[0].mxu0
        %v2886 = vadd.f32 0.0, %v2885
        %v2887 = vpop.f32.mrb[0].mxu0
        %2888 = vdwg.mxu0
        %2889 = vmatprep.subr.bf16.mxu0 0
        %2890 = vmatpush1.bf16.xpose.msra.mxu0 %v1942
        %2891 = vmatprep.subr.bf16.mxu0 0
        %2892 = vmatpush1.bf16.xpose.msra.mxu0 0
        %2893 = vmatprep.subr.bf16.mxu0 0
        %2894 = vmatpush1.bf16.xpose.msra.mxu0 0
        %2895 = vmatprep.subr.bf16.mxu0 0
        %2896 = vmatpush1.bf16.xpose.msra.mxu0 0
        %2897 = vmatprep.subr.bf16.mxu0 0
        %2898 = vmatpush1.bf16.xpose.msra.mxu0 0
        %2899 = vmatprep.subr.bf16.mxu0 0
        %2900 = vmatpush1.bf16.xpose.msra.mxu0 0
        %2901 = vmatprep.subr.bf16.mxu0 0
        %2902 = vmatpush1.bf16.xpose.msra.mxu0 0
        %2903 = vmatprep.subr.bf16.mxu0 0
        %2904 = vmatpush1.bf16.xpose.msra.mxu0 0
        %2905 = vmatprep.subr.bf16.mxu0 0
        %2906 = vmatpush1.bf16.xpose.msra.mxu0 0
        %2907 = vmatprep.subr.bf16.mxu0 0
        %2908 = vmatpush1.bf16.xpose.msra.mxu0 0
        %2909 = vmatprep.subr.bf16.mxu0 0
        %2910 = vmatpush1.bf16.xpose.msra.mxu0 0
        %2911 = vmatprep.subr.bf16.mxu0 0
        %2912 = vmatpush1.bf16.xpose.msra.mxu0 0
        %2913 = vmatprep.subr.bf16.mxu0 0
        %2914 = vmatpush1.bf16.xpose.msra.mxu0 0
        %2915 = vmatprep.subr.bf16.mxu0 0
        %2916 = vmatpush1.bf16.xpose.msra.mxu0 0
        %2917 = vmatprep.subr.bf16.mxu0 0
        %2918 = vmatpush1.bf16.xpose.msra.mxu0 0
        %2919 = vmatprep.subr.bf16.mxu0 0
        %2920 = vmatpush1.bf16.xpose.msra.mxu0 0
        %2921 = vmatprep.mubr.bf16.mxu0 0
        %2922 = vmatmul.mubr.bf16.gmra.mrb[0].mxu0 %v1815
        %v2923 = vpop.f32.mrb[0].mxu0
        %v2924 = vadd.f32 0.0, %v2923
        %v2925 = vpop.f32.mrb[0].mxu0
        %v2926 = vpop.f32.mrb[0].mxu0
        %v2927 = vadd.f32 0.0, %v2926
        %v2928 = vpop.f32.mrb[0].mxu0
        %2929 = vdwg.mxu0
        %2930 = vmatprep.subr.bf16.mxu0 0
        %2931 = vmatpush1.bf16.xpose.msra.mxu0 %v1943
        %2932 = vmatprep.subr.bf16.mxu0 0
        %2933 = vmatpush1.bf16.xpose.msra.mxu0 0
        %2934 = vmatprep.subr.bf16.mxu0 0
        %2935 = vmatpush1.bf16.xpose.msra.mxu0 0
        %2936 = vmatprep.subr.bf16.mxu0 0
        %2937 = vmatpush1.bf16.xpose.msra.mxu0 0
        %2938 = vmatprep.subr.bf16.mxu0 0
        %2939 = vmatpush1.bf16.xpose.msra.mxu0 0
        %2940 = vmatprep.subr.bf16.mxu0 0
        %2941 = vmatpush1.bf16.xpose.msra.mxu0 0
        %2942 = vmatprep.subr.bf16.mxu0 0
        %2943 = vmatpush1.bf16.xpose.msra.mxu0 0
        %2944 = vmatprep.subr.bf16.mxu0 0
        %2945 = vmatpush1.bf16.xpose.msra.mxu0 0
        %2946 = vmatprep.subr.bf16.mxu0 0
        %2947 = vmatpush1.bf16.xpose.msra.mxu0 0
        %2948 = vmatprep.subr.bf16.mxu0 0
        %2949 = vmatpush1.bf16.xpose.msra.mxu0 0
        %2950 = vmatprep.subr.bf16.mxu0 0
        %2951 = vmatpush1.bf16.xpose.msra.mxu0 0
        %2952 = vmatprep.subr.bf16.mxu0 0
        %2953 = vmatpush1.bf16.xpose.msra.mxu0 0
        %2954 = vmatprep.subr.bf16.mxu0 0
        %2955 = vmatpush1.bf16.xpose.msra.mxu0 0
        %2956 = vmatprep.subr.bf16.mxu0 0
        %2957 = vmatpush1.bf16.xpose.msra.mxu0 0
        %2958 = vmatprep.subr.bf16.mxu0 0
        %2959 = vmatpush1.bf16.xpose.msra.mxu0 0
        %2960 = vmatprep.subr.bf16.mxu0 0
        %2961 = vmatpush1.bf16.xpose.msra.mxu0 0
        %2962 = vmatprep.mubr.bf16.mxu0 0
        %2963 = vmatmul.mubr.bf16.gmra.mrb[0].mxu0 %v1816
        %v2964 = vpop.f32.mrb[0].mxu0
        %v2965 = vadd.f32 0.0, %v2964
        %v2966 = vpop.f32.mrb[0].mxu0
        %v2967 = vpop.f32.mrb[0].mxu0
        %v2968 = vadd.f32 0.0, %v2967
        %v2969 = vpop.f32.mrb[0].mxu0
        %2970 = vdwg.mxu0
        %2971 = vmatprep.subr.bf16.mxu0 0
        %2972 = vmatpush1.bf16.xpose.msra.mxu0 %v1944
        %2973 = vmatprep.subr.bf16.mxu0 0
        %2974 = vmatpush1.bf16.xpose.msra.mxu0 0
        %2975 = vmatprep.subr.bf16.mxu0 0
        %2976 = vmatpush1.bf16.xpose.msra.mxu0 0
        %2977 = vmatprep.subr.bf16.mxu0 0
        %2978 = vmatpush1.bf16.xpose.msra.mxu0 0
        %2979 = vmatprep.subr.bf16.mxu0 0
        %2980 = vmatpush1.bf16.xpose.msra.mxu0 0
        %2981 = vmatprep.subr.bf16.mxu0 0
        %2982 = vmatpush1.bf16.xpose.msra.mxu0 0
        %2983 = vmatprep.subr.bf16.mxu0 0
        %2984 = vmatpush1.bf16.xpose.msra.mxu0 0
        %2985 = vmatprep.subr.bf16.mxu0 0
        %2986 = vmatpush1.bf16.xpose.msra.mxu0 0
        %2987 = vmatprep.subr.bf16.mxu0 0
        %2988 = vmatpush1.bf16.xpose.msra.mxu0 0
        %2989 = vmatprep.subr.bf16.mxu0 0
        %2990 = vmatpush1.bf16.xpose.msra.mxu0 0
        %2991 = vmatprep.subr.bf16.mxu0 0
        %2992 = vmatpush1.bf16.xpose.msra.mxu0 0
        %2993 = vmatprep.subr.bf16.mxu0 0
        %2994 = vmatpush1.bf16.xpose.msra.mxu0 0
        %2995 = vmatprep.subr.bf16.mxu0 0
        %2996 = vmatpush1.bf16.xpose.msra.mxu0 0
        %2997 = vmatprep.subr.bf16.mxu0 0
        %2998 = vmatpush1.bf16.xpose.msra.mxu0 0
        %2999 = vmatprep.subr.bf16.mxu0 0
        %3000 = vmatpush1.bf16.xpose.msra.mxu0 0
        %3001 = vmatprep.subr.bf16.mxu0 0
        %3002 = vmatpush1.bf16.xpose.msra.mxu0 0
        %3003 = vmatprep.mubr.bf16.mxu0 0
        %3004 = vmatmul.mubr.bf16.gmra.mrb[0].mxu0 %v1817
        %v3005 = vpop.f32.mrb[0].mxu0
        %v3006 = vadd.f32 0.0, %v3005
        %v3007 = vpop.f32.mrb[0].mxu0
        %v3008 = vpop.f32.mrb[0].mxu0
        %v3009 = vadd.f32 0.0, %v3008
        %v3010 = vpop.f32.mrb[0].mxu0
        %3011 = vdwg.mxu0
        %3012 = vmatprep.subr.bf16.mxu0 0
        %3013 = vmatpush1.bf16.xpose.msra.mxu0 %v1945
        %3014 = vmatprep.subr.bf16.mxu0 0
        %3015 = vmatpush1.bf16.xpose.msra.mxu0 0
        %3016 = vmatprep.subr.bf16.mxu0 0
        %3017 = vmatpush1.bf16.xpose.msra.mxu0 0
        %3018 = vmatprep.subr.bf16.mxu0 0
        %3019 = vmatpush1.bf16.xpose.msra.mxu0 0
        %3020 = vmatprep.subr.bf16.mxu0 0
        %3021 = vmatpush1.bf16.xpose.msra.mxu0 0
        %3022 = vmatprep.subr.bf16.mxu0 0
        %3023 = vmatpush1.bf16.xpose.msra.mxu0 0
        %3024 = vmatprep.subr.bf16.mxu0 0
        %3025 = vmatpush1.bf16.xpose.msra.mxu0 0
        %3026 = vmatprep.subr.bf16.mxu0 0
        %3027 = vmatpush1.bf16.xpose.msra.mxu0 0
        %3028 = vmatprep.subr.bf16.mxu0 0
        %3029 = vmatpush1.bf16.xpose.msra.mxu0 0
        %3030 = vmatprep.subr.bf16.mxu0 0
        %3031 = vmatpush1.bf16.xpose.msra.mxu0 0
        %3032 = vmatprep.subr.bf16.mxu0 0
        %3033 = vmatpush1.bf16.xpose.msra.mxu0 0
        %3034 = vmatprep.subr.bf16.mxu0 0
        %3035 = vmatpush1.bf16.xpose.msra.mxu0 0
        %3036 = vmatprep.subr.bf16.mxu0 0
        %3037 = vmatpush1.bf16.xpose.msra.mxu0 0
        %3038 = vmatprep.subr.bf16.mxu0 0
        %3039 = vmatpush1.bf16.xpose.msra.mxu0 0
        %3040 = vmatprep.subr.bf16.mxu0 0
        %3041 = vmatpush1.bf16.xpose.msra.mxu0 0
        %3042 = vmatprep.subr.bf16.mxu0 0
        %3043 = vmatpush1.bf16.xpose.msra.mxu0 0
        %3044 = vmatprep.mubr.bf16.mxu0 0
        %3045 = vmatmul.mubr.bf16.gmra.mrb[0].mxu0 %v1818
        %v3046 = vpop.f32.mrb[0].mxu0
        %v3047 = vadd.f32 0.0, %v3046
        %v3048 = vpop.f32.mrb[0].mxu0
        %v3049 = vpop.f32.mrb[0].mxu0
        %v3050 = vadd.f32 0.0, %v3049
        %v3051 = vpop.f32.mrb[0].mxu0
        %3052 = vdwg.mxu0
        %3053 = vmatprep.subr.bf16.mxu0 0
        %3054 = vmatpush1.bf16.xpose.msra.mxu0 %v1946
        %3055 = vmatprep.subr.bf16.mxu0 0
        %3056 = vmatpush1.bf16.xpose.msra.mxu0 0
        %3057 = vmatprep.subr.bf16.mxu0 0
        %3058 = vmatpush1.bf16.xpose.msra.mxu0 0
        %3059 = vmatprep.subr.bf16.mxu0 0
        %3060 = vmatpush1.bf16.xpose.msra.mxu0 0
        %3061 = vmatprep.subr.bf16.mxu0 0
        %3062 = vmatpush1.bf16.xpose.msra.mxu0 0
        %3063 = vmatprep.subr.bf16.mxu0 0
        %3064 = vmatpush1.bf16.xpose.msra.mxu0 0
        %3065 = vmatprep.subr.bf16.mxu0 0
        %3066 = vmatpush1.bf16.xpose.msra.mxu0 0
        %3067 = vmatprep.subr.bf16.mxu0 0
        %3068 = vmatpush1.bf16.xpose.msra.mxu0 0
        %3069 = vmatprep.subr.bf16.mxu0 0
        %3070 = vmatpush1.bf16.xpose.msra.mxu0 0
        %3071 = vmatprep.subr.bf16.mxu0 0
        %3072 = vmatpush1.bf16.xpose.msra.mxu0 0
        %3073 = vmatprep.subr.bf16.mxu0 0
        %3074 = vmatpush1.bf16.xpose.msra.mxu0 0
        %3075 = vmatprep.subr.bf16.mxu0 0
        %3076 = vmatpush1.bf16.xpose.msra.mxu0 0
        %3077 = vmatprep.subr.bf16.mxu0 0
        %3078 = vmatpush1.bf16.xpose.msra.mxu0 0
        %3079 = vmatprep.subr.bf16.mxu0 0
        %3080 = vmatpush1.bf16.xpose.msra.mxu0 0
        %3081 = vmatprep.subr.bf16.mxu0 0
        %3082 = vmatpush1.bf16.xpose.msra.mxu0 0
        %3083 = vmatprep.subr.bf16.mxu0 0
        %3084 = vmatpush1.bf16.xpose.msra.mxu0 0
        %3085 = vmatprep.mubr.bf16.mxu0 0
        %3086 = vmatmul.mubr.bf16.gmra.mrb[0].mxu0 %v1819
        %v3087 = vpop.f32.mrb[0].mxu0
        %v3088 = vadd.f32 0.0, %v3087
        %v3089 = vpop.f32.mrb[0].mxu0
        %v3090 = vpop.f32.mrb[0].mxu0
        %v3091 = vadd.f32 0.0, %v3090
        %v3092 = vpop.f32.mrb[0].mxu0
        %3093 = vdwg.mxu0
        %3094 = vmatprep.subr.bf16.mxu0 0
        %3095 = vmatpush1.bf16.xpose.msra.mxu0 %v1947
        %3096 = vmatprep.subr.bf16.mxu0 0
        %3097 = vmatpush1.bf16.xpose.msra.mxu0 0
        %3098 = vmatprep.subr.bf16.mxu0 0
        %3099 = vmatpush1.bf16.xpose.msra.mxu0 0
        %3100 = vmatprep.subr.bf16.mxu0 0
        %3101 = vmatpush1.bf16.xpose.msra.mxu0 0
        %3102 = vmatprep.subr.bf16.mxu0 0
        %3103 = vmatpush1.bf16.xpose.msra.mxu0 0
        %3104 = vmatprep.subr.bf16.mxu0 0
        %3105 = vmatpush1.bf16.xpose.msra.mxu0 0
        %3106 = vmatprep.subr.bf16.mxu0 0
        %3107 = vmatpush1.bf16.xpose.msra.mxu0 0
        %3108 = vmatprep.subr.bf16.mxu0 0
        %3109 = vmatpush1.bf16.xpose.msra.mxu0 0
        %3110 = vmatprep.subr.bf16.mxu0 0
        %3111 = vmatpush1.bf16.xpose.msra.mxu0 0
        %3112 = vmatprep.subr.bf16.mxu0 0
        %3113 = vmatpush1.bf16.xpose.msra.mxu0 0
        %3114 = vmatprep.subr.bf16.mxu0 0
        %3115 = vmatpush1.bf16.xpose.msra.mxu0 0
        %3116 = vmatprep.subr.bf16.mxu0 0
        %3117 = vmatpush1.bf16.xpose.msra.mxu0 0
        %3118 = vmatprep.subr.bf16.mxu0 0
        %3119 = vmatpush1.bf16.xpose.msra.mxu0 0
        %3120 = vmatprep.subr.bf16.mxu0 0
        %3121 = vmatpush1.bf16.xpose.msra.mxu0 0
        %3122 = vmatprep.subr.bf16.mxu0 0
        %3123 = vmatpush1.bf16.xpose.msra.mxu0 0
        %3124 = vmatprep.subr.bf16.mxu0 0
        %3125 = vmatpush1.bf16.xpose.msra.mxu0 0
        %3126 = vmatprep.mubr.bf16.mxu0 0
        %3127 = vmatmul.mubr.bf16.gmra.mrb[0].mxu0 %v1820
        %v3128 = vpop.f32.mrb[0].mxu0
        %v3129 = vadd.f32 0.0, %v3128
        %v3130 = vpop.f32.mrb[0].mxu0
        %v3131 = vpop.f32.mrb[0].mxu0
        %v3132 = vadd.f32 0.0, %v3131
        %v3133 = vpop.f32.mrb[0].mxu0
        %3134 = vdwg.mxu0
        %vm3135 = vcmask 130048
        %v3136 = vsel %vm3135, %v2791, -inf
        %3137 = vmax.xlane.f32.xlu0 %v3136
        %v3138 = vpop.xlane.xlu0 %3137
        %v3139 = vsel %vm3135, %v2792, -inf
        %3140 = vmax.xlane.f32.xlu0 %v3139
        %v3141 = vpop.xlane.xlu0 %3140
        %v3142 = vsel %vm3135, %v2793, -inf
        %3143 = vmax.xlane.f32.xlu0 %v3142
        %v3144 = vpop.xlane.xlu0 %3143
        %v3145 = vsel %vm3135, %v2794, -inf
        %3146 = vmax.xlane.f32.xlu0 %v3145
        %v3147 = vpop.xlane.xlu0 %3146
        %v3148 = vsel %vm3135, %v2795, -inf
        %3149 = vmax.xlane.f32.xlu0 %v3148
        %v3150 = vpop.xlane.xlu0 %3149
        %v3151 = vsel %vm3135, %v2796, -inf
        %3152 = vmax.xlane.f32.xlu0 %v3151
        %v3153 = vpop.xlane.xlu0 %3152
        %v3154 = vsel %vm3135, %v2797, -inf
        %3155 = vmax.xlane.f32.xlu0 %v3154
        %v3156 = vpop.xlane.xlu0 %3155
        %v3157 = vsel %vm3135, %v2798, -inf
        %3158 = vmax.xlane.f32.xlu0 %v3157
        %v3159 = vpop.xlane.xlu0 %3158
        %v3160 = vsel %vm3135, %v2799, -inf
        %3161 = vmax.xlane.f32.xlu0 %v3160
        %v3162 = vpop.xlane.xlu0 %3161
        %v3163 = vsel %vm3135, %v2800, -inf
        %3164 = vmax.xlane.f32.xlu0 %v3163
        %v3165 = vpop.xlane.xlu0 %3164
        %v3166 = vsel %vm3135, %v2801, -inf
        %3167 = vmax.xlane.f32.xlu0 %v3166
        %v3168 = vpop.xlane.xlu0 %3167
        %v3169 = vsel %vm3135, %v2802, -inf
        %3170 = vmax.xlane.f32.xlu0 %v3169
        %v3171 = vpop.xlane.xlu0 %3170
        %v3172 = vsel %vm3135, %v2803, -inf
        %3173 = vmax.xlane.f32.xlu0 %v3172
        %v3174 = vpop.xlane.xlu0 %3173
        %v3175 = vsel %vm3135, %v2804, -inf
        %3176 = vmax.xlane.f32.xlu0 %v3175
        %v3177 = vpop.xlane.xlu0 %3176
        %v3178 = vsel %vm3135, %v2805, -inf
        %3179 = vmax.xlane.f32.xlu0 %v3178
        %v3180 = vpop.xlane.xlu0 %3179
        %v3181 = vsel %vm3135, %v2806, -inf
        %3182 = vmax.xlane.f32.xlu0 %v3181
        %v3183 = vpop.xlane.xlu0 %3182
        %v3184 = vsel %vm3135, %v2842, -inf
        %3185 = vmax.xlane.f32.xlu0 %v3184
        %v3186 = vpop.xlane.xlu0 %3185
        %v3187 = vsel %vm3135, %v2845, -inf
        %3188 = vmax.xlane.f32.xlu0 %v3187
        %v3189 = vpop.xlane.xlu0 %3188
        %v3190 = vsel %vm3135, %v2883, -inf
        %3191 = vmax.xlane.f32.xlu0 %v3190
        %v3192 = vpop.xlane.xlu0 %3191
        %v3193 = vsel %vm3135, %v2886, -inf
        %3194 = vmax.xlane.f32.xlu0 %v3193
        %v3195 = vpop.xlane.xlu0 %3194
        %v3196 = vsel %vm3135, %v2924, -inf
        %3197 = vmax.xlane.f32.xlu0 %v3196
        %v3198 = vpop.xlane.xlu0 %3197
        %v3199 = vsel %vm3135, %v2927, -inf
        %3200 = vmax.xlane.f32.xlu0 %v3199
        %v3201 = vpop.xlane.xlu0 %3200
        %v3202 = vsel %vm3135, %v2965, -inf
        %3203 = vmax.xlane.f32.xlu0 %v3202
        %v3204 = vpop.xlane.xlu0 %3203
        %v3205 = vsel %vm3135, %v2968, -inf
        %3206 = vmax.xlane.f32.xlu0 %v3205
        %v3207 = vpop.xlane.xlu0 %3206
        %v3208 = vsel %vm3135, %v3006, -inf
        %3209 = vmax.xlane.f32.xlu0 %v3208
        %v3210 = vpop.xlane.xlu0 %3209
        %v3211 = vsel %vm3135, %v3009, -inf
        %3212 = vmax.xlane.f32.xlu0 %v3211
        %v3213 = vpop.xlane.xlu0 %3212
        %v3214 = vsel %vm3135, %v3047, -inf
        %3215 = vmax.xlane.f32.xlu0 %v3214
        %v3216 = vpop.xlane.xlu0 %3215
        %v3217 = vsel %vm3135, %v3050, -inf
        %3218 = vmax.xlane.f32.xlu0 %v3217
        %v3219 = vpop.xlane.xlu0 %3218
        %v3220 = vsel %vm3135, %v3088, -inf
        %3221 = vmax.xlane.f32.xlu0 %v3220
        %v3222 = vpop.xlane.xlu0 %3221
        %v3223 = vsel %vm3135, %v3091, -inf
        %3224 = vmax.xlane.f32.xlu0 %v3223
        %v3225 = vpop.xlane.xlu0 %3224
        %v3226 = vsel %vm3135, %v3129, -inf
        %3227 = vmax.xlane.f32.xlu0 %v3226
        %v3228 = vpop.xlane.xlu0 %3227
        %v3229 = vsel %vm3135, %v3132, -inf
        %3230 = vmax.xlane.f32.xlu0 %v3229
        %v3231 = vpop.xlane.xlu0 %3230
        %v3248 = vlaneseq
        %v3249 = vshrl.u32 %v3248, 7
        %v3250 = vsub.s32 %v2787, %v3249
        %v3251 = vrot.slane %v3138, %v3250
        %v3252 = vlaneseq
        %v3253 = vshrl.u32 %v3252, 7
        %v3254 = vsub.s32 %v2787, %v3253
        %v3255 = vrot.slane %v3141, %v3254
        %v3256 = vlaneseq
        %v3257 = vshrl.u32 %v3256, 7
        %v3258 = vsub.s32 %v2787, %v3257
        %v3259 = vrot.slane %v3144, %v3258
        %v3260 = vlaneseq
        %v3261 = vshrl.u32 %v3260, 7
        %v3262 = vsub.s32 %v2787, %v3261
        %v3263 = vrot.slane %v3147, %v3262
        %v3264 = vlaneseq
        %v3265 = vshrl.u32 %v3264, 7
        %v3266 = vsub.s32 %v2787, %v3265
        %v3267 = vrot.slane %v3150, %v3266
        %v3268 = vlaneseq
        %v3269 = vshrl.u32 %v3268, 7
        %v3270 = vsub.s32 %v2787, %v3269
        %v3271 = vrot.slane %v3153, %v3270
        %v3272 = vlaneseq
        %v3273 = vshrl.u32 %v3272, 7
        %v3274 = vsub.s32 %v2787, %v3273
        %v3275 = vrot.slane %v3156, %v3274
        %v3276 = vlaneseq
        %v3277 = vshrl.u32 %v3276, 7
        %v3278 = vsub.s32 %v2787, %v3277
        %v3279 = vrot.slane %v3159, %v3278
        %v3280 = vlaneseq
        %v3281 = vshrl.u32 %v3280, 7
        %v3282 = vsub.s32 %v2787, %v3281
        %v3283 = vrot.slane %v3162, %v3282
        %v3284 = vlaneseq
        %v3285 = vshrl.u32 %v3284, 7
        %v3286 = vsub.s32 %v2787, %v3285
        %v3287 = vrot.slane %v3165, %v3286
        %v3288 = vlaneseq
        %v3289 = vshrl.u32 %v3288, 7
        %v3290 = vsub.s32 %v2787, %v3289
        %v3291 = vrot.slane %v3168, %v3290
        %v3292 = vlaneseq
        %v3293 = vshrl.u32 %v3292, 7
        %v3294 = vsub.s32 %v2787, %v3293
        %v3295 = vrot.slane %v3171, %v3294
        %v3296 = vlaneseq
        %v3297 = vshrl.u32 %v3296, 7
        %v3298 = vsub.s32 %v2787, %v3297
        %v3299 = vrot.slane %v3174, %v3298
        %v3300 = vlaneseq
        %v3301 = vshrl.u32 %v3300, 7
        %v3302 = vsub.s32 %v2787, %v3301
        %v3303 = vrot.slane %v3177, %v3302
        %v3304 = vlaneseq
        %v3305 = vshrl.u32 %v3304, 7
        %v3306 = vsub.s32 %v2787, %v3305
        %v3307 = vrot.slane %v3180, %v3306
        %v3308 = vlaneseq
        %v3309 = vshrl.u32 %v3308, 7
        %v3310 = vsub.s32 %v2787, %v3309
        %v3311 = vrot.slane %v3183, %v3310
        %vm3312 = vcmask 1041409
        %v3313 = vsel %vm3312, %v3255, %v3251
        %vm3314 = vcmask 1042434
        %v3315 = vsel %vm3314, %v3259, %v3313
        %vm3316 = vcmask 1043459
        %v3317 = vsel %vm3316, %v3263, %v3315
        %vm3318 = vcmask 1044484
        %v3319 = vsel %vm3318, %v3267, %v3317
        %vm3320 = vcmask 1045509
        %v3321 = vsel %vm3320, %v3271, %v3319
        %vm3322 = vcmask 1046534
        %v3323 = vsel %vm3322, %v3275, %v3321
        %vm3324 = vcmask 1047559
        %v3325 = vsel %vm3324, %v3279, %v3323
        %v3326 = vsel %vm3312, %v3287, %v3283
        %v3327 = vsel %vm3314, %v3291, %v3326
        %v3328 = vsel %vm3316, %v3295, %v3327
        %v3329 = vsel %vm3318, %v3299, %v3328
        %v3330 = vsel %vm3320, %v3303, %v3329
        %v3331 = vsel %vm3322, %v3307, %v3330
        %v3332 = vsel %vm3324, %v3311, %v3331
        %3335 = vxpose.xlu0.b32.start [1/16] %v3325, 128
        %3336 = vxpose.xlu0.b32.cont [2/16] %v3332, 128
        %3337 = vxpose.xlu0.b32.cont [3/16] 0.0, 128
        %3338 = vxpose.xlu0.b32.cont [4/16] 0.0, 128
        %3339 = vxpose.xlu0.b32.cont [5/16] 0.0, 128
        %3340 = vxpose.xlu0.b32.cont [6/16] 0.0, 128
        %3341 = vxpose.xlu0.b32.cont [7/16] 0.0, 128
        %3342 = vxpose.xlu0.b32.cont [8/16] 0.0, 128
        %3343 = vxpose.xlu0.b32.cont [9/16] 0.0, 128
        %3344 = vxpose.xlu0.b32.cont [10/16] 0.0, 128
        %3345 = vxpose.xlu0.b32.cont [11/16] 0.0, 128
        %3346 = vxpose.xlu0.b32.cont [12/16] 0.0, 128
        %3347 = vxpose.xlu0.b32.cont [13/16] 0.0, 128
        %3348 = vxpose.xlu0.b32.cont [14/16] 0.0, 128
        %3349 = vxpose.xlu0.b32.cont [15/16] 0.0, 128
        %3350 = vxpose.xlu0.b32.end [16/16] 0.0, 128
        %v3351 = vpop.trf.xlu0
        %v3352 = vpop.trf.xlu0
        %v3353 = vpop.trf.xlu0
        %v3354 = vpop.trf.xlu0
        %v3355 = vpop.trf.xlu0
        %v3356 = vpop.trf.xlu0
        %v3357 = vpop.trf.xlu0
        %v3358 = vpop.trf.xlu0
        %v3359 = vpop.trf.xlu0
        %v3360 = vpop.trf.xlu0
        %v3361 = vpop.trf.xlu0
        %v3362 = vpop.trf.xlu0
        %v3363 = vpop.trf.xlu0
        %v3364 = vpop.trf.xlu0
        %v3365 = vpop.trf.xlu0
        %v3366 = vpop.trf.xlu0
        %v3383 = vlaneseq
        %v3384 = vshrl.u32 %v3383, 7
        %v3385 = vsub.s32 %v2787, %v3384
        %v3386 = vrot.slane %v3186, %v3385
        %v3387 = vadd.s32 %v2787, 4294967288
        %v3388 = vlaneseq
        %v3389 = vshrl.u32 %v3388, 7
        %v3390 = vsub.s32 %v3387, %v3389
        %v3391 = vrot.slane %v3189, %v3390
        %vm3392 = vcmask 130112
        %v3393 = vsel %vm3392, %v3391, %v3386
        %v3394 = vlaneseq
        %v3395 = vshrl.u32 %v3394, 7
        %v3396 = vsub.s32 %v2787, %v3395
        %v3397 = vrot.slane %v3192, %v3396
        %v3398 = vlaneseq
        %v3399 = vshrl.u32 %v3398, 7
        %v3400 = vsub.s32 %v3387, %v3399
        %v3401 = vrot.slane %v3195, %v3400
        %v3402 = vsel %vm3392, %v3401, %v3397
        %v3403 = vlaneseq
        %v3404 = vshrl.u32 %v3403, 7
        %v3405 = vsub.s32 %v2787, %v3404
        %v3406 = vrot.slane %v3198, %v3405
        %v3407 = vlaneseq
        %v3408 = vshrl.u32 %v3407, 7
        %v3409 = vsub.s32 %v3387, %v3408
        %v3410 = vrot.slane %v3201, %v3409
        %v3411 = vsel %vm3392, %v3410, %v3406
        %v3412 = vlaneseq
        %v3413 = vshrl.u32 %v3412, 7
        %v3414 = vsub.s32 %v2787, %v3413
        %v3415 = vrot.slane %v3204, %v3414
        %v3416 = vlaneseq
        %v3417 = vshrl.u32 %v3416, 7
        %v3418 = vsub.s32 %v3387, %v3417
        %v3419 = vrot.slane %v3207, %v3418
        %v3420 = vsel %vm3392, %v3419, %v3415
        %v3421 = vlaneseq
        %v3422 = vshrl.u32 %v3421, 7
        %v3423 = vsub.s32 %v2787, %v3422
        %v3424 = vrot.slane %v3210, %v3423
        %v3425 = vlaneseq
        %v3426 = vshrl.u32 %v3425, 7
        %v3427 = vsub.s32 %v3387, %v3426
        %v3428 = vrot.slane %v3213, %v3427
        %v3429 = vsel %vm3392, %v3428, %v3424
        %v3430 = vlaneseq
        %v3431 = vshrl.u32 %v3430, 7
        %v3432 = vsub.s32 %v2787, %v3431
        %v3433 = vrot.slane %v3216, %v3432
        %v3434 = vlaneseq
        %v3435 = vshrl.u32 %v3434, 7
        %v3436 = vsub.s32 %v3387, %v3435
        %v3437 = vrot.slane %v3219, %v3436
        %v3438 = vsel %vm3392, %v3437, %v3433
        %v3439 = vlaneseq
        %v3440 = vshrl.u32 %v3439, 7
        %v3441 = vsub.s32 %v2787, %v3440
        %v3442 = vrot.slane %v3222, %v3441
        %v3443 = vlaneseq
        %v3444 = vshrl.u32 %v3443, 7
        %v3445 = vsub.s32 %v3387, %v3444
        %v3446 = vrot.slane %v3225, %v3445
        %v3447 = vsel %vm3392, %v3446, %v3442
        %v3448 = vlaneseq
        %v3449 = vshrl.u32 %v3448, 7
        %v3450 = vsub.s32 %v2787, %v3449
        %v3451 = vrot.slane %v3228, %v3450
        %v3452 = vlaneseq
        %v3453 = vshrl.u32 %v3452, 7
        %v3454 = vsub.s32 %v3387, %v3453
        %v3455 = vrot.slane %v3231, %v3454
        %v3456 = vsel %vm3392, %v3455, %v3451
        %v3457 = vsel %vm3312, %v3402, %v3393
        %v3458 = vsel %vm3314, %v3411, %v3457
        %v3459 = vsel %vm3316, %v3420, %v3458
        %v3460 = vsel %vm3318, %v3429, %v3459
        %v3461 = vsel %vm3320, %v3438, %v3460
        %v3462 = vsel %vm3322, %v3447, %v3461
        %v3463 = vsel %vm3324, %v3456, %v3462
        %v3465 = vmax.f32 %v3351, %v3463
        %3466 = vxpose.xlu0.b32.start [1/16] %v3465, 128
        %3467 = vxpose.xlu0.b32.cont [2/16] 0.0, 128
        %3468 = vxpose.xlu0.b32.cont [3/16] 0.0, 128
        %3469 = vxpose.xlu0.b32.cont [4/16] 0.0, 128
        %3470 = vxpose.xlu0.b32.cont [5/16] 0.0, 128
        %3471 = vxpose.xlu0.b32.cont [6/16] 0.0, 128
        %3472 = vxpose.xlu0.b32.cont [7/16] 0.0, 128
        %3473 = vxpose.xlu0.b32.cont [8/16] 0.0, 128
        %3474 = vxpose.xlu0.b32.cont [9/16] 0.0, 128
        %3475 = vxpose.xlu0.b32.cont [10/16] 0.0, 128
        %3476 = vxpose.xlu0.b32.cont [11/16] 0.0, 128
        %3477 = vxpose.xlu0.b32.cont [12/16] 0.0, 128
        %3478 = vxpose.xlu0.b32.cont [13/16] 0.0, 128
        %3479 = vxpose.xlu0.b32.cont [14/16] 0.0, 128
        %3480 = vxpose.xlu0.b32.cont [15/16] 0.0, 128
        %3481 = vxpose.xlu0.b32.end [16/16] 0.0, 128
        %v3482 = vpop.trf.xlu0
        %v3483 = vpop.trf.xlu0
        %v3484 = vpop.trf.xlu0
        %v3485 = vpop.trf.xlu0
        %v3486 = vpop.trf.xlu0
        %v3487 = vpop.trf.xlu0
        %v3488 = vpop.trf.xlu0
        %v3489 = vpop.trf.xlu0
        %v3490 = vpop.trf.xlu0
        %v3491 = vpop.trf.xlu0
        %v3492 = vpop.trf.xlu0
        %v3493 = vpop.trf.xlu0
        %v3494 = vpop.trf.xlu0
        %v3495 = vpop.trf.xlu0
        %v3496 = vpop.trf.xlu0
        %v3497 = vpop.trf.xlu0
        %v3498 = vlaneseq
        %v3499 = vshrl.u32 %v3498, 7
        %v3500 = vsub.s32 0, %v3499
        %v3501 = vrot.slane %v3482, %v3500
        %3503 = vbcast.lane.b32.xlu0 %v3501, 256
        %v3504 = vpop.permute.xlu0 %3503
        %v3505 = vlaneseq
        %v3506 = vshrl.u32 %v3505, 7
        %v3507 = vsub.s32 1, %v3506
        %v3508 = vrot.slane %v3482, %v3507
        %3510 = vbcast.lane.b32.xlu0 %v3508, 256
        %v3511 = vpop.permute.xlu0 %3510
        %v3512 = vlaneseq
        %v3513 = vshrl.u32 %v3512, 7
        %v3514 = vsub.s32 2, %v3513
        %v3515 = vrot.slane %v3482, %v3514
        %3517 = vbcast.lane.b32.xlu0 %v3515, 256
        %v3518 = vpop.permute.xlu0 %3517
        %v3519 = vlaneseq
        %v3520 = vshrl.u32 %v3519, 7
        %v3521 = vsub.s32 3, %v3520
        %v3522 = vrot.slane %v3482, %v3521
        %3524 = vbcast.lane.b32.xlu0 %v3522, 256
        %v3525 = vpop.permute.xlu0 %3524
        %v3526 = vlaneseq
        %v3527 = vshrl.u32 %v3526, 7
        %v3528 = vsub.s32 4, %v3527
        %v3529 = vrot.slane %v3482, %v3528
        %3531 = vbcast.lane.b32.xlu0 %v3529, 256
        %v3532 = vpop.permute.xlu0 %3531
        %v3533 = vlaneseq
        %v3534 = vshrl.u32 %v3533, 7
        %v3535 = vsub.s32 5, %v3534
        %v3536 = vrot.slane %v3482, %v3535
        %3538 = vbcast.lane.b32.xlu0 %v3536, 256
        %v3539 = vpop.permute.xlu0 %3538
        %v3540 = vlaneseq
        %v3541 = vshrl.u32 %v3540, 7
        %v3542 = vsub.s32 6, %v3541
        %v3543 = vrot.slane %v3482, %v3542
        %3545 = vbcast.lane.b32.xlu0 %v3543, 256
        %v3546 = vpop.permute.xlu0 %3545
        %v3547 = vlaneseq
        %v3548 = vshrl.u32 %v3547, 7
        %v3549 = vsub.s32 7, %v3548
        %v3550 = vrot.slane %v3482, %v3549
        %3552 = vbcast.lane.b32.xlu0 %v3550, 256
        %v3553 = vpop.permute.xlu0 %3552
        %v3554 = vlaneseq
        %v3555 = vshrl.u32 %v3554, 7
        %v3556 = vsub.s32 0, %v3555
        %v3557 = vrot.slane %v3483, %v3556
        %3559 = vbcast.lane.b32.xlu0 %v3557, 256
        %v3560 = vpop.permute.xlu0 %3559
        %v3561 = vlaneseq
        %v3562 = vshrl.u32 %v3561, 7
        %v3563 = vsub.s32 1, %v3562
        %v3564 = vrot.slane %v3483, %v3563
        %3566 = vbcast.lane.b32.xlu0 %v3564, 256
        %v3567 = vpop.permute.xlu0 %3566
        %v3568 = vlaneseq
        %v3569 = vshrl.u32 %v3568, 7
        %v3570 = vsub.s32 2, %v3569
        %v3571 = vrot.slane %v3483, %v3570
        %3573 = vbcast.lane.b32.xlu0 %v3571, 256
        %v3574 = vpop.permute.xlu0 %3573
        %v3575 = vlaneseq
        %v3576 = vshrl.u32 %v3575, 7
        %v3577 = vsub.s32 3, %v3576
        %v3578 = vrot.slane %v3483, %v3577
        %3580 = vbcast.lane.b32.xlu0 %v3578, 256
        %v3581 = vpop.permute.xlu0 %3580
        %v3582 = vlaneseq
        %v3583 = vshrl.u32 %v3582, 7
        %v3584 = vsub.s32 4, %v3583
        %v3585 = vrot.slane %v3483, %v3584
        %3587 = vbcast.lane.b32.xlu0 %v3585, 256
        %v3588 = vpop.permute.xlu0 %3587
        %v3589 = vlaneseq
        %v3590 = vshrl.u32 %v3589, 7
        %v3591 = vsub.s32 5, %v3590
        %v3592 = vrot.slane %v3483, %v3591
        %3594 = vbcast.lane.b32.xlu0 %v3592, 256
        %v3595 = vpop.permute.xlu0 %3594
        %v3596 = vlaneseq
        %v3597 = vshrl.u32 %v3596, 7
        %v3598 = vsub.s32 6, %v3597
        %v3599 = vrot.slane %v3483, %v3598
        %3601 = vbcast.lane.b32.xlu0 %v3599, 256
        %v3602 = vpop.permute.xlu0 %3601
        %v3603 = vlaneseq
        %v3604 = vshrl.u32 %v3603, 7
        %v3605 = vsub.s32 7, %v3604
        %v3606 = vrot.slane %v3483, %v3605
        %3608 = vbcast.lane.b32.xlu0 %v3606, 256
        %v3609 = vpop.permute.xlu0 %3608
        %v3610 = vsub.f32 %v2791, %v3504
        %v3611 = vsub.f32 %v2792, %v3511
        %v3612 = vsub.f32 %v2793, %v3518
        %v3613 = vsub.f32 %v2794, %v3525
        %v3614 = vsub.f32 %v2795, %v3532
        %v3615 = vsub.f32 %v2796, %v3539
        %v3616 = vsub.f32 %v2797, %v3546
        %v3617 = vsub.f32 %v2798, %v3553
        %v3618 = vsub.f32 %v2799, %v3560
        %v3619 = vsub.f32 %v2800, %v3567
        %v3620 = vsub.f32 %v2801, %v3574
        %v3621 = vsub.f32 %v2802, %v3581
        %v3622 = vsub.f32 %v2803, %v3588
        %v3623 = vsub.f32 %v2804, %v3595
        %v3624 = vsub.f32 %v2805, %v3602
        %v3625 = vsub.f32 %v2806, %v3609
        %v3626 = vmul.f32 %v3610, 1.442695
        %v3627 = vpow.pop %v3626
        %v3628 = vmul.f32 %v3611, 1.442695
        %v3629 = vpow.pop %v3628
        %v3630 = vmul.f32 %v3612, 1.442695
        %v3631 = vpow.pop %v3630
        %v3632 = vmul.f32 %v3613, 1.442695
        %v3633 = vpow.pop %v3632
        %v3634 = vmul.f32 %v3614, 1.442695
        %v3635 = vpow.pop %v3634
        %v3636 = vmul.f32 %v3615, 1.442695
        %v3637 = vpow.pop %v3636
        %v3638 = vmul.f32 %v3616, 1.442695
        %v3639 = vpow.pop %v3638
        %v3640 = vmul.f32 %v3617, 1.442695
        %v3641 = vpow.pop %v3640
        %v3642 = vmul.f32 %v3618, 1.442695
        %v3643 = vpow.pop %v3642
        %v3644 = vmul.f32 %v3619, 1.442695
        %v3645 = vpow.pop %v3644
        %v3646 = vmul.f32 %v3620, 1.442695
        %v3647 = vpow.pop %v3646
        %v3648 = vmul.f32 %v3621, 1.442695
        %v3649 = vpow.pop %v3648
        %v3650 = vmul.f32 %v3622, 1.442695
        %v3651 = vpow.pop %v3650
        %v3652 = vmul.f32 %v3623, 1.442695
        %v3653 = vpow.pop %v3652
        %v3654 = vmul.f32 %v3624, 1.442695
        %v3655 = vpow.pop %v3654
        %v3656 = vmul.f32 %v3625, 1.442695
        %v3657 = vpow.pop %v3656
        %v3658 = vlaneseq
        %v3659 = vshrl.u32 %v3658, 7
        %v3660 = vsub.s32 0, %v3659
        %v3661 = vrot.slane %v3465, %v3660
        %3663 = vbcast.lane.b32.xlu0 %v3661, 256
        %v3664 = vpop.permute.xlu0 %3663
        %s3666 = sor.u32 256, 8
        %3667 = vbcast.lane.b32.xlu0 %v3661, %s3666
        %v3668 = vpop.permute.xlu0 %3667
        %v3669 = vlaneseq
        %v3670 = vshrl.u32 %v3669, 7
        %v3671 = vsub.s32 1, %v3670
        %v3672 = vrot.slane %v3465, %v3671
        %3674 = vbcast.lane.b32.xlu0 %v3672, 256
        %v3675 = vpop.permute.xlu0 %3674
        %s3677 = sor.u32 256, 8
        %3678 = vbcast.lane.b32.xlu0 %v3672, %s3677
        %v3679 = vpop.permute.xlu0 %3678
        %v3680 = vlaneseq
        %v3681 = vshrl.u32 %v3680, 7
        %v3682 = vsub.s32 2, %v3681
        %v3683 = vrot.slane %v3465, %v3682
        %3685 = vbcast.lane.b32.xlu0 %v3683, 256
        %v3686 = vpop.permute.xlu0 %3685
        %s3688 = sor.u32 256, 8
        %3689 = vbcast.lane.b32.xlu0 %v3683, %s3688
        %v3690 = vpop.permute.xlu0 %3689
        %v3691 = vlaneseq
        %v3692 = vshrl.u32 %v3691, 7
        %v3693 = vsub.s32 3, %v3692
        %v3694 = vrot.slane %v3465, %v3693
        %3696 = vbcast.lane.b32.xlu0 %v3694, 256
        %v3697 = vpop.permute.xlu0 %3696
        %s3699 = sor.u32 256, 8
        %3700 = vbcast.lane.b32.xlu0 %v3694, %s3699
        %v3701 = vpop.permute.xlu0 %3700
        %v3702 = vlaneseq
        %v3703 = vshrl.u32 %v3702, 7
        %v3704 = vsub.s32 4, %v3703
        %v3705 = vrot.slane %v3465, %v3704
        %3707 = vbcast.lane.b32.xlu0 %v3705, 256
        %v3708 = vpop.permute.xlu0 %3707
        %s3710 = sor.u32 256, 8
        %3711 = vbcast.lane.b32.xlu0 %v3705, %s3710
        %v3712 = vpop.permute.xlu0 %3711
        %v3713 = vlaneseq
        %v3714 = vshrl.u32 %v3713, 7
        %v3715 = vsub.s32 5, %v3714
        %v3716 = vrot.slane %v3465, %v3715
        %3718 = vbcast.lane.b32.xlu0 %v3716, 256
        %v3719 = vpop.permute.xlu0 %3718
        %s3721 = sor.u32 256, 8
        %3722 = vbcast.lane.b32.xlu0 %v3716, %s3721
        %v3723 = vpop.permute.xlu0 %3722
        %v3724 = vlaneseq
        %v3725 = vshrl.u32 %v3724, 7
        %v3726 = vsub.s32 6, %v3725
        %v3727 = vrot.slane %v3465, %v3726
        %3729 = vbcast.lane.b32.xlu0 %v3727, 256
        %v3730 = vpop.permute.xlu0 %3729
        %s3732 = sor.u32 256, 8
        %3733 = vbcast.lane.b32.xlu0 %v3727, %s3732
        %v3734 = vpop.permute.xlu0 %3733
        %v3735 = vlaneseq
        %v3736 = vshrl.u32 %v3735, 7
        %v3737 = vsub.s32 7, %v3736
        %v3738 = vrot.slane %v3465, %v3737
        %3740 = vbcast.lane.b32.xlu0 %v3738, 256
        %v3741 = vpop.permute.xlu0 %3740
        %s3743 = sor.u32 256, 8
        %3744 = vbcast.lane.b32.xlu0 %v3738, %s3743
        %v3745 = vpop.permute.xlu0 %3744
        %v3746 = vsub.f32 %v2842, %v3664
        %v3747 = vsub.f32 %v2845, %v3668
        %v3748 = vsub.f32 %v2883, %v3675
        %v3749 = vsub.f32 %v2886, %v3679
        %v3750 = vsub.f32 %v2924, %v3686
        %v3751 = vsub.f32 %v2927, %v3690
        %v3752 = vsub.f32 %v2965, %v3697
        %v3753 = vsub.f32 %v2968, %v3701
        %v3754 = vsub.f32 %v3006, %v3708
        %v3755 = vsub.f32 %v3009, %v3712
        %v3756 = vsub.f32 %v3047, %v3719
        %v3757 = vsub.f32 %v3050, %v3723
        %v3758 = vsub.f32 %v3088, %v3730
        %v3759 = vsub.f32 %v3091, %v3734
        %v3760 = vsub.f32 %v3129, %v3741
        %v3761 = vsub.f32 %v3132, %v3745
        %v3762 = vmul.f32 %v3746, 1.442695
        %v3763 = vpow.pop %v3762
        %v3764 = vmul.f32 %v3747, 1.442695
        %v3765 = vpow.pop %v3764
        %v3766 = vmul.f32 %v3748, 1.442695
        %v3767 = vpow.pop %v3766
        %v3768 = vmul.f32 %v3749, 1.442695
        %v3769 = vpow.pop %v3768
        %v3770 = vmul.f32 %v3750, 1.442695
        %v3771 = vpow.pop %v3770
        %v3772 = vmul.f32 %v3751, 1.442695
        %v3773 = vpow.pop %v3772
        %v3774 = vmul.f32 %v3752, 1.442695
        %v3775 = vpow.pop %v3774
        %v3776 = vmul.f32 %v3753, 1.442695
        %v3777 = vpow.pop %v3776
        %v3778 = vmul.f32 %v3754, 1.442695
        %v3779 = vpow.pop %v3778
        %v3780 = vmul.f32 %v3755, 1.442695
        %v3781 = vpow.pop %v3780
        %v3782 = vmul.f32 %v3756, 1.442695
        %v3783 = vpow.pop %v3782
        %v3784 = vmul.f32 %v3757, 1.442695
        %v3785 = vpow.pop %v3784
        %v3786 = vmul.f32 %v3758, 1.442695
        %v3787 = vpow.pop %v3786
        %v3788 = vmul.f32 %v3759, 1.442695
        %v3789 = vpow.pop %v3788
        %v3790 = vmul.f32 %v3760, 1.442695
        %v3791 = vpow.pop %v3790
        %v3792 = vmul.f32 %v3761, 1.442695
        %v3793 = vpow.pop %v3792
        %v3794 = vsel %vm3135, %v3627, 0.0
        %3795 = vadd.xlane.f32.xlu0 %v3794
        %v3796 = vpop.xlane.xlu0 %3795
        %v3797 = vsel %vm3135, %v3629, 0.0
        %3798 = vadd.xlane.f32.xlu0 %v3797
        %v3799 = vpop.xlane.xlu0 %3798
        %v3800 = vsel %vm3135, %v3631, 0.0
        %3801 = vadd.xlane.f32.xlu0 %v3800
        %v3802 = vpop.xlane.xlu0 %3801
        %v3803 = vsel %vm3135, %v3633, 0.0
        %3804 = vadd.xlane.f32.xlu0 %v3803
        %v3805 = vpop.xlane.xlu0 %3804
        %v3806 = vsel %vm3135, %v3635, 0.0
        %3807 = vadd.xlane.f32.xlu0 %v3806
        %v3808 = vpop.xlane.xlu0 %3807
        %v3809 = vsel %vm3135, %v3637, 0.0
        %3810 = vadd.xlane.f32.xlu0 %v3809
        %v3811 = vpop.xlane.xlu0 %3810
        %v3812 = vsel %vm3135, %v3639, 0.0
        %3813 = vadd.xlane.f32.xlu0 %v3812
        %v3814 = vpop.xlane.xlu0 %3813
        %v3815 = vsel %vm3135, %v3641, 0.0
        %3816 = vadd.xlane.f32.xlu0 %v3815
        %v3817 = vpop.xlane.xlu0 %3816
        %v3818 = vsel %vm3135, %v3643, 0.0
        %3819 = vadd.xlane.f32.xlu0 %v3818
        %v3820 = vpop.xlane.xlu0 %3819
        %v3821 = vsel %vm3135, %v3645, 0.0
        %3822 = vadd.xlane.f32.xlu0 %v3821
        %v3823 = vpop.xlane.xlu0 %3822
        %v3824 = vsel %vm3135, %v3647, 0.0
        %3825 = vadd.xlane.f32.xlu0 %v3824
        %v3826 = vpop.xlane.xlu0 %3825
        %v3827 = vsel %vm3135, %v3649, 0.0
        %3828 = vadd.xlane.f32.xlu0 %v3827
        %v3829 = vpop.xlane.xlu0 %3828
        %v3830 = vsel %vm3135, %v3651, 0.0
        %3831 = vadd.xlane.f32.xlu0 %v3830
        %v3832 = vpop.xlane.xlu0 %3831
        %v3833 = vsel %vm3135, %v3653, 0.0
        %3834 = vadd.xlane.f32.xlu0 %v3833
        %v3835 = vpop.xlane.xlu0 %3834
        %v3836 = vsel %vm3135, %v3655, 0.0
        %3837 = vadd.xlane.f32.xlu0 %v3836
        %v3838 = vpop.xlane.xlu0 %3837
        %v3839 = vsel %vm3135, %v3657, 0.0
        %3840 = vadd.xlane.f32.xlu0 %v3839
        %v3841 = vpop.xlane.xlu0 %3840
        %v3858 = vlaneseq
        %v3859 = vshrl.u32 %v3858, 7
        %v3860 = vsub.s32 %v2787, %v3859
        %v3861 = vrot.slane %v3796, %v3860
        %v3862 = vlaneseq
        %v3863 = vshrl.u32 %v3862, 7
        %v3864 = vsub.s32 %v2787, %v3863
        %v3865 = vrot.slane %v3799, %v3864
        %v3866 = vlaneseq
        %v3867 = vshrl.u32 %v3866, 7
        %v3868 = vsub.s32 %v2787, %v3867
        %v3869 = vrot.slane %v3802, %v3868
        %v3870 = vlaneseq
        %v3871 = vshrl.u32 %v3870, 7
        %v3872 = vsub.s32 %v2787, %v3871
        %v3873 = vrot.slane %v3805, %v3872
        %v3874 = vlaneseq
        %v3875 = vshrl.u32 %v3874, 7
        %v3876 = vsub.s32 %v2787, %v3875
        %v3877 = vrot.slane %v3808, %v3876
        %v3878 = vlaneseq
        %v3879 = vshrl.u32 %v3878, 7
        %v3880 = vsub.s32 %v2787, %v3879
        %v3881 = vrot.slane %v3811, %v3880
        %v3882 = vlaneseq
        %v3883 = vshrl.u32 %v3882, 7
        %v3884 = vsub.s32 %v2787, %v3883
        %v3885 = vrot.slane %v3814, %v3884
        %v3886 = vlaneseq
        %v3887 = vshrl.u32 %v3886, 7
        %v3888 = vsub.s32 %v2787, %v3887
        %v3889 = vrot.slane %v3817, %v3888
        %v3890 = vlaneseq
        %v3891 = vshrl.u32 %v3890, 7
        %v3892 = vsub.s32 %v2787, %v3891
        %v3893 = vrot.slane %v3820, %v3892
        %v3894 = vlaneseq
        %v3895 = vshrl.u32 %v3894, 7
        %v3896 = vsub.s32 %v2787, %v3895
        %v3897 = vrot.slane %v3823, %v3896
        %v3898 = vlaneseq
        %v3899 = vshrl.u32 %v3898, 7
        %v3900 = vsub.s32 %v2787, %v3899
        %v3901 = vrot.slane %v3826, %v3900
        %v3902 = vlaneseq
        %v3903 = vshrl.u32 %v3902, 7
        %v3904 = vsub.s32 %v2787, %v3903
        %v3905 = vrot.slane %v3829, %v3904
        %v3906 = vlaneseq
        %v3907 = vshrl.u32 %v3906, 7
        %v3908 = vsub.s32 %v2787, %v3907
        %v3909 = vrot.slane %v3832, %v3908
        %v3910 = vlaneseq
        %v3911 = vshrl.u32 %v3910, 7
        %v3912 = vsub.s32 %v2787, %v3911
        %v3913 = vrot.slane %v3835, %v3912
        %v3914 = vlaneseq
        %v3915 = vshrl.u32 %v3914, 7
        %v3916 = vsub.s32 %v2787, %v3915
        %v3917 = vrot.slane %v3838, %v3916
        %v3918 = vlaneseq
        %v3919 = vshrl.u32 %v3918, 7
        %v3920 = vsub.s32 %v2787, %v3919
        %v3921 = vrot.slane %v3841, %v3920
        %v3922 = vsel %vm3312, %v3865, %v3861
        %v3923 = vsel %vm3314, %v3869, %v3922
        %v3924 = vsel %vm3316, %v3873, %v3923
        %v3925 = vsel %vm3318, %v3877, %v3924
        %v3926 = vsel %vm3320, %v3881, %v3925
        %v3927 = vsel %vm3322, %v3885, %v3926
        %v3928 = vsel %vm3324, %v3889, %v3927
        %v3929 = vsel %vm3312, %v3897, %v3893
        %v3930 = vsel %vm3314, %v3901, %v3929
        %v3931 = vsel %vm3316, %v3905, %v3930
        %v3932 = vsel %vm3318, %v3909, %v3931
        %v3933 = vsel %vm3320, %v3913, %v3932
        %v3934 = vsel %vm3322, %v3917, %v3933
        %v3935 = vsel %vm3324, %v3921, %v3934
        %3938 = vxpose.xlu0.b32.start [1/16] %v3928, 128
        %3939 = vxpose.xlu0.b32.cont [2/16] %v3935, 128
        %3940 = vxpose.xlu0.b32.cont [3/16] 0.0, 128
        %3941 = vxpose.xlu0.b32.cont [4/16] 0.0, 128
        %3942 = vxpose.xlu0.b32.cont [5/16] 0.0, 128
        %3943 = vxpose.xlu0.b32.cont [6/16] 0.0, 128
        %3944 = vxpose.xlu0.b32.cont [7/16] 0.0, 128
        %3945 = vxpose.xlu0.b32.cont [8/16] 0.0, 128
        %3946 = vxpose.xlu0.b32.cont [9/16] 0.0, 128
        %3947 = vxpose.xlu0.b32.cont [10/16] 0.0, 128
        %3948 = vxpose.xlu0.b32.cont [11/16] 0.0, 128
        %3949 = vxpose.xlu0.b32.cont [12/16] 0.0, 128
        %3950 = vxpose.xlu0.b32.cont [13/16] 0.0, 128
        %3951 = vxpose.xlu0.b32.cont [14/16] 0.0, 128
        %3952 = vxpose.xlu0.b32.cont [15/16] 0.0, 128
        %3953 = vxpose.xlu0.b32.end [16/16] 0.0, 128
        %v3954 = vpop.trf.xlu0
        %v3955 = vpop.trf.xlu0
        %v3956 = vpop.trf.xlu0
        %v3957 = vpop.trf.xlu0
        %v3958 = vpop.trf.xlu0
        %v3959 = vpop.trf.xlu0
        %v3960 = vpop.trf.xlu0
        %v3961 = vpop.trf.xlu0
        %v3962 = vpop.trf.xlu0
        %v3963 = vpop.trf.xlu0
        %v3964 = vpop.trf.xlu0
        %v3965 = vpop.trf.xlu0
        %v3966 = vpop.trf.xlu0
        %v3967 = vpop.trf.xlu0
        %v3968 = vpop.trf.xlu0
        %v3969 = vpop.trf.xlu0
        %v3970 = vsel %vm3135, %v3763, 0.0
        %3971 = vadd.xlane.f32.xlu0 %v3970
        %v3972 = vpop.xlane.xlu0 %3971
        %v3973 = vsel %vm3135, %v3765, 0.0
        %3974 = vadd.xlane.f32.xlu0 %v3973
        %v3975 = vpop.xlane.xlu0 %3974
        %v3976 = vsel %vm3135, %v3767, 0.0
        %3977 = vadd.xlane.f32.xlu0 %v3976
        %v3978 = vpop.xlane.xlu0 %3977
        %v3979 = vsel %vm3135, %v3769, 0.0
        %3980 = vadd.xlane.f32.xlu0 %v3979
        %v3981 = vpop.xlane.xlu0 %3980
        %v3982 = vsel %vm3135, %v3771, 0.0
        %3983 = vadd.xlane.f32.xlu0 %v3982
        %v3984 = vpop.xlane.xlu0 %3983
        %v3985 = vsel %vm3135, %v3773, 0.0
        %3986 = vadd.xlane.f32.xlu0 %v3985
        %v3987 = vpop.xlane.xlu0 %3986
        %v3988 = vsel %vm3135, %v3775, 0.0
        %3989 = vadd.xlane.f32.xlu0 %v3988
        %v3990 = vpop.xlane.xlu0 %3989
        %v3991 = vsel %vm3135, %v3777, 0.0
        %3992 = vadd.xlane.f32.xlu0 %v3991
        %v3993 = vpop.xlane.xlu0 %3992
        %v3994 = vsel %vm3135, %v3779, 0.0
        %3995 = vadd.xlane.f32.xlu0 %v3994
        %v3996 = vpop.xlane.xlu0 %3995
        %v3997 = vsel %vm3135, %v3781, 0.0
        %3998 = vadd.xlane.f32.xlu0 %v3997
        %v3999 = vpop.xlane.xlu0 %3998
        %v4000 = vsel %vm3135, %v3783, 0.0
        %4001 = vadd.xlane.f32.xlu0 %v4000
        %v4002 = vpop.xlane.xlu0 %4001
        %v4003 = vsel %vm3135, %v3785, 0.0
        %4004 = vadd.xlane.f32.xlu0 %v4003
        %v4005 = vpop.xlane.xlu0 %4004
        %v4006 = vsel %vm3135, %v3787, 0.0
        %4007 = vadd.xlane.f32.xlu0 %v4006
        %v4008 = vpop.xlane.xlu0 %4007
        %v4009 = vsel %vm3135, %v3789, 0.0
        %4010 = vadd.xlane.f32.xlu0 %v4009
        %v4011 = vpop.xlane.xlu0 %4010
        %v4012 = vsel %vm3135, %v3791, 0.0
        %4013 = vadd.xlane.f32.xlu0 %v4012
        %v4014 = vpop.xlane.xlu0 %4013
        %v4015 = vsel %vm3135, %v3793, 0.0
        %4016 = vadd.xlane.f32.xlu0 %v4015
        %v4017 = vpop.xlane.xlu0 %4016
        %v4034 = vlaneseq
        %v4035 = vshrl.u32 %v4034, 7
        %v4036 = vsub.s32 %v2787, %v4035
        %v4037 = vrot.slane %v3972, %v4036
        %v4038 = vlaneseq
        %v4039 = vshrl.u32 %v4038, 7
        %v4040 = vsub.s32 %v3387, %v4039
        %v4041 = vrot.slane %v3975, %v4040
        %v4042 = vsel %vm3392, %v4041, %v4037
        %v4043 = vlaneseq
        %v4044 = vshrl.u32 %v4043, 7
        %v4045 = vsub.s32 %v2787, %v4044
        %v4046 = vrot.slane %v3978, %v4045
        %v4047 = vlaneseq
        %v4048 = vshrl.u32 %v4047, 7
        %v4049 = vsub.s32 %v3387, %v4048
        %v4050 = vrot.slane %v3981, %v4049
        %v4051 = vsel %vm3392, %v4050, %v4046
        %v4052 = vlaneseq
        %v4053 = vshrl.u32 %v4052, 7
        %v4054 = vsub.s32 %v2787, %v4053
        %v4055 = vrot.slane %v3984, %v4054
        %v4056 = vlaneseq
        %v4057 = vshrl.u32 %v4056, 7
        %v4058 = vsub.s32 %v3387, %v4057
        %v4059 = vrot.slane %v3987, %v4058
        %v4060 = vsel %vm3392, %v4059, %v4055
        %v4061 = vlaneseq
        %v4062 = vshrl.u32 %v4061, 7
        %v4063 = vsub.s32 %v2787, %v4062
        %v4064 = vrot.slane %v3990, %v4063
        %v4065 = vlaneseq
        %v4066 = vshrl.u32 %v4065, 7
        %v4067 = vsub.s32 %v3387, %v4066
        %v4068 = vrot.slane %v3993, %v4067
        %v4069 = vsel %vm3392, %v4068, %v4064
        %v4070 = vlaneseq
        %v4071 = vshrl.u32 %v4070, 7
        %v4072 = vsub.s32 %v2787, %v4071
        %v4073 = vrot.slane %v3996, %v4072
        %v4074 = vlaneseq
        %v4075 = vshrl.u32 %v4074, 7
        %v4076 = vsub.s32 %v3387, %v4075
        %v4077 = vrot.slane %v3999, %v4076
        %v4078 = vsel %vm3392, %v4077, %v4073
        %v4079 = vlaneseq
        %v4080 = vshrl.u32 %v4079, 7
        %v4081 = vsub.s32 %v2787, %v4080
        %v4082 = vrot.slane %v4002, %v4081
        %v4083 = vlaneseq
        %v4084 = vshrl.u32 %v4083, 7
        %v4085 = vsub.s32 %v3387, %v4084
        %v4086 = vrot.slane %v4005, %v4085
        %v4087 = vsel %vm3392, %v4086, %v4082
        %v4088 = vlaneseq
        %v4089 = vshrl.u32 %v4088, 7
        %v4090 = vsub.s32 %v2787, %v4089
        %v4091 = vrot.slane %v4008, %v4090
        %v4092 = vlaneseq
        %v4093 = vshrl.u32 %v4092, 7
        %v4094 = vsub.s32 %v3387, %v4093
        %v4095 = vrot.slane %v4011, %v4094
        %v4096 = vsel %vm3392, %v4095, %v4091
        %v4097 = vlaneseq
        %v4098 = vshrl.u32 %v4097, 7
        %v4099 = vsub.s32 %v2787, %v4098
        %v4100 = vrot.slane %v4014, %v4099
        %v4101 = vlaneseq
        %v4102 = vshrl.u32 %v4101, 7
        %v4103 = vsub.s32 %v3387, %v4102
        %v4104 = vrot.slane %v4017, %v4103
        %v4105 = vsel %vm3392, %v4104, %v4100
        %v4106 = vsel %vm3312, %v4051, %v4042
        %v4107 = vsel %vm3314, %v4060, %v4106
        %v4108 = vsel %vm3316, %v4069, %v4107
        %v4109 = vsel %vm3318, %v4078, %v4108
        %v4110 = vsel %vm3320, %v4087, %v4109
        %v4111 = vsel %vm3322, %v4096, %v4110
        %v4112 = vsel %vm3324, %v4105, %v4111
        %v4114 = vadd.f32 %v3954, %v4112
        %v4115 = vrcp.pop %v4114
        %v4116 = vpack.c.bf16 %v3627, %v3627
        %v4117 = vpack.c.bf16 %v3629, %v3629
        %v4118 = vpack.c.bf16 %v3631, %v3631
        %v4119 = vpack.c.bf16 %v3633, %v3633
        %v4120 = vpack.c.bf16 %v3635, %v3635
        %v4121 = vpack.c.bf16 %v3637, %v3637
        %v4122 = vpack.c.bf16 %v3639, %v3639
        %v4123 = vpack.c.bf16 %v3641, %v3641
        %v4124 = vpack.c.bf16 %v3643, %v3643
        %v4125 = vpack.c.bf16 %v3645, %v3645
        %v4126 = vpack.c.bf16 %v3647, %v3647
        %v4127 = vpack.c.bf16 %v3649, %v3649
        %v4128 = vpack.c.bf16 %v3651, %v3651
        %v4129 = vpack.c.bf16 %v3653, %v3653
        %v4130 = vpack.c.bf16 %v3655, %v3655
        %v4131 = vpack.c.bf16 %v3657, %v3657
        %v4132 = vld [vmem:[#allocation3] sm:$0xff]
        %v4133 = vld [vmem:[#allocation3 + $0x8] sm:$0xff]
        %v4134 = vld [vmem:[#allocation3 + $0x10] sm:$0xff]
        %v4135 = vld [vmem:[#allocation3 + $0x18] sm:$0xff]
        %v4136 = vld [vmem:[#allocation3 + $0x20] sm:$0xff]
        %v4137 = vld [vmem:[#allocation3 + $0x28] sm:$0xff]
        %v4138 = vld [vmem:[#allocation3 + $0x30] sm:$0xff]
        %v4139 = vld [vmem:[#allocation3 + $0x38] sm:$0xff]
        %v4140 = vld [vmem:[#allocation3 + $0x40] sm:$0xff]
        %v4141 = vld [vmem:[#allocation3 + $0x48] sm:$0xff]
        %v4142 = vld [vmem:[#allocation3 + $0x50] sm:$0xff]
        %v4143 = vld [vmem:[#allocation3 + $0x58] sm:$0xff]
        %v4144 = vld [vmem:[#allocation3 + $0x60] sm:$0xff]
        %v4145 = vld [vmem:[#allocation3 + $0x68] sm:$0xff]
        %v4146 = vld [vmem:[#allocation3 + $0x70] sm:$0xff]
        %v4147 = vld [vmem:[#allocation3 + $0x78] sm:$0xff]
        %v4149 = vsel %vm3135, %v4116, 0
        %4151 = vmatprep.subr.bf16.mxu0 0
        %4152 = vmatpush1.bf16.msra.mxu0 %v4132
        %4153 = vmatprep.subr.bf16.mxu0 0
        %4154 = vmatpush1.bf16.msra.mxu0 0
        %4155 = vmatprep.subr.bf16.mxu0 0
        %4156 = vmatpush1.bf16.msra.mxu0 0
        %4157 = vmatprep.subr.bf16.mxu0 0
        %4158 = vmatpush1.bf16.msra.mxu0 0
        %4159 = vmatprep.subr.bf16.mxu0 0
        %4160 = vmatpush1.bf16.msra.mxu0 0
        %4161 = vmatprep.subr.bf16.mxu0 0
        %4162 = vmatpush1.bf16.msra.mxu0 0
        %4163 = vmatprep.subr.bf16.mxu0 0
        %4164 = vmatpush1.bf16.msra.mxu0 0
        %4165 = vmatprep.subr.bf16.mxu0 0
        %4166 = vmatpush1.bf16.msra.mxu0 0
        %4167 = vmatprep.subr.bf16.mxu0 0
        %4168 = vmatpush1.bf16.msra.mxu0 0
        %4169 = vmatprep.subr.bf16.mxu0 0
        %4170 = vmatpush1.bf16.msra.mxu0 0
        %4171 = vmatprep.subr.bf16.mxu0 0
        %4172 = vmatpush1.bf16.msra.mxu0 0
        %4173 = vmatprep.subr.bf16.mxu0 0
        %4174 = vmatpush1.bf16.msra.mxu0 0
        %4175 = vmatprep.subr.bf16.mxu0 0
        %4176 = vmatpush1.bf16.msra.mxu0 0
        %4177 = vmatprep.subr.bf16.mxu0 0
        %4178 = vmatpush1.bf16.msra.mxu0 0
        %4179 = vmatprep.subr.bf16.mxu0 0
        %4180 = vmatpush1.bf16.msra.mxu0 0
        %4181 = vmatprep.subr.bf16.mxu0 0
        %4182 = vmatpush1.bf16.msra.mxu0 0
        %4183 = vmatprep.mubr.bf16.mxu0 0
        %4184 = vmatmul.mubr.bf16.gmra.mrb[0].mxu0 %v4149
        %v4185 = vpop.f32.mrb[0].mxu0
        %v4186 = vadd.f32 0.0, %v4185
        %v4187 = vpop.f32.mrb[0].mxu0
        %v4188 = vpop.f32.mrb[0].mxu0
        %v4189 = vpop.f32.mrb[0].mxu0
        %4190 = vdwg.mxu0
        %v4192 = vsel %vm3135, %v4117, 0
        %4194 = vmatprep.subr.bf16.mxu0 0
        %4195 = vmatpush1.bf16.msra.mxu0 %v4133
        %4196 = vmatprep.subr.bf16.mxu0 0
        %4197 = vmatpush1.bf16.msra.mxu0 0
        %4198 = vmatprep.subr.bf16.mxu0 0
        %4199 = vmatpush1.bf16.msra.mxu0 0
        %4200 = vmatprep.subr.bf16.mxu0 0
        %4201 = vmatpush1.bf16.msra.mxu0 0
        %4202 = vmatprep.subr.bf16.mxu0 0
        %4203 = vmatpush1.bf16.msra.mxu0 0
        %4204 = vmatprep.subr.bf16.mxu0 0
        %4205 = vmatpush1.bf16.msra.mxu0 0
        %4206 = vmatprep.subr.bf16.mxu0 0
        %4207 = vmatpush1.bf16.msra.mxu0 0
        %4208 = vmatprep.subr.bf16.mxu0 0
        %4209 = vmatpush1.bf16.msra.mxu0 0
        %4210 = vmatprep.subr.bf16.mxu0 0
        %4211 = vmatpush1.bf16.msra.mxu0 0
        %4212 = vmatprep.subr.bf16.mxu0 0
        %4213 = vmatpush1.bf16.msra.mxu0 0
        %4214 = vmatprep.subr.bf16.mxu0 0
        %4215 = vmatpush1.bf16.msra.mxu0 0
        %4216 = vmatprep.subr.bf16.mxu0 0
        %4217 = vmatpush1.bf16.msra.mxu0 0
        %4218 = vmatprep.subr.bf16.mxu0 0
        %4219 = vmatpush1.bf16.msra.mxu0 0
        %4220 = vmatprep.subr.bf16.mxu0 0
        %4221 = vmatpush1.bf16.msra.mxu0 0
        %4222 = vmatprep.subr.bf16.mxu0 0
        %4223 = vmatpush1.bf16.msra.mxu0 0
        %4224 = vmatprep.subr.bf16.mxu0 0
        %4225 = vmatpush1.bf16.msra.mxu0 0
        %4226 = vmatprep.mubr.bf16.mxu0 0
        %4227 = vmatmul.mubr.bf16.gmra.mrb[0].mxu0 %v4192
        %v4228 = vpop.f32.mrb[0].mxu0
        %v4229 = vadd.f32 0.0, %v4228
        %v4230 = vpop.f32.mrb[0].mxu0
        %v4231 = vpop.f32.mrb[0].mxu0
        %v4232 = vpop.f32.mrb[0].mxu0
        %4233 = vdwg.mxu0
        %v4235 = vsel %vm3135, %v4118, 0
        %4237 = vmatprep.subr.bf16.mxu0 0
        %4238 = vmatpush1.bf16.msra.mxu0 %v4134
        %4239 = vmatprep.subr.bf16.mxu0 0
        %4240 = vmatpush1.bf16.msra.mxu0 0
        %4241 = vmatprep.subr.bf16.mxu0 0
        %4242 = vmatpush1.bf16.msra.mxu0 0
        %4243 = vmatprep.subr.bf16.mxu0 0
        %4244 = vmatpush1.bf16.msra.mxu0 0
        %4245 = vmatprep.subr.bf16.mxu0 0
        %4246 = vmatpush1.bf16.msra.mxu0 0
        %4247 = vmatprep.subr.bf16.mxu0 0
        %4248 = vmatpush1.bf16.msra.mxu0 0
        %4249 = vmatprep.subr.bf16.mxu0 0
        %4250 = vmatpush1.bf16.msra.mxu0 0
        %4251 = vmatprep.subr.bf16.mxu0 0
        %4252 = vmatpush1.bf16.msra.mxu0 0
        %4253 = vmatprep.subr.bf16.mxu0 0
        %4254 = vmatpush1.bf16.msra.mxu0 0
        %4255 = vmatprep.subr.bf16.mxu0 0
        %4256 = vmatpush1.bf16.msra.mxu0 0
        %4257 = vmatprep.subr.bf16.mxu0 0
        %4258 = vmatpush1.bf16.msra.mxu0 0
        %4259 = vmatprep.subr.bf16.mxu0 0
        %4260 = vmatpush1.bf16.msra.mxu0 0
        %4261 = vmatprep.subr.bf16.mxu0 0
        %4262 = vmatpush1.bf16.msra.mxu0 0
        %4263 = vmatprep.subr.bf16.mxu0 0
        %4264 = vmatpush1.bf16.msra.mxu0 0
        %4265 = vmatprep.subr.bf16.mxu0 0
        %4266 = vmatpush1.bf16.msra.mxu0 0
        %4267 = vmatprep.subr.bf16.mxu0 0
        %4268 = vmatpush1.bf16.msra.mxu0 0
        %4269 = vmatprep.mubr.bf16.mxu0 0
        %4270 = vmatmul.mubr.bf16.gmra.mrb[0].mxu0 %v4235
        %v4271 = vpop.f32.mrb[0].mxu0
        %v4272 = vadd.f32 0.0, %v4271
        %v4273 = vpop.f32.mrb[0].mxu0
        %v4274 = vpop.f32.mrb[0].mxu0
        %v4275 = vpop.f32.mrb[0].mxu0
        %4276 = vdwg.mxu0
        %v4278 = vsel %vm3135, %v4119, 0
        %4280 = vmatprep.subr.bf16.mxu0 0
        %4281 = vmatpush1.bf16.msra.mxu0 %v4135
        %4282 = vmatprep.subr.bf16.mxu0 0
        %4283 = vmatpush1.bf16.msra.mxu0 0
        %4284 = vmatprep.subr.bf16.mxu0 0
        %4285 = vmatpush1.bf16.msra.mxu0 0
        %4286 = vmatprep.subr.bf16.mxu0 0
        %4287 = vmatpush1.bf16.msra.mxu0 0
        %4288 = vmatprep.subr.bf16.mxu0 0
        %4289 = vmatpush1.bf16.msra.mxu0 0
        %4290 = vmatprep.subr.bf16.mxu0 0
        %4291 = vmatpush1.bf16.msra.mxu0 0
        %4292 = vmatprep.subr.bf16.mxu0 0
        %4293 = vmatpush1.bf16.msra.mxu0 0
        %4294 = vmatprep.subr.bf16.mxu0 0
        %4295 = vmatpush1.bf16.msra.mxu0 0
        %4296 = vmatprep.subr.bf16.mxu0 0
        %4297 = vmatpush1.bf16.msra.mxu0 0
        %4298 = vmatprep.subr.bf16.mxu0 0
        %4299 = vmatpush1.bf16.msra.mxu0 0
        %4300 = vmatprep.subr.bf16.mxu0 0
        %4301 = vmatpush1.bf16.msra.mxu0 0
        %4302 = vmatprep.subr.bf16.mxu0 0
        %4303 = vmatpush1.bf16.msra.mxu0 0
        %4304 = vmatprep.subr.bf16.mxu0 0
        %4305 = vmatpush1.bf16.msra.mxu0 0
        %4306 = vmatprep.subr.bf16.mxu0 0
        %4307 = vmatpush1.bf16.msra.mxu0 0
        %4308 = vmatprep.subr.bf16.mxu0 0
        %4309 = vmatpush1.bf16.msra.mxu0 0
        %4310 = vmatprep.subr.bf16.mxu0 0
        %4311 = vmatpush1.bf16.msra.mxu0 0
        %4312 = vmatprep.mubr.bf16.mxu0 0
        %4313 = vmatmul.mubr.bf16.gmra.mrb[0].mxu0 %v4278
        %v4314 = vpop.f32.mrb[0].mxu0
        %v4315 = vadd.f32 0.0, %v4314
        %v4316 = vpop.f32.mrb[0].mxu0
        %v4317 = vpop.f32.mrb[0].mxu0
        %v4318 = vpop.f32.mrb[0].mxu0
        %4319 = vdwg.mxu0
        %v4321 = vsel %vm3135, %v4120, 0
        %4323 = vmatprep.subr.bf16.mxu0 0
        %4324 = vmatpush1.bf16.msra.mxu0 %v4136
        %4325 = vmatprep.subr.bf16.mxu0 0
        %4326 = vmatpush1.bf16.msra.mxu0 0
        %4327 = vmatprep.subr.bf16.mxu0 0
        %4328 = vmatpush1.bf16.msra.mxu0 0
        %4329 = vmatprep.subr.bf16.mxu0 0
        %4330 = vmatpush1.bf16.msra.mxu0 0
        %4331 = vmatprep.subr.bf16.mxu0 0
        %4332 = vmatpush1.bf16.msra.mxu0 0
        %4333 = vmatprep.subr.bf16.mxu0 0
        %4334 = vmatpush1.bf16.msra.mxu0 0
        %4335 = vmatprep.subr.bf16.mxu0 0
        %4336 = vmatpush1.bf16.msra.mxu0 0
        %4337 = vmatprep.subr.bf16.mxu0 0
        %4338 = vmatpush1.bf16.msra.mxu0 0
        %4339 = vmatprep.subr.bf16.mxu0 0
        %4340 = vmatpush1.bf16.msra.mxu0 0
        %4341 = vmatprep.subr.bf16.mxu0 0
        %4342 = vmatpush1.bf16.msra.mxu0 0
        %4343 = vmatprep.subr.bf16.mxu0 0
        %4344 = vmatpush1.bf16.msra.mxu0 0
        %4345 = vmatprep.subr.bf16.mxu0 0
        %4346 = vmatpush1.bf16.msra.mxu0 0
        %4347 = vmatprep.subr.bf16.mxu0 0
        %4348 = vmatpush1.bf16.msra.mxu0 0
        %4349 = vmatprep.subr.bf16.mxu0 0
        %4350 = vmatpush1.bf16.msra.mxu0 0
        %4351 = vmatprep.subr.bf16.mxu0 0
        %4352 = vmatpush1.bf16.msra.mxu0 0
        %4353 = vmatprep.subr.bf16.mxu0 0
        %4354 = vmatpush1.bf16.msra.mxu0 0
        %4355 = vmatprep.mubr.bf16.mxu0 0
        %4356 = vmatmul.mubr.bf16.gmra.mrb[0].mxu0 %v4321
        %v4357 = vpop.f32.mrb[0].mxu0
        %v4358 = vadd.f32 0.0, %v4357
        %v4359 = vpop.f32.mrb[0].mxu0
        %v4360 = vpop.f32.mrb[0].mxu0
        %v4361 = vpop.f32.mrb[0].mxu0
        %4362 = vdwg.mxu0
        %v4364 = vsel %vm3135, %v4121, 0
        %4366 = vmatprep.subr.bf16.mxu0 0
        %4367 = vmatpush1.bf16.msra.mxu0 %v4137
        %4368 = vmatprep.subr.bf16.mxu0 0
        %4369 = vmatpush1.bf16.msra.mxu0 0
        %4370 = vmatprep.subr.bf16.mxu0 0
        %4371 = vmatpush1.bf16.msra.mxu0 0
        %4372 = vmatprep.subr.bf16.mxu0 0
        %4373 = vmatpush1.bf16.msra.mxu0 0
        %4374 = vmatprep.subr.bf16.mxu0 0
        %4375 = vmatpush1.bf16.msra.mxu0 0
        %4376 = vmatprep.subr.bf16.mxu0 0
        %4377 = vmatpush1.bf16.msra.mxu0 0
        %4378 = vmatprep.subr.bf16.mxu0 0
        %4379 = vmatpush1.bf16.msra.mxu0 0
        %4380 = vmatprep.subr.bf16.mxu0 0
        %4381 = vmatpush1.bf16.msra.mxu0 0
        %4382 = vmatprep.subr.bf16.mxu0 0
        %4383 = vmatpush1.bf16.msra.mxu0 0
        %4384 = vmatprep.subr.bf16.mxu0 0
        %4385 = vmatpush1.bf16.msra.mxu0 0
        %4386 = vmatprep.subr.bf16.mxu0 0
        %4387 = vmatpush1.bf16.msra.mxu0 0
        %4388 = vmatprep.subr.bf16.mxu0 0
        %4389 = vmatpush1.bf16.msra.mxu0 0
        %4390 = vmatprep.subr.bf16.mxu0 0
        %4391 = vmatpush1.bf16.msra.mxu0 0
        %4392 = vmatprep.subr.bf16.mxu0 0
        %4393 = vmatpush1.bf16.msra.mxu0 0
        %4394 = vmatprep.subr.bf16.mxu0 0
        %4395 = vmatpush1.bf16.msra.mxu0 0
        %4396 = vmatprep.subr.bf16.mxu0 0
        %4397 = vmatpush1.bf16.msra.mxu0 0
        %4398 = vmatprep.mubr.bf16.mxu0 0
        %4399 = vmatmul.mubr.bf16.gmra.mrb[0].mxu0 %v4364
        %v4400 = vpop.f32.mrb[0].mxu0
        %v4401 = vadd.f32 0.0, %v4400
        %v4402 = vpop.f32.mrb[0].mxu0
        %v4403 = vpop.f32.mrb[0].mxu0
        %v4404 = vpop.f32.mrb[0].mxu0
        %4405 = vdwg.mxu0
        %v4407 = vsel %vm3135, %v4122, 0
        %4409 = vmatprep.subr.bf16.mxu0 0
        %4410 = vmatpush1.bf16.msra.mxu0 %v4138
        %4411 = vmatprep.subr.bf16.mxu0 0
        %4412 = vmatpush1.bf16.msra.mxu0 0
        %4413 = vmatprep.subr.bf16.mxu0 0
        %4414 = vmatpush1.bf16.msra.mxu0 0
        %4415 = vmatprep.subr.bf16.mxu0 0
        %4416 = vmatpush1.bf16.msra.mxu0 0
        %4417 = vmatprep.subr.bf16.mxu0 0
        %4418 = vmatpush1.bf16.msra.mxu0 0
        %4419 = vmatprep.subr.bf16.mxu0 0
        %4420 = vmatpush1.bf16.msra.mxu0 0
        %4421 = vmatprep.subr.bf16.mxu0 0
        %4422 = vmatpush1.bf16.msra.mxu0 0
        %4423 = vmatprep.subr.bf16.mxu0 0
        %4424 = vmatpush1.bf16.msra.mxu0 0
        %4425 = vmatprep.subr.bf16.mxu0 0
        %4426 = vmatpush1.bf16.msra.mxu0 0
        %4427 = vmatprep.subr.bf16.mxu0 0
        %4428 = vmatpush1.bf16.msra.mxu0 0
        %4429 = vmatprep.subr.bf16.mxu0 0
        %4430 = vmatpush1.bf16.msra.mxu0 0
        %4431 = vmatprep.subr.bf16.mxu0 0
        %4432 = vmatpush1.bf16.msra.mxu0 0
        %4433 = vmatprep.subr.bf16.mxu0 0
        %4434 = vmatpush1.bf16.msra.mxu0 0
        %4435 = vmatprep.subr.bf16.mxu0 0
        %4436 = vmatpush1.bf16.msra.mxu0 0
        %4437 = vmatprep.subr.bf16.mxu0 0
        %4438 = vmatpush1.bf16.msra.mxu0 0
        %4439 = vmatprep.subr.bf16.mxu0 0
        %4440 = vmatpush1.bf16.msra.mxu0 0
        %4441 = vmatprep.mubr.bf16.mxu0 0
        %4442 = vmatmul.mubr.bf16.gmra.mrb[0].mxu0 %v4407
        %v4443 = vpop.f32.mrb[0].mxu0
        %v4444 = vadd.f32 0.0, %v4443
        %v4445 = vpop.f32.mrb[0].mxu0
        %v4446 = vpop.f32.mrb[0].mxu0
        %v4447 = vpop.f32.mrb[0].mxu0
        %4448 = vdwg.mxu0
        %v4450 = vsel %vm3135, %v4123, 0
        %4452 = vmatprep.subr.bf16.mxu0 0
        %4453 = vmatpush1.bf16.msra.mxu0 %v4139
        %4454 = vmatprep.subr.bf16.mxu0 0
        %4455 = vmatpush1.bf16.msra.mxu0 0
        %4456 = vmatprep.subr.bf16.mxu0 0
        %4457 = vmatpush1.bf16.msra.mxu0 0
        %4458 = vmatprep.subr.bf16.mxu0 0
        %4459 = vmatpush1.bf16.msra.mxu0 0
        %4460 = vmatprep.subr.bf16.mxu0 0
        %4461 = vmatpush1.bf16.msra.mxu0 0
        %4462 = vmatprep.subr.bf16.mxu0 0
        %4463 = vmatpush1.bf16.msra.mxu0 0
        %4464 = vmatprep.subr.bf16.mxu0 0
        %4465 = vmatpush1.bf16.msra.mxu0 0
        %4466 = vmatprep.subr.bf16.mxu0 0
        %4467 = vmatpush1.bf16.msra.mxu0 0
        %4468 = vmatprep.subr.bf16.mxu0 0
        %4469 = vmatpush1.bf16.msra.mxu0 0
        %4470 = vmatprep.subr.bf16.mxu0 0
        %4471 = vmatpush1.bf16.msra.mxu0 0
        %4472 = vmatprep.subr.bf16.mxu0 0
        %4473 = vmatpush1.bf16.msra.mxu0 0
        %4474 = vmatprep.subr.bf16.mxu0 0
        %4475 = vmatpush1.bf16.msra.mxu0 0
        %4476 = vmatprep.subr.bf16.mxu0 0
        %4477 = vmatpush1.bf16.msra.mxu0 0
        %4478 = vmatprep.subr.bf16.mxu0 0
        %4479 = vmatpush1.bf16.msra.mxu0 0
        %4480 = vmatprep.subr.bf16.mxu0 0
        %4481 = vmatpush1.bf16.msra.mxu0 0
        %4482 = vmatprep.subr.bf16.mxu0 0
        %4483 = vmatpush1.bf16.msra.mxu0 0
        %4484 = vmatprep.mubr.bf16.mxu0 0
        %4485 = vmatmul.mubr.bf16.gmra.mrb[0].mxu0 %v4450
        %v4486 = vpop.f32.mrb[0].mxu0
        %v4487 = vadd.f32 0.0, %v4486
        %v4488 = vpop.f32.mrb[0].mxu0
        %v4489 = vpop.f32.mrb[0].mxu0
        %v4490 = vpop.f32.mrb[0].mxu0
        %4491 = vdwg.mxu0
        %v4493 = vsel %vm3135, %v4124, 0
        %4495 = vmatprep.subr.bf16.mxu0 0
        %4496 = vmatpush1.bf16.msra.mxu0 %v4140
        %4497 = vmatprep.subr.bf16.mxu0 0
        %4498 = vmatpush1.bf16.msra.mxu0 0
        %4499 = vmatprep.subr.bf16.mxu0 0
        %4500 = vmatpush1.bf16.msra.mxu0 0
        %4501 = vmatprep.subr.bf16.mxu0 0
        %4502 = vmatpush1.bf16.msra.mxu0 0
        %4503 = vmatprep.subr.bf16.mxu0 0
        %4504 = vmatpush1.bf16.msra.mxu0 0
        %4505 = vmatprep.subr.bf16.mxu0 0
        %4506 = vmatpush1.bf16.msra.mxu0 0
        %4507 = vmatprep.subr.bf16.mxu0 0
        %4508 = vmatpush1.bf16.msra.mxu0 0
        %4509 = vmatprep.subr.bf16.mxu0 0
        %4510 = vmatpush1.bf16.msra.mxu0 0
        %4511 = vmatprep.subr.bf16.mxu0 0
        %4512 = vmatpush1.bf16.msra.mxu0 0
        %4513 = vmatprep.subr.bf16.mxu0 0
        %4514 = vmatpush1.bf16.msra.mxu0 0
        %4515 = vmatprep.subr.bf16.mxu0 0
        %4516 = vmatpush1.bf16.msra.mxu0 0
        %4517 = vmatprep.subr.bf16.mxu0 0
        %4518 = vmatpush1.bf16.msra.mxu0 0
        %4519 = vmatprep.subr.bf16.mxu0 0
        %4520 = vmatpush1.bf16.msra.mxu0 0
        %4521 = vmatprep.subr.bf16.mxu0 0
        %4522 = vmatpush1.bf16.msra.mxu0 0
        %4523 = vmatprep.subr.bf16.mxu0 0
        %4524 = vmatpush1.bf16.msra.mxu0 0
        %4525 = vmatprep.subr.bf16.mxu0 0
        %4526 = vmatpush1.bf16.msra.mxu0 0
        %4527 = vmatprep.mubr.bf16.mxu0 0
        %4528 = vmatmul.mubr.bf16.gmra.mrb[0].mxu0 %v4493
        %v4529 = vpop.f32.mrb[0].mxu0
        %v4530 = vadd.f32 0.0, %v4529
        %v4531 = vpop.f32.mrb[0].mxu0
        %v4532 = vpop.f32.mrb[0].mxu0
        %v4533 = vpop.f32.mrb[0].mxu0
        %4534 = vdwg.mxu0
        %v4536 = vsel %vm3135, %v4125, 0
        %4538 = vmatprep.subr.bf16.mxu0 0
        %4539 = vmatpush1.bf16.msra.mxu0 %v4141
        %4540 = vmatprep.subr.bf16.mxu0 0
        %4541 = vmatpush1.bf16.msra.mxu0 0
        %4542 = vmatprep.subr.bf16.mxu0 0
        %4543 = vmatpush1.bf16.msra.mxu0 0
        %4544 = vmatprep.subr.bf16.mxu0 0
        %4545 = vmatpush1.bf16.msra.mxu0 0
        %4546 = vmatprep.subr.bf16.mxu0 0
        %4547 = vmatpush1.bf16.msra.mxu0 0
        %4548 = vmatprep.subr.bf16.mxu0 0
        %4549 = vmatpush1.bf16.msra.mxu0 0
        %4550 = vmatprep.subr.bf16.mxu0 0
        %4551 = vmatpush1.bf16.msra.mxu0 0
        %4552 = vmatprep.subr.bf16.mxu0 0
        %4553 = vmatpush1.bf16.msra.mxu0 0
        %4554 = vmatprep.subr.bf16.mxu0 0
        %4555 = vmatpush1.bf16.msra.mxu0 0
        %4556 = vmatprep.subr.bf16.mxu0 0
        %4557 = vmatpush1.bf16.msra.mxu0 0
        %4558 = vmatprep.subr.bf16.mxu0 0
        %4559 = vmatpush1.bf16.msra.mxu0 0
        %4560 = vmatprep.subr.bf16.mxu0 0
        %4561 = vmatpush1.bf16.msra.mxu0 0
        %4562 = vmatprep.subr.bf16.mxu0 0
        %4563 = vmatpush1.bf16.msra.mxu0 0
        %4564 = vmatprep.subr.bf16.mxu0 0
        %4565 = vmatpush1.bf16.msra.mxu0 0
        %4566 = vmatprep.subr.bf16.mxu0 0
        %4567 = vmatpush1.bf16.msra.mxu0 0
        %4568 = vmatprep.subr.bf16.mxu0 0
        %4569 = vmatpush1.bf16.msra.mxu0 0
        %4570 = vmatprep.mubr.bf16.mxu0 0
        %4571 = vmatmul.mubr.bf16.gmra.mrb[0].mxu0 %v4536
        %v4572 = vpop.f32.mrb[0].mxu0
        %v4573 = vadd.f32 0.0, %v4572
        %v4574 = vpop.f32.mrb[0].mxu0
        %v4575 = vpop.f32.mrb[0].mxu0
        %v4576 = vpop.f32.mrb[0].mxu0
        %4577 = vdwg.mxu0
        %v4579 = vsel %vm3135, %v4126, 0
        %4581 = vmatprep.subr.bf16.mxu0 0
        %4582 = vmatpush1.bf16.msra.mxu0 %v4142
        %4583 = vmatprep.subr.bf16.mxu0 0
        %4584 = vmatpush1.bf16.msra.mxu0 0
        %4585 = vmatprep.subr.bf16.mxu0 0
        %4586 = vmatpush1.bf16.msra.mxu0 0
        %4587 = vmatprep.subr.bf16.mxu0 0
        %4588 = vmatpush1.bf16.msra.mxu0 0
        %4589 = vmatprep.subr.bf16.mxu0 0
        %4590 = vmatpush1.bf16.msra.mxu0 0
        %4591 = vmatprep.subr.bf16.mxu0 0
        %4592 = vmatpush1.bf16.msra.mxu0 0
        %4593 = vmatprep.subr.bf16.mxu0 0
        %4594 = vmatpush1.bf16.msra.mxu0 0
        %4595 = vmatprep.subr.bf16.mxu0 0
        %4596 = vmatpush1.bf16.msra.mxu0 0
        %4597 = vmatprep.subr.bf16.mxu0 0
        %4598 = vmatpush1.bf16.msra.mxu0 0
        %4599 = vmatprep.subr.bf16.mxu0 0
        %4600 = vmatpush1.bf16.msra.mxu0 0
        %4601 = vmatprep.subr.bf16.mxu0 0
        %4602 = vmatpush1.bf16.msra.mxu0 0
        %4603 = vmatprep.subr.bf16.mxu0 0
        %4604 = vmatpush1.bf16.msra.mxu0 0
        %4605 = vmatprep.subr.bf16.mxu0 0
        %4606 = vmatpush1.bf16.msra.mxu0 0
        %4607 = vmatprep.subr.bf16.mxu0 0
        %4608 = vmatpush1.bf16.msra.mxu0 0
        %4609 = vmatprep.subr.bf16.mxu0 0
        %4610 = vmatpush1.bf16.msra.mxu0 0
        %4611 = vmatprep.subr.bf16.mxu0 0
        %4612 = vmatpush1.bf16.msra.mxu0 0
        %4613 = vmatprep.mubr.bf16.mxu0 0
        %4614 = vmatmul.mubr.bf16.gmra.mrb[0].mxu0 %v4579
        %v4615 = vpop.f32.mrb[0].mxu0
        %v4616 = vadd.f32 0.0, %v4615
        %v4617 = vpop.f32.mrb[0].mxu0
        %v4618 = vpop.f32.mrb[0].mxu0
        %v4619 = vpop.f32.mrb[0].mxu0
        %4620 = vdwg.mxu0
        %v4622 = vsel %vm3135, %v4127, 0
        %4624 = vmatprep.subr.bf16.mxu0 0
        %4625 = vmatpush1.bf16.msra.mxu0 %v4143
        %4626 = vmatprep.subr.bf16.mxu0 0
        %4627 = vmatpush1.bf16.msra.mxu0 0
        %4628 = vmatprep.subr.bf16.mxu0 0
        %4629 = vmatpush1.bf16.msra.mxu0 0
        %4630 = vmatprep.subr.bf16.mxu0 0
        %4631 = vmatpush1.bf16.msra.mxu0 0
        %4632 = vmatprep.subr.bf16.mxu0 0
        %4633 = vmatpush1.bf16.msra.mxu0 0
        %4634 = vmatprep.subr.bf16.mxu0 0
        %4635 = vmatpush1.bf16.msra.mxu0 0
        %4636 = vmatprep.subr.bf16.mxu0 0
        %4637 = vmatpush1.bf16.msra.mxu0 0
        %4638 = vmatprep.subr.bf16.mxu0 0
        %4639 = vmatpush1.bf16.msra.mxu0 0
        %4640 = vmatprep.subr.bf16.mxu0 0
        %4641 = vmatpush1.bf16.msra.mxu0 0
        %4642 = vmatprep.subr.bf16.mxu0 0
        %4643 = vmatpush1.bf16.msra.mxu0 0
        %4644 = vmatprep.subr.bf16.mxu0 0
        %4645 = vmatpush1.bf16.msra.mxu0 0
        %4646 = vmatprep.subr.bf16.mxu0 0
        %4647 = vmatpush1.bf16.msra.mxu0 0
        %4648 = vmatprep.subr.bf16.mxu0 0
        %4649 = vmatpush1.bf16.msra.mxu0 0
        %4650 = vmatprep.subr.bf16.mxu0 0
        %4651 = vmatpush1.bf16.msra.mxu0 0
        %4652 = vmatprep.subr.bf16.mxu0 0
        %4653 = vmatpush1.bf16.msra.mxu0 0
        %4654 = vmatprep.subr.bf16.mxu0 0
        %4655 = vmatpush1.bf16.msra.mxu0 0
        %4656 = vmatprep.mubr.bf16.mxu0 0
        %4657 = vmatmul.mubr.bf16.gmra.mrb[0].mxu0 %v4622
        %v4658 = vpop.f32.mrb[0].mxu0
        %v4659 = vadd.f32 0.0, %v4658
        %v4660 = vpop.f32.mrb[0].mxu0
        %v4661 = vpop.f32.mrb[0].mxu0
        %v4662 = vpop.f32.mrb[0].mxu0
        %4663 = vdwg.mxu0
        %v4665 = vsel %vm3135, %v4128, 0
        %4667 = vmatprep.subr.bf16.mxu0 0
        %4668 = vmatpush1.bf16.msra.mxu0 %v4144
        %4669 = vmatprep.subr.bf16.mxu0 0
        %4670 = vmatpush1.bf16.msra.mxu0 0
        %4671 = vmatprep.subr.bf16.mxu0 0
        %4672 = vmatpush1.bf16.msra.mxu0 0
        %4673 = vmatprep.subr.bf16.mxu0 0
        %4674 = vmatpush1.bf16.msra.mxu0 0
        %4675 = vmatprep.subr.bf16.mxu0 0
        %4676 = vmatpush1.bf16.msra.mxu0 0
        %4677 = vmatprep.subr.bf16.mxu0 0
        %4678 = vmatpush1.bf16.msra.mxu0 0
        %4679 = vmatprep.subr.bf16.mxu0 0
        %4680 = vmatpush1.bf16.msra.mxu0 0
        %4681 = vmatprep.subr.bf16.mxu0 0
        %4682 = vmatpush1.bf16.msra.mxu0 0
        %4683 = vmatprep.subr.bf16.mxu0 0
        %4684 = vmatpush1.bf16.msra.mxu0 0
        %4685 = vmatprep.subr.bf16.mxu0 0
        %4686 = vmatpush1.bf16.msra.mxu0 0
        %4687 = vmatprep.subr.bf16.mxu0 0
        %4688 = vmatpush1.bf16.msra.mxu0 0
        %4689 = vmatprep.subr.bf16.mxu0 0
        %4690 = vmatpush1.bf16.msra.mxu0 0
        %4691 = vmatprep.subr.bf16.mxu0 0
        %4692 = vmatpush1.bf16.msra.mxu0 0
        %4693 = vmatprep.subr.bf16.mxu0 0
        %4694 = vmatpush1.bf16.msra.mxu0 0
        %4695 = vmatprep.subr.bf16.mxu0 0
        %4696 = vmatpush1.bf16.msra.mxu0 0
        %4697 = vmatprep.subr.bf16.mxu0 0
        %4698 = vmatpush1.bf16.msra.mxu0 0
        %4699 = vmatprep.mubr.bf16.mxu0 0
        %4700 = vmatmul.mubr.bf16.gmra.mrb[0].mxu0 %v4665
        %v4701 = vpop.f32.mrb[0].mxu0
        %v4702 = vadd.f32 0.0, %v4701
        %v4703 = vpop.f32.mrb[0].mxu0
        %v4704 = vpop.f32.mrb[0].mxu0
        %v4705 = vpop.f32.mrb[0].mxu0
        %4706 = vdwg.mxu0
        %v4708 = vsel %vm3135, %v4129, 0
        %4710 = vmatprep.subr.bf16.mxu0 0
        %4711 = vmatpush1.bf16.msra.mxu0 %v4145
        %4712 = vmatprep.subr.bf16.mxu0 0
        %4713 = vmatpush1.bf16.msra.mxu0 0
        %4714 = vmatprep.subr.bf16.mxu0 0
        %4715 = vmatpush1.bf16.msra.mxu0 0
        %4716 = vmatprep.subr.bf16.mxu0 0
        %4717 = vmatpush1.bf16.msra.mxu0 0
        %4718 = vmatprep.subr.bf16.mxu0 0
        %4719 = vmatpush1.bf16.msra.mxu0 0
        %4720 = vmatprep.subr.bf16.mxu0 0
        %4721 = vmatpush1.bf16.msra.mxu0 0
        %4722 = vmatprep.subr.bf16.mxu0 0
        %4723 = vmatpush1.bf16.msra.mxu0 0
        %4724 = vmatprep.subr.bf16.mxu0 0
        %4725 = vmatpush1.bf16.msra.mxu0 0
        %4726 = vmatprep.subr.bf16.mxu0 0
        %4727 = vmatpush1.bf16.msra.mxu0 0
        %4728 = vmatprep.subr.bf16.mxu0 0
        %4729 = vmatpush1.bf16.msra.mxu0 0
        %4730 = vmatprep.subr.bf16.mxu0 0
        %4731 = vmatpush1.bf16.msra.mxu0 0
        %4732 = vmatprep.subr.bf16.mxu0 0
        %4733 = vmatpush1.bf16.msra.mxu0 0
        %4734 = vmatprep.subr.bf16.mxu0 0
        %4735 = vmatpush1.bf16.msra.mxu0 0
        %4736 = vmatprep.subr.bf16.mxu0 0
        %4737 = vmatpush1.bf16.msra.mxu0 0
        %4738 = vmatprep.subr.bf16.mxu0 0
        %4739 = vmatpush1.bf16.msra.mxu0 0
        %4740 = vmatprep.subr.bf16.mxu0 0
        %4741 = vmatpush1.bf16.msra.mxu0 0
        %4742 = vmatprep.mubr.bf16.mxu0 0
        %4743 = vmatmul.mubr.bf16.gmra.mrb[0].mxu0 %v4708
        %v4744 = vpop.f32.mrb[0].mxu0
        %v4745 = vadd.f32 0.0, %v4744
        %v4746 = vpop.f32.mrb[0].mxu0
        %v4747 = vpop.f32.mrb[0].mxu0
        %v4748 = vpop.f32.mrb[0].mxu0
        %4749 = vdwg.mxu0
        %v4751 = vsel %vm3135, %v4130, 0
        %4753 = vmatprep.subr.bf16.mxu0 0
        %4754 = vmatpush1.bf16.msra.mxu0 %v4146
        %4755 = vmatprep.subr.bf16.mxu0 0
        %4756 = vmatpush1.bf16.msra.mxu0 0
        %4757 = vmatprep.subr.bf16.mxu0 0
        %4758 = vmatpush1.bf16.msra.mxu0 0
        %4759 = vmatprep.subr.bf16.mxu0 0
        %4760 = vmatpush1.bf16.msra.mxu0 0
        %4761 = vmatprep.subr.bf16.mxu0 0
        %4762 = vmatpush1.bf16.msra.mxu0 0
        %4763 = vmatprep.subr.bf16.mxu0 0
        %4764 = vmatpush1.bf16.msra.mxu0 0
        %4765 = vmatprep.subr.bf16.mxu0 0
        %4766 = vmatpush1.bf16.msra.mxu0 0
        %4767 = vmatprep.subr.bf16.mxu0 0
        %4768 = vmatpush1.bf16.msra.mxu0 0
        %4769 = vmatprep.subr.bf16.mxu0 0
        %4770 = vmatpush1.bf16.msra.mxu0 0
        %4771 = vmatprep.subr.bf16.mxu0 0
        %4772 = vmatpush1.bf16.msra.mxu0 0
        %4773 = vmatprep.subr.bf16.mxu0 0
        %4774 = vmatpush1.bf16.msra.mxu0 0
        %4775 = vmatprep.subr.bf16.mxu0 0
        %4776 = vmatpush1.bf16.msra.mxu0 0
        %4777 = vmatprep.subr.bf16.mxu0 0
        %4778 = vmatpush1.bf16.msra.mxu0 0
        %4779 = vmatprep.subr.bf16.mxu0 0
        %4780 = vmatpush1.bf16.msra.mxu0 0
        %4781 = vmatprep.subr.bf16.mxu0 0
        %4782 = vmatpush1.bf16.msra.mxu0 0
        %4783 = vmatprep.subr.bf16.mxu0 0
        %4784 = vmatpush1.bf16.msra.mxu0 0
        %4785 = vmatprep.mubr.bf16.mxu0 0
        %4786 = vmatmul.mubr.bf16.gmra.mrb[0].mxu0 %v4751
        %v4787 = vpop.f32.mrb[0].mxu0
        %v4788 = vadd.f32 0.0, %v4787
        %v4789 = vpop.f32.mrb[0].mxu0
        %v4790 = vpop.f32.mrb[0].mxu0
        %v4791 = vpop.f32.mrb[0].mxu0
        %4792 = vdwg.mxu0
        %v4794 = vsel %vm3135, %v4131, 0
        %4796 = vmatprep.subr.bf16.mxu0 0
        %4797 = vmatpush1.bf16.msra.mxu0 %v4147
        %4798 = vmatprep.subr.bf16.mxu0 0
        %4799 = vmatpush1.bf16.msra.mxu0 0
        %4800 = vmatprep.subr.bf16.mxu0 0
        %4801 = vmatpush1.bf16.msra.mxu0 0
        %4802 = vmatprep.subr.bf16.mxu0 0
        %4803 = vmatpush1.bf16.msra.mxu0 0
        %4804 = vmatprep.subr.bf16.mxu0 0
        %4805 = vmatpush1.bf16.msra.mxu0 0
        %4806 = vmatprep.subr.bf16.mxu0 0
        %4807 = vmatpush1.bf16.msra.mxu0 0
        %4808 = vmatprep.subr.bf16.mxu0 0
        %4809 = vmatpush1.bf16.msra.mxu0 0
        %4810 = vmatprep.subr.bf16.mxu0 0
        %4811 = vmatpush1.bf16.msra.mxu0 0
        %4812 = vmatprep.subr.bf16.mxu0 0
        %4813 = vmatpush1.bf16.msra.mxu0 0
        %4814 = vmatprep.subr.bf16.mxu0 0
        %4815 = vmatpush1.bf16.msra.mxu0 0
        %4816 = vmatprep.subr.bf16.mxu0 0
        %4817 = vmatpush1.bf16.msra.mxu0 0
        %4818 = vmatprep.subr.bf16.mxu0 0
        %4819 = vmatpush1.bf16.msra.mxu0 0
        %4820 = vmatprep.subr.bf16.mxu0 0
        %4821 = vmatpush1.bf16.msra.mxu0 0
        %4822 = vmatprep.subr.bf16.mxu0 0
        %4823 = vmatpush1.bf16.msra.mxu0 0
        %4824 = vmatprep.subr.bf16.mxu0 0
        %4825 = vmatpush1.bf16.msra.mxu0 0
        %4826 = vmatprep.subr.bf16.mxu0 0
        %4827 = vmatpush1.bf16.msra.mxu0 0
        %4828 = vmatprep.mubr.bf16.mxu0 0
        %4829 = vmatmul.mubr.bf16.gmra.mrb[0].mxu0 %v4794
        %v4830 = vpop.f32.mrb[0].mxu0
        %v4831 = vadd.f32 0.0, %v4830
        %v4832 = vpop.f32.mrb[0].mxu0
        %v4833 = vpop.f32.mrb[0].mxu0
        %v4834 = vpop.f32.mrb[0].mxu0
        %4835 = vdwg.mxu0
        %v4836 = vcombine.low %v4186, %v4272
        %v4837 = vcombine.high %v4186, %v4272
        %v4839 = vunpack.c.l.s4 1983009808
        %v4840 = vunpack.c.0.s8 %v4839
        %v4841 = vlaneseq
        %v4842 = vshrl.u32 %v4841, 7
        %v4843 = vsub.s32 %v4840, %v4842
        %v4844 = vrot.slane %v4836, %v4843
        %v4846 = vunpack.c.l.s4 1983009808
        %v4847 = vunpack.c.0.s8 %v4846
        %v4848 = vlaneseq
        %v4849 = vshrl.u32 %v4848, 7
        %v4850 = vsub.s32 %v4847, %v4849
        %v4851 = vrot.slane %v4837, %v4850
        %v4852 = vcombine.low %v4229, %v4315
        %v4853 = vcombine.high %v4229, %v4315
        %v4855 = vunpack.c.l.s4 1983009808
        %v4856 = vunpack.c.0.s8 %v4855
        %v4857 = vlaneseq
        %v4858 = vshrl.u32 %v4857, 7
        %v4859 = vsub.s32 %v4856, %v4858
        %v4860 = vrot.slane %v4852, %v4859
        %v4862 = vunpack.c.l.s4 1983009808
        %v4863 = vunpack.c.0.s8 %v4862
        %v4864 = vlaneseq
        %v4865 = vshrl.u32 %v4864, 7
        %v4866 = vsub.s32 %v4863, %v4865
        %v4867 = vrot.slane %v4853, %v4866
        %v4868 = vcombine.low %v4358, %v4444
        %v4869 = vcombine.high %v4358, %v4444
        %v4871 = vunpack.c.l.s4 1983009808
        %v4872 = vunpack.c.0.s8 %v4871
        %v4873 = vlaneseq
        %v4874 = vshrl.u32 %v4873, 7
        %v4875 = vsub.s32 %v4872, %v4874
        %v4876 = vrot.slane %v4868, %v4875
        %v4878 = vunpack.c.l.s4 1983009808
        %v4879 = vunpack.c.0.s8 %v4878
        %v4880 = vlaneseq
        %v4881 = vshrl.u32 %v4880, 7
        %v4882 = vsub.s32 %v4879, %v4881
        %v4883 = vrot.slane %v4869, %v4882
        %v4884 = vcombine.low %v4401, %v4487
        %v4885 = vcombine.high %v4401, %v4487
        %v4887 = vunpack.c.l.s4 1983009808
        %v4888 = vunpack.c.0.s8 %v4887
        %v4889 = vlaneseq
        %v4890 = vshrl.u32 %v4889, 7
        %v4891 = vsub.s32 %v4888, %v4890
        %v4892 = vrot.slane %v4884, %v4891
        %v4894 = vunpack.c.l.s4 1983009808
        %v4895 = vunpack.c.0.s8 %v4894
        %v4896 = vlaneseq
        %v4897 = vshrl.u32 %v4896, 7
        %v4898 = vsub.s32 %v4895, %v4897
        %v4899 = vrot.slane %v4885, %v4898
        %v4900 = vcombine.low %v4844, %v4860
        %v4901 = vcombine.high %v4844, %v4860
        %v4903 = vunpack.c.l.s4 1934713408
        %v4904 = vunpack.c.0.s8 %v4903
        %v4905 = vlaneseq
        %v4906 = vshrl.u32 %v4905, 7
        %v4907 = vsub.s32 %v4904, %v4906
        %v4908 = vrot.slane %v4900, %v4907
        %v4910 = vunpack.c.l.s4 1934713408
        %v4911 = vunpack.c.0.s8 %v4910
        %v4912 = vlaneseq
        %v4913 = vshrl.u32 %v4912, 7
        %v4914 = vsub.s32 %v4911, %v4913
        %v4915 = vrot.slane %v4901, %v4914
        %v4916 = vcombine.low %v4851, %v4867
        %v4917 = vcombine.high %v4851, %v4867
        %v4919 = vunpack.c.l.s4 1934713408
        %v4920 = vunpack.c.0.s8 %v4919
        %v4921 = vlaneseq
        %v4922 = vshrl.u32 %v4921, 7
        %v4923 = vsub.s32 %v4920, %v4922
        %v4924 = vrot.slane %v4916, %v4923
        %v4926 = vunpack.c.l.s4 1934713408
        %v4927 = vunpack.c.0.s8 %v4926
        %v4928 = vlaneseq
        %v4929 = vshrl.u32 %v4928, 7
        %v4930 = vsub.s32 %v4927, %v4929
        %v4931 = vrot.slane %v4917, %v4930
        %v4932 = vcombine.low %v4876, %v4892
        %v4933 = vcombine.high %v4876, %v4892
        %v4935 = vunpack.c.l.s4 1934713408
        %v4936 = vunpack.c.0.s8 %v4935
        %v4937 = vlaneseq
        %v4938 = vshrl.u32 %v4937, 7
        %v4939 = vsub.s32 %v4936, %v4938
        %v4940 = vrot.slane %v4932, %v4939
        %v4942 = vunpack.c.l.s4 1934713408
        %v4943 = vunpack.c.0.s8 %v4942
        %v4944 = vlaneseq
        %v4945 = vshrl.u32 %v4944, 7
        %v4946 = vsub.s32 %v4943, %v4945
        %v4947 = vrot.slane %v4933, %v4946
        %v4948 = vcombine.low %v4883, %v4899
        %v4949 = vcombine.high %v4883, %v4899
        %v4951 = vunpack.c.l.s4 1934713408
        %v4952 = vunpack.c.0.s8 %v4951
        %v4953 = vlaneseq
        %v4954 = vshrl.u32 %v4953, 7
        %v4955 = vsub.s32 %v4952, %v4954
        %v4956 = vrot.slane %v4948, %v4955
        %v4958 = vunpack.c.l.s4 1934713408
        %v4959 = vunpack.c.0.s8 %v4958
        %v4960 = vlaneseq
        %v4961 = vshrl.u32 %v4960, 7
        %v4962 = vsub.s32 %v4959, %v4961
        %v4963 = vrot.slane %v4949, %v4962
        %v4964 = vcombine.low %v4908, %v4940
        %v4965 = vcombine.high %v4908, %v4940
        %v4966 = vcombine.low %v4915, %v4947
        %v4967 = vcombine.high %v4915, %v4947
        %v4968 = vcombine.low %v4924, %v4956
        %v4969 = vcombine.high %v4924, %v4956
        %v4970 = vcombine.low %v4931, %v4963
        %v4971 = vcombine.high %v4931, %v4963
        %v4972 = vcombine.low %v4530, %v4616
        %v4973 = vcombine.high %v4530, %v4616
        %v4975 = vunpack.c.l.s4 1983009808
        %v4976 = vunpack.c.0.s8 %v4975
        %v4977 = vlaneseq
        %v4978 = vshrl.u32 %v4977, 7
        %v4979 = vsub.s32 %v4976, %v4978
        %v4980 = vrot.slane %v4972, %v4979
        %v4982 = vunpack.c.l.s4 1983009808
        %v4983 = vunpack.c.0.s8 %v4982
        %v4984 = vlaneseq
        %v4985 = vshrl.u32 %v4984, 7
        %v4986 = vsub.s32 %v4983, %v4985
        %v4987 = vrot.slane %v4973, %v4986
        %v4988 = vcombine.low %v4573, %v4659
        %v4989 = vcombine.high %v4573, %v4659
        %v4991 = vunpack.c.l.s4 1983009808
        %v4992 = vunpack.c.0.s8 %v4991
        %v4993 = vlaneseq
        %v4994 = vshrl.u32 %v4993, 7
        %v4995 = vsub.s32 %v4992, %v4994
        %v4996 = vrot.slane %v4988, %v4995
        %v4998 = vunpack.c.l.s4 1983009808
        %v4999 = vunpack.c.0.s8 %v4998
        %v5000 = vlaneseq
        %v5001 = vshrl.u32 %v5000, 7
        %v5002 = vsub.s32 %v4999, %v5001
        %v5003 = vrot.slane %v4989, %v5002
        %v5004 = vcombine.low %v4702, %v4788
        %v5005 = vcombine.high %v4702, %v4788
        %v5007 = vunpack.c.l.s4 1983009808
        %v5008 = vunpack.c.0.s8 %v5007
        %v5009 = vlaneseq
        %v5010 = vshrl.u32 %v5009, 7
        %v5011 = vsub.s32 %v5008, %v5010
        %v5012 = vrot.slane %v5004, %v5011
        %v5014 = vunpack.c.l.s4 1983009808
        %v5015 = vunpack.c.0.s8 %v5014
        %v5016 = vlaneseq
        %v5017 = vshrl.u32 %v5016, 7
        %v5018 = vsub.s32 %v5015, %v5017
        %v5019 = vrot.slane %v5005, %v5018
        %v5020 = vcombine.low %v4745, %v4831
        %v5021 = vcombine.high %v4745, %v4831
        %v5023 = vunpack.c.l.s4 1983009808
        %v5024 = vunpack.c.0.s8 %v5023
        %v5025 = vlaneseq
        %v5026 = vshrl.u32 %v5025, 7
        %v5027 = vsub.s32 %v5024, %v5026
        %v5028 = vrot.slane %v5020, %v5027
        %v5030 = vunpack.c.l.s4 1983009808
        %v5031 = vunpack.c.0.s8 %v5030
        %v5032 = vlaneseq
        %v5033 = vshrl.u32 %v5032, 7
        %v5034 = vsub.s32 %v5031, %v5033
        %v5035 = vrot.slane %v5021, %v5034
        %v5036 = vcombine.low %v4980, %v4996
        %v5037 = vcombine.high %v4980, %v4996
        %v5039 = vunpack.c.l.s4 1934713408
        %v5040 = vunpack.c.0.s8 %v5039
        %v5041 = vlaneseq
        %v5042 = vshrl.u32 %v5041, 7
        %v5043 = vsub.s32 %v5040, %v5042
        %v5044 = vrot.slane %v5036, %v5043
        %v5046 = vunpack.c.l.s4 1934713408
        %v5047 = vunpack.c.0.s8 %v5046
        %v5048 = vlaneseq
        %v5049 = vshrl.u32 %v5048, 7
        %v5050 = vsub.s32 %v5047, %v5049
        %v5051 = vrot.slane %v5037, %v5050
        %v5052 = vcombine.low %v4987, %v5003
        %v5053 = vcombine.high %v4987, %v5003
        %v5055 = vunpack.c.l.s4 1934713408
        %v5056 = vunpack.c.0.s8 %v5055
        %v5057 = vlaneseq
        %v5058 = vshrl.u32 %v5057, 7
        %v5059 = vsub.s32 %v5056, %v5058
        %v5060 = vrot.slane %v5052, %v5059
        %v5062 = vunpack.c.l.s4 1934713408
        %v5063 = vunpack.c.0.s8 %v5062
        %v5064 = vlaneseq
        %v5065 = vshrl.u32 %v5064, 7
        %v5066 = vsub.s32 %v5063, %v5065
        %v5067 = vrot.slane %v5053, %v5066
        %v5068 = vcombine.low %v5012, %v5028
        %v5069 = vcombine.high %v5012, %v5028
        %v5071 = vunpack.c.l.s4 1934713408
        %v5072 = vunpack.c.0.s8 %v5071
        %v5073 = vlaneseq
        %v5074 = vshrl.u32 %v5073, 7
        %v5075 = vsub.s32 %v5072, %v5074
        %v5076 = vrot.slane %v5068, %v5075
        %v5078 = vunpack.c.l.s4 1934713408
        %v5079 = vunpack.c.0.s8 %v5078
        %v5080 = vlaneseq
        %v5081 = vshrl.u32 %v5080, 7
        %v5082 = vsub.s32 %v5079, %v5081
        %v5083 = vrot.slane %v5069, %v5082
        %v5084 = vcombine.low %v5019, %v5035
        %v5085 = vcombine.high %v5019, %v5035
        %v5087 = vunpack.c.l.s4 1934713408
        %v5088 = vunpack.c.0.s8 %v5087
        %v5089 = vlaneseq
        %v5090 = vshrl.u32 %v5089, 7
        %v5091 = vsub.s32 %v5088, %v5090
        %v5092 = vrot.slane %v5084, %v5091
        %v5094 = vunpack.c.l.s4 1934713408
        %v5095 = vunpack.c.0.s8 %v5094
        %v5096 = vlaneseq
        %v5097 = vshrl.u32 %v5096, 7
        %v5098 = vsub.s32 %v5095, %v5097
        %v5099 = vrot.slane %v5085, %v5098
        %v5100 = vcombine.low %v5044, %v5076
        %v5101 = vcombine.high %v5044, %v5076
        %v5102 = vcombine.low %v5051, %v5083
        %v5103 = vcombine.high %v5051, %v5083
        %v5104 = vcombine.low %v5060, %v5092
        %v5105 = vcombine.high %v5060, %v5092
        %v5106 = vcombine.low %v5067, %v5099
        %v5107 = vcombine.high %v5067, %v5099
        %v5108 = vpack.c.bf16 %v3765, %v3763
        %v5109 = vpack.c.bf16 %v3769, %v3767
        %v5110 = vpack.c.bf16 %v3773, %v3771
        %v5111 = vpack.c.bf16 %v3777, %v3775
        %v5112 = vpack.c.bf16 %v3781, %v3779
        %v5113 = vpack.c.bf16 %v3785, %v3783
        %v5114 = vpack.c.bf16 %v3789, %v3787
        %v5115 = vpack.c.bf16 %v3793, %v3791
        %v5117 = vsel %vm3135, %v5108, 0
        %5119 = vmatprep.subr.bf16.mxu0 0
        %5120 = vmatpush1.bf16.msra.mxu0 %v1950
        %5121 = vmatprep.subr.bf16.mxu0 0
        %5122 = vmatpush1.bf16.msra.mxu0 0
        %5123 = vmatprep.subr.bf16.mxu0 0
        %5124 = vmatpush1.bf16.msra.mxu0 0
        %5125 = vmatprep.subr.bf16.mxu0 0
        %5126 = vmatpush1.bf16.msra.mxu0 0
        %5127 = vmatprep.subr.bf16.mxu0 0
        %5128 = vmatpush1.bf16.msra.mxu0 0
        %5129 = vmatprep.subr.bf16.mxu0 0
        %5130 = vmatpush1.bf16.msra.mxu0 0
        %5131 = vmatprep.subr.bf16.mxu0 0
        %5132 = vmatpush1.bf16.msra.mxu0 0
        %5133 = vmatprep.subr.bf16.mxu0 0
        %5134 = vmatpush1.bf16.msra.mxu0 0
        %5135 = vmatprep.subr.bf16.mxu0 0
        %5136 = vmatpush1.bf16.msra.mxu0 0
        %5137 = vmatprep.subr.bf16.mxu0 0
        %5138 = vmatpush1.bf16.msra.mxu0 0
        %5139 = vmatprep.subr.bf16.mxu0 0
        %5140 = vmatpush1.bf16.msra.mxu0 0
        %5141 = vmatprep.subr.bf16.mxu0 0
        %5142 = vmatpush1.bf16.msra.mxu0 0
        %5143 = vmatprep.subr.bf16.mxu0 0
        %5144 = vmatpush1.bf16.msra.mxu0 0
        %5145 = vmatprep.subr.bf16.mxu0 0
        %5146 = vmatpush1.bf16.msra.mxu0 0
        %5147 = vmatprep.subr.bf16.mxu0 0
        %5148 = vmatpush1.bf16.msra.mxu0 0
        %5149 = vmatprep.subr.bf16.mxu0 0
        %5150 = vmatpush1.bf16.msra.mxu0 0
        %5151 = vmatprep.mubr.bf16.mxu0 0
        %5152 = vmatmul.mubr.bf16.gmra.mrb[0].mxu0 %v5117
        %v5153 = vpop.f32.mrb[0].mxu0
        %v5154 = vadd.f32 0.0, %v5153
        %v5155 = vpop.f32.mrb[0].mxu0
        %v5156 = vpop.f32.mrb[0].mxu0
        %v5157 = vadd.f32 0.0, %v5156
        %v5158 = vpop.f32.mrb[0].mxu0
        %5159 = vdwg.mxu0
        %v5161 = vsel %vm3135, %v5109, 0
        %5163 = vmatprep.subr.bf16.mxu0 0
        %5164 = vmatpush1.bf16.msra.mxu0 %v1951
        %5165 = vmatprep.subr.bf16.mxu0 0
        %5166 = vmatpush1.bf16.msra.mxu0 0
        %5167 = vmatprep.subr.bf16.mxu0 0
        %5168 = vmatpush1.bf16.msra.mxu0 0
        %5169 = vmatprep.subr.bf16.mxu0 0
        %5170 = vmatpush1.bf16.msra.mxu0 0
        %5171 = vmatprep.subr.bf16.mxu0 0
        %5172 = vmatpush1.bf16.msra.mxu0 0
        %5173 = vmatprep.subr.bf16.mxu0 0
        %5174 = vmatpush1.bf16.msra.mxu0 0
        %5175 = vmatprep.subr.bf16.mxu0 0
        %5176 = vmatpush1.bf16.msra.mxu0 0
        %5177 = vmatprep.subr.bf16.mxu0 0
        %5178 = vmatpush1.bf16.msra.mxu0 0
        %5179 = vmatprep.subr.bf16.mxu0 0
        %5180 = vmatpush1.bf16.msra.mxu0 0
        %5181 = vmatprep.subr.bf16.mxu0 0
        %5182 = vmatpush1.bf16.msra.mxu0 0
        %5183 = vmatprep.subr.bf16.mxu0 0
        %5184 = vmatpush1.bf16.msra.mxu0 0
        %5185 = vmatprep.subr.bf16.mxu0 0
        %5186 = vmatpush1.bf16.msra.mxu0 0
        %5187 = vmatprep.subr.bf16.mxu0 0
        %5188 = vmatpush1.bf16.msra.mxu0 0
        %5189 = vmatprep.subr.bf16.mxu0 0
        %5190 = vmatpush1.bf16.msra.mxu0 0
        %5191 = vmatprep.subr.bf16.mxu0 0
        %5192 = vmatpush1.bf16.msra.mxu0 0
        %5193 = vmatprep.subr.bf16.mxu0 0
        %5194 = vmatpush1.bf16.msra.mxu0 0
        %5195 = vmatprep.mubr.bf16.mxu0 0
        %5196 = vmatmul.mubr.bf16.gmra.mrb[0].mxu0 %v5161
        %v5197 = vpop.f32.mrb[0].mxu0
        %v5198 = vadd.f32 0.0, %v5197
        %v5199 = vpop.f32.mrb[0].mxu0
        %v5200 = vpop.f32.mrb[0].mxu0
        %v5201 = vadd.f32 0.0, %v5200
        %v5202 = vpop.f32.mrb[0].mxu0
        %5203 = vdwg.mxu0
        %v5205 = vsel %vm3135, %v5110, 0
        %5207 = vmatprep.subr.bf16.mxu0 0
        %5208 = vmatpush1.bf16.msra.mxu0 %v1952
        %5209 = vmatprep.subr.bf16.mxu0 0
        %5210 = vmatpush1.bf16.msra.mxu0 0
        %5211 = vmatprep.subr.bf16.mxu0 0
        %5212 = vmatpush1.bf16.msra.mxu0 0
        %5213 = vmatprep.subr.bf16.mxu0 0
        %5214 = vmatpush1.bf16.msra.mxu0 0
        %5215 = vmatprep.subr.bf16.mxu0 0
        %5216 = vmatpush1.bf16.msra.mxu0 0
        %5217 = vmatprep.subr.bf16.mxu0 0
        %5218 = vmatpush1.bf16.msra.mxu0 0
        %5219 = vmatprep.subr.bf16.mxu0 0
        %5220 = vmatpush1.bf16.msra.mxu0 0
        %5221 = vmatprep.subr.bf16.mxu0 0
        %5222 = vmatpush1.bf16.msra.mxu0 0
        %5223 = vmatprep.subr.bf16.mxu0 0
        %5224 = vmatpush1.bf16.msra.mxu0 0
        %5225 = vmatprep.subr.bf16.mxu0 0
        %5226 = vmatpush1.bf16.msra.mxu0 0
        %5227 = vmatprep.subr.bf16.mxu0 0
        %5228 = vmatpush1.bf16.msra.mxu0 0
        %5229 = vmatprep.subr.bf16.mxu0 0
        %5230 = vmatpush1.bf16.msra.mxu0 0
        %5231 = vmatprep.subr.bf16.mxu0 0
        %5232 = vmatpush1.bf16.msra.mxu0 0
        %5233 = vmatprep.subr.bf16.mxu0 0
        %5234 = vmatpush1.bf16.msra.mxu0 0
        %5235 = vmatprep.subr.bf16.mxu0 0
        %5236 = vmatpush1.bf16.msra.mxu0 0
        %5237 = vmatprep.subr.bf16.mxu0 0
        %5238 = vmatpush1.bf16.msra.mxu0 0
        %5239 = vmatprep.mubr.bf16.mxu0 0
        %5240 = vmatmul.mubr.bf16.gmra.mrb[0].mxu0 %v5205
        %v5241 = vpop.f32.mrb[0].mxu0
        %v5242 = vadd.f32 0.0, %v5241
        %v5243 = vpop.f32.mrb[0].mxu0
        %v5244 = vpop.f32.mrb[0].mxu0
        %v5245 = vadd.f32 0.0, %v5244
        %v5246 = vpop.f32.mrb[0].mxu0
        %5247 = vdwg.mxu0
        %v5249 = vsel %vm3135, %v5111, 0
        %5251 = vmatprep.subr.bf16.mxu0 0
        %5252 = vmatpush1.bf16.msra.mxu0 %v1953
        %5253 = vmatprep.subr.bf16.mxu0 0
        %5254 = vmatpush1.bf16.msra.mxu0 0
        %5255 = vmatprep.subr.bf16.mxu0 0
        %5256 = vmatpush1.bf16.msra.mxu0 0
        %5257 = vmatprep.subr.bf16.mxu0 0
        %5258 = vmatpush1.bf16.msra.mxu0 0
        %5259 = vmatprep.subr.bf16.mxu0 0
        %5260 = vmatpush1.bf16.msra.mxu0 0
        %5261 = vmatprep.subr.bf16.mxu0 0
        %5262 = vmatpush1.bf16.msra.mxu0 0
        %5263 = vmatprep.subr.bf16.mxu0 0
        %5264 = vmatpush1.bf16.msra.mxu0 0
        %5265 = vmatprep.subr.bf16.mxu0 0
        %5266 = vmatpush1.bf16.msra.mxu0 0
        %5267 = vmatprep.subr.bf16.mxu0 0
        %5268 = vmatpush1.bf16.msra.mxu0 0
        %5269 = vmatprep.subr.bf16.mxu0 0
        %5270 = vmatpush1.bf16.msra.mxu0 0
        %5271 = vmatprep.subr.bf16.mxu0 0
        %5272 = vmatpush1.bf16.msra.mxu0 0
        %5273 = vmatprep.subr.bf16.mxu0 0
        %5274 = vmatpush1.bf16.msra.mxu0 0
        %5275 = vmatprep.subr.bf16.mxu0 0
        %5276 = vmatpush1.bf16.msra.mxu0 0
        %5277 = vmatprep.subr.bf16.mxu0 0
        %5278 = vmatpush1.bf16.msra.mxu0 0
        %5279 = vmatprep.subr.bf16.mxu0 0
        %5280 = vmatpush1.bf16.msra.mxu0 0
        %5281 = vmatprep.subr.bf16.mxu0 0
        %5282 = vmatpush1.bf16.msra.mxu0 0
        %5283 = vmatprep.mubr.bf16.mxu0 0
        %5284 = vmatmul.mubr.bf16.gmra.mrb[0].mxu0 %v5249
        %v5285 = vpop.f32.mrb[0].mxu0
        %v5286 = vadd.f32 0.0, %v5285
        %v5287 = vpop.f32.mrb[0].mxu0
        %v5288 = vpop.f32.mrb[0].mxu0
        %v5289 = vadd.f32 0.0, %v5288
        %v5290 = vpop.f32.mrb[0].mxu0
        %5291 = vdwg.mxu0
        %v5293 = vsel %vm3135, %v5112, 0
        %5295 = vmatprep.subr.bf16.mxu0 0
        %5296 = vmatpush1.bf16.msra.mxu0 %v1954
        %5297 = vmatprep.subr.bf16.mxu0 0
        %5298 = vmatpush1.bf16.msra.mxu0 0
        %5299 = vmatprep.subr.bf16.mxu0 0
        %5300 = vmatpush1.bf16.msra.mxu0 0
        %5301 = vmatprep.subr.bf16.mxu0 0
        %5302 = vmatpush1.bf16.msra.mxu0 0
        %5303 = vmatprep.subr.bf16.mxu0 0
        %5304 = vmatpush1.bf16.msra.mxu0 0
        %5305 = vmatprep.subr.bf16.mxu0 0
        %5306 = vmatpush1.bf16.msra.mxu0 0
        %5307 = vmatprep.subr.bf16.mxu0 0
        %5308 = vmatpush1.bf16.msra.mxu0 0
        %5309 = vmatprep.subr.bf16.mxu0 0
        %5310 = vmatpush1.bf16.msra.mxu0 0
        %5311 = vmatprep.subr.bf16.mxu0 0
        %5312 = vmatpush1.bf16.msra.mxu0 0
        %5313 = vmatprep.subr.bf16.mxu0 0
        %5314 = vmatpush1.bf16.msra.mxu0 0
        %5315 = vmatprep.subr.bf16.mxu0 0
        %5316 = vmatpush1.bf16.msra.mxu0 0
        %5317 = vmatprep.subr.bf16.mxu0 0
        %5318 = vmatpush1.bf16.msra.mxu0 0
        %5319 = vmatprep.subr.bf16.mxu0 0
        %5320 = vmatpush1.bf16.msra.mxu0 0
        %5321 = vmatprep.subr.bf16.mxu0 0
        %5322 = vmatpush1.bf16.msra.mxu0 0
        %5323 = vmatprep.subr.bf16.mxu0 0
        %5324 = vmatpush1.bf16.msra.mxu0 0
        %5325 = vmatprep.subr.bf16.mxu0 0
        %5326 = vmatpush1.bf16.msra.mxu0 0
        %5327 = vmatprep.mubr.bf16.mxu0 0
        %5328 = vmatmul.mubr.bf16.gmra.mrb[0].mxu0 %v5293
        %v5329 = vpop.f32.mrb[0].mxu0
        %v5330 = vadd.f32 0.0, %v5329
        %v5331 = vpop.f32.mrb[0].mxu0
        %v5332 = vpop.f32.mrb[0].mxu0
        %v5333 = vadd.f32 0.0, %v5332
        %v5334 = vpop.f32.mrb[0].mxu0
        %5335 = vdwg.mxu0
        %v5337 = vsel %vm3135, %v5113, 0
        %5339 = vmatprep.subr.bf16.mxu0 0
        %5340 = vmatpush1.bf16.msra.mxu0 %v1955
        %5341 = vmatprep.subr.bf16.mxu0 0
        %5342 = vmatpush1.bf16.msra.mxu0 0
        %5343 = vmatprep.subr.bf16.mxu0 0
        %5344 = vmatpush1.bf16.msra.mxu0 0
        %5345 = vmatprep.subr.bf16.mxu0 0
        %5346 = vmatpush1.bf16.msra.mxu0 0
        %5347 = vmatprep.subr.bf16.mxu0 0
        %5348 = vmatpush1.bf16.msra.mxu0 0
        %5349 = vmatprep.subr.bf16.mxu0 0
        %5350 = vmatpush1.bf16.msra.mxu0 0
        %5351 = vmatprep.subr.bf16.mxu0 0
        %5352 = vmatpush1.bf16.msra.mxu0 0
        %5353 = vmatprep.subr.bf16.mxu0 0
        %5354 = vmatpush1.bf16.msra.mxu0 0
        %5355 = vmatprep.subr.bf16.mxu0 0
        %5356 = vmatpush1.bf16.msra.mxu0 0
        %5357 = vmatprep.subr.bf16.mxu0 0
        %5358 = vmatpush1.bf16.msra.mxu0 0
        %5359 = vmatprep.subr.bf16.mxu0 0
        %5360 = vmatpush1.bf16.msra.mxu0 0
        %5361 = vmatprep.subr.bf16.mxu0 0
        %5362 = vmatpush1.bf16.msra.mxu0 0
        %5363 = vmatprep.subr.bf16.mxu0 0
        %5364 = vmatpush1.bf16.msra.mxu0 0
        %5365 = vmatprep.subr.bf16.mxu0 0
        %5366 = vmatpush1.bf16.msra.mxu0 0
        %5367 = vmatprep.subr.bf16.mxu0 0
        %5368 = vmatpush1.bf16.msra.mxu0 0
        %5369 = vmatprep.subr.bf16.mxu0 0
        %5370 = vmatpush1.bf16.msra.mxu0 0
        %5371 = vmatprep.mubr.bf16.mxu0 0
        %5372 = vmatmul.mubr.bf16.gmra.mrb[0].mxu0 %v5337
        %v5373 = vpop.f32.mrb[0].mxu0
        %v5374 = vadd.f32 0.0, %v5373
        %v5375 = vpop.f32.mrb[0].mxu0
        %v5376 = vpop.f32.mrb[0].mxu0
        %v5377 = vadd.f32 0.0, %v5376
        %v5378 = vpop.f32.mrb[0].mxu0
        %5379 = vdwg.mxu0
        %v5381 = vsel %vm3135, %v5114, 0
        %5383 = vmatprep.subr.bf16.mxu0 0
        %5384 = vmatpush1.bf16.msra.mxu0 %v1956
        %5385 = vmatprep.subr.bf16.mxu0 0
        %5386 = vmatpush1.bf16.msra.mxu0 0
        %5387 = vmatprep.subr.bf16.mxu0 0
        %5388 = vmatpush1.bf16.msra.mxu0 0
        %5389 = vmatprep.subr.bf16.mxu0 0
        %5390 = vmatpush1.bf16.msra.mxu0 0
        %5391 = vmatprep.subr.bf16.mxu0 0
        %5392 = vmatpush1.bf16.msra.mxu0 0
        %5393 = vmatprep.subr.bf16.mxu0 0
        %5394 = vmatpush1.bf16.msra.mxu0 0
        %5395 = vmatprep.subr.bf16.mxu0 0
        %5396 = vmatpush1.bf16.msra.mxu0 0
        %5397 = vmatprep.subr.bf16.mxu0 0
        %5398 = vmatpush1.bf16.msra.mxu0 0
        %5399 = vmatprep.subr.bf16.mxu0 0
        %5400 = vmatpush1.bf16.msra.mxu0 0
        %5401 = vmatprep.subr.bf16.mxu0 0
        %5402 = vmatpush1.bf16.msra.mxu0 0
        %5403 = vmatprep.subr.bf16.mxu0 0
        %5404 = vmatpush1.bf16.msra.mxu0 0
        %5405 = vmatprep.subr.bf16.mxu0 0
        %5406 = vmatpush1.bf16.msra.mxu0 0
        %5407 = vmatprep.subr.bf16.mxu0 0
        %5408 = vmatpush1.bf16.msra.mxu0 0
        %5409 = vmatprep.subr.bf16.mxu0 0
        %5410 = vmatpush1.bf16.msra.mxu0 0
        %5411 = vmatprep.subr.bf16.mxu0 0
        %5412 = vmatpush1.bf16.msra.mxu0 0
        %5413 = vmatprep.subr.bf16.mxu0 0
        %5414 = vmatpush1.bf16.msra.mxu0 0
        %5415 = vmatprep.mubr.bf16.mxu0 0
        %5416 = vmatmul.mubr.bf16.gmra.mrb[0].mxu0 %v5381
        %v5417 = vpop.f32.mrb[0].mxu0
        %v5418 = vadd.f32 0.0, %v5417
        %v5419 = vpop.f32.mrb[0].mxu0
        %v5420 = vpop.f32.mrb[0].mxu0
        %v5421 = vadd.f32 0.0, %v5420
        %v5422 = vpop.f32.mrb[0].mxu0
        %5423 = vdwg.mxu0
        %v5425 = vsel %vm3135, %v5115, 0
        %5427 = vmatprep.subr.bf16.mxu0 0
        %5428 = vmatpush1.bf16.msra.mxu0 %v1957
        %5429 = vmatprep.subr.bf16.mxu0 0
        %5430 = vmatpush1.bf16.msra.mxu0 0
        %5431 = vmatprep.subr.bf16.mxu0 0
        %5432 = vmatpush1.bf16.msra.mxu0 0
        %5433 = vmatprep.subr.bf16.mxu0 0
        %5434 = vmatpush1.bf16.msra.mxu0 0
        %5435 = vmatprep.subr.bf16.mxu0 0
        %5436 = vmatpush1.bf16.msra.mxu0 0
        %5437 = vmatprep.subr.bf16.mxu0 0
        %5438 = vmatpush1.bf16.msra.mxu0 0
        %5439 = vmatprep.subr.bf16.mxu0 0
        %5440 = vmatpush1.bf16.msra.mxu0 0
        %5441 = vmatprep.subr.bf16.mxu0 0
        %5442 = vmatpush1.bf16.msra.mxu0 0
        %5443 = vmatprep.subr.bf16.mxu0 0
        %5444 = vmatpush1.bf16.msra.mxu0 0
        %5445 = vmatprep.subr.bf16.mxu0 0
        %5446 = vmatpush1.bf16.msra.mxu0 0
        %5447 = vmatprep.subr.bf16.mxu0 0
        %5448 = vmatpush1.bf16.msra.mxu0 0
        %5449 = vmatprep.subr.bf16.mxu0 0
        %5450 = vmatpush1.bf16.msra.mxu0 0
        %5451 = vmatprep.subr.bf16.mxu0 0
        %5452 = vmatpush1.bf16.msra.mxu0 0
        %5453 = vmatprep.subr.bf16.mxu0 0
        %5454 = vmatpush1.bf16.msra.mxu0 0
        %5455 = vmatprep.subr.bf16.mxu0 0
        %5456 = vmatpush1.bf16.msra.mxu0 0
        %5457 = vmatprep.subr.bf16.mxu0 0
        %5458 = vmatpush1.bf16.msra.mxu0 0
        %5459 = vmatprep.mubr.bf16.mxu0 0
        %5460 = vmatmul.mubr.bf16.gmra.mrb[0].mxu0 %v5425
        %v5461 = vpop.f32.mrb[0].mxu0
        %v5462 = vadd.f32 0.0, %v5461
        %v5463 = vpop.f32.mrb[0].mxu0
        %v5464 = vpop.f32.mrb[0].mxu0
        %v5465 = vadd.f32 0.0, %v5464
        %v5466 = vpop.f32.mrb[0].mxu0
        %5467 = vdwg.mxu0
        %v5468 = vlaneseq
        %v5469 = vshrl.u32 %v5468, 7
        %v5470 = vsub.s32 0, %v5469
        %v5471 = vrot.slane %v4115, %v5470
        %5473 = vbcast.lane.b32.xlu0 %v5471, 256
        %v5474 = vpop.permute.xlu0 %5473
        %s5476 = sor.u32 256, 8
        %5477 = vbcast.lane.b32.xlu0 %v5471, %s5476
        %v5478 = vpop.permute.xlu0 %5477
        %v5479 = vlaneseq
        %v5480 = vshrl.u32 %v5479, 7
        %v5481 = vsub.s32 1, %v5480
        %v5482 = vrot.slane %v4115, %v5481
        %5484 = vbcast.lane.b32.xlu0 %v5482, 256
        %v5485 = vpop.permute.xlu0 %5484
        %s5487 = sor.u32 256, 8
        %5488 = vbcast.lane.b32.xlu0 %v5482, %s5487
        %v5489 = vpop.permute.xlu0 %5488
        %v5490 = vlaneseq
        %v5491 = vshrl.u32 %v5490, 7
        %v5492 = vsub.s32 2, %v5491
        %v5493 = vrot.slane %v4115, %v5492
        %5495 = vbcast.lane.b32.xlu0 %v5493, 256
        %v5496 = vpop.permute.xlu0 %5495
        %s5498 = sor.u32 256, 8
        %5499 = vbcast.lane.b32.xlu0 %v5493, %s5498
        %v5500 = vpop.permute.xlu0 %5499
        %v5501 = vlaneseq
        %v5502 = vshrl.u32 %v5501, 7
        %v5503 = vsub.s32 3, %v5502
        %v5504 = vrot.slane %v4115, %v5503
        %5506 = vbcast.lane.b32.xlu0 %v5504, 256
        %v5507 = vpop.permute.xlu0 %5506
        %s5509 = sor.u32 256, 8
        %5510 = vbcast.lane.b32.xlu0 %v5504, %s5509
        %v5511 = vpop.permute.xlu0 %5510
        %v5512 = vlaneseq
        %v5513 = vshrl.u32 %v5512, 7
        %v5514 = vsub.s32 4, %v5513
        %v5515 = vrot.slane %v4115, %v5514
        %5517 = vbcast.lane.b32.xlu0 %v5515, 256
        %v5518 = vpop.permute.xlu0 %5517
        %s5520 = sor.u32 256, 8
        %5521 = vbcast.lane.b32.xlu0 %v5515, %s5520
        %v5522 = vpop.permute.xlu0 %5521
        %v5523 = vlaneseq
        %v5524 = vshrl.u32 %v5523, 7
        %v5525 = vsub.s32 5, %v5524
        %v5526 = vrot.slane %v4115, %v5525
        %5528 = vbcast.lane.b32.xlu0 %v5526, 256
        %v5529 = vpop.permute.xlu0 %5528
        %s5531 = sor.u32 256, 8
        %5532 = vbcast.lane.b32.xlu0 %v5526, %s5531
        %v5533 = vpop.permute.xlu0 %5532
        %v5534 = vlaneseq
        %v5535 = vshrl.u32 %v5534, 7
        %v5536 = vsub.s32 6, %v5535
        %v5537 = vrot.slane %v4115, %v5536
        %5539 = vbcast.lane.b32.xlu0 %v5537, 256
        %v5540 = vpop.permute.xlu0 %5539
        %s5542 = sor.u32 256, 8
        %5543 = vbcast.lane.b32.xlu0 %v5537, %s5542
        %v5544 = vpop.permute.xlu0 %5543
        %v5545 = vlaneseq
        %v5546 = vshrl.u32 %v5545, 7
        %v5547 = vsub.s32 7, %v5546
        %v5548 = vrot.slane %v4115, %v5547
        %5550 = vbcast.lane.b32.xlu0 %v5548, 256
        %v5551 = vpop.permute.xlu0 %5550
        %s5553 = sor.u32 256, 8
        %5554 = vbcast.lane.b32.xlu0 %v5548, %s5553
        %v5555 = vpop.permute.xlu0 %5554
        %v5556 = vadd.f32 %v4964, %v5154
        %v5557 = vadd.f32 %v5100, %v5157
        %v5558 = vadd.f32 %v4965, %v5198
        %v5559 = vadd.f32 %v5101, %v5201
        %v5560 = vadd.f32 %v4966, %v5242
        %v5561 = vadd.f32 %v5102, %v5245
        %v5562 = vadd.f32 %v4967, %v5286
        %v5563 = vadd.f32 %v5103, %v5289
        %v5564 = vadd.f32 %v4968, %v5330
        %v5565 = vadd.f32 %v5104, %v5333
        %v5566 = vadd.f32 %v4969, %v5374
        %v5567 = vadd.f32 %v5105, %v5377
        %v5568 = vadd.f32 %v4970, %v5418
        %v5569 = vadd.f32 %v5106, %v5421
        %v5570 = vadd.f32 %v4971, %v5462
        %v5571 = vadd.f32 %v5107, %v5465
        %v5572 = vmul.f32 %v5474, %v5556
        %v5573 = vmul.f32 %v5478, %v5557
        %v5574 = vmul.f32 %v5485, %v5558
        %v5575 = vmul.f32 %v5489, %v5559
        %v5576 = vmul.f32 %v5496, %v5560
        %v5577 = vmul.f32 %v5500, %v5561
        %v5578 = vmul.f32 %v5507, %v5562
        %v5579 = vmul.f32 %v5511, %v5563
        %v5580 = vmul.f32 %v5518, %v5564
        %v5581 = vmul.f32 %v5522, %v5565
        %v5582 = vmul.f32 %v5529, %v5566
        %v5583 = vmul.f32 %v5533, %v5567
        %v5584 = vmul.f32 %v5540, %v5568
        %v5585 = vmul.f32 %v5544, %v5569
        %v5586 = vmul.f32 %v5551, %v5570
        %v5587 = vmul.f32 %v5555, %v5571
        %v5588 = vstv %s422
        %v5589 = vmul.f32 %v5588, %v5572
        %v5590 = vmul.f32 %v5588, %v5573
        %v5591 = vmul.f32 %v5588, %v5574
        %v5592 = vmul.f32 %v5588, %v5575
        %v5593 = vmul.f32 %v5588, %v5576
        %v5594 = vmul.f32 %v5588, %v5577
        %v5595 = vmul.f32 %v5588, %v5578
        %v5596 = vmul.f32 %v5588, %v5579
        %v5597 = vmul.f32 %v5588, %v5580
        %v5598 = vmul.f32 %v5588, %v5581
        %v5599 = vmul.f32 %v5588, %v5582
        %v5600 = vmul.f32 %v5588, %v5583
        %v5601 = vmul.f32 %v5588, %v5584
        %v5602 = vmul.f32 %v5588, %v5585
        %v5603 = vmul.f32 %v5588, %v5586
        %v5604 = vmul.f32 %v5588, %v5587
        %v5605 = vadd.f32 %v5589, %v1645
        %v5606 = vadd.f32 %v5590, %v1646
        %v5607 = vadd.f32 %v5591, %v1647
        %v5608 = vadd.f32 %v5592, %v1648
        %v5609 = vadd.f32 %v5593, %v1649
        %v5610 = vadd.f32 %v5594, %v1650
        %v5611 = vadd.f32 %v5595, %v1651
        %v5612 = vadd.f32 %v5596, %v1652
        %v5613 = vadd.f32 %v5597, %v1653
        %v5614 = vadd.f32 %v5598, %v1654
        %v5615 = vadd.f32 %v5599, %v1655
        %v5616 = vadd.f32 %v5600, %v1656
        %v5617 = vadd.f32 %v5601, %v1657
        %v5618 = vadd.f32 %v5602, %v1658
        %v5619 = vadd.f32 %v5603, %v1659
        %v5620 = vadd.f32 %v5604, %v1660
        %5621 = vst.msk [vmem:[%s419] sm:$0xff] %vm1691, %v5605
        %5622 = vst.msk [vmem:[%s419 + $0x8] sm:$0xff] %vm1691, %v5606
        %5623 = vst.msk [vmem:[%s419 + $0x10] sm:$0xff] %vm1691, %v5607
        %5624 = vst.msk [vmem:[%s419 + $0x18] sm:$0xff] %vm1691, %v5608
        %5625 = vst.msk [vmem:[%s419 + $0x20] sm:$0xff] %vm1691, %v5609
        %5626 = vst.msk [vmem:[%s419 + $0x28] sm:$0xff] %vm1691, %v5610
        %5627 = vst.msk [vmem:[%s419 + $0x30] sm:$0xff] %vm1691, %v5611
        %5628 = vst.msk [vmem:[%s419 + $0x38] sm:$0xff] %vm1691, %v5612
        %5629 = vst.msk [vmem:[%s419 + $0x40] sm:$0xff] %vm1691, %v5613
        %5630 = vst.msk [vmem:[%s419 + $0x48] sm:$0xff] %vm1691, %v5614
        %5631 = vst.msk [vmem:[%s419 + $0x50] sm:$0xff] %vm1691, %v5615
        %5632 = vst.msk [vmem:[%s419 + $0x58] sm:$0xff] %vm1691, %v5616
        %5633 = vst.msk [vmem:[%s419 + $0x60] sm:$0xff] %vm1691, %v5617
        %5634 = vst.msk [vmem:[%s419 + $0x68] sm:$0xff] %vm1691, %v5618
        %5635 = vst.msk [vmem:[%s419 + $0x70] sm:$0xff] %vm1691, %v5619
        %5636 = vst.msk [vmem:[%s419 + $0x78] sm:$0xff] %vm1691, %v5620
        %s5637 = sand.u32 %s224, 1
        %s5638 = scalar_lea.sflag [#allocation8], %s5637
        %s5639 = sand.u32 %s224, 1
        %s5640 = smul.addr %s5639, 128
        %s5641 = scalar_lea.vmem [#allocation18], %s5640
        // Predicated region
        $region85: #{tpu_custom_call.1} parent=51 // pred_check
          %p5642 = pneg %p234
        $region86: #{tpu_custom_call.1} parent=51 // pred_check_branch
          %5644 = sbr.rel (%p5642) target = $region88
        $region87: #{tpu_custom_call.1} parent=51 // pred_region
          %s5645 = smul.u32 8, %s34
          %s5647 = ssub.s32 2048, 2048
          %5648 = vsyncadd %s5638, %s5647
          %s5649 = smul.addr %s5645, 2
          %s5650 = smul.addr %s33, 32
          %s5651 = sadd.s32 %s5649, %s5650
          %s5652 = smul.addr %s5651, 128
          %s5653 = scalar_lea.hbm %s8, %s5652
          %s5654 = sshll.u32 %s5641, 4
          %s5655 = int_to_ptr.vmem [resolvable:$true] %s5654
          %5660 = dma.vmem_to_hbm [thread:$0]  %s5655, 2048, %s5653, %s5638, 128, 128, 8
        $region88: #{tpu_custom_call.1} parent=51 // pred_fallthru
          _
      $region52: #{tpu_custom_call.1} parent=5 // pred_fallthru
        _
      %p5661 = scmp.le.s32.totalorder 2, %s24
      // Predicated region
      $region89: #{tpu_custom_call.1} parent=5 // pred_check
        %p5662 = pneg %p5661
      $region90: #{tpu_custom_call.1} parent=5 // pred_check_branch
        %5664 = sbr.rel (%p5662) target = $region92
      $region91: #{tpu_custom_call.1} parent=5 // pred_region
        %s5665 = ssub.s32 %s24, 2
        // Predicated region
        $region93: #{tpu_custom_call.1} parent=91 // pred_check
          %p5666 = pneg %p240
        $region94: #{tpu_custom_call.1} parent=91 // pred_check_branch
          %5668 = sbr.rel (%p5666) target = $region96
        $region95: #{tpu_custom_call.1} parent=91 // pred_region
          %s5669 = sand.u32 %s225, 1
          %s5670 = scalar_lea.sflag [#allocation8], %s5669
          %s5671 = sand.u32 %s225, 1
          %s5672 = smul.addr %s5671, 128
          %s5673 = scalar_lea.vmem [#allocation18], %s5672
          %5674 = dma.done %s5670, 2048
        $region96: #{tpu_custom_call.1} parent=91 // pred_fallthru
          _
      $region92: #{tpu_custom_call.1} parent=5 // pred_fallthru
        _
    $region6: #{tpu_custom_call.1} parent=1 // loop_footer
      %s28 = sadd.s32 1, %s24
    $region7: #{tpu_custom_call.1} parent=1 // loop_footer_branch
      %23 = sbr.rel target = $region3
    $region8: #{tpu_custom_call.1} parent=1 // loop_exit
      _
    %5675 = vsyncpa [#allocation7], 1
    %s5676 = scalar_lea.sflag [#allocation7], 1
    %5677 = vsyncpa %s5676, 1
    %5678 = vsyncpa [#allocation10], 1
    %5679 = vsyncpa [#allocation13], 1
    %5680 = vsyncpa [#allocation16], 1
    %5681 = vsyncpa [#allocation8], 1
    %s5682 = scalar_lea.sflag [#allocation8], 1
    %5683 = vsyncpa %s5682, 1

</llo_original>
